<compile_context>
chip_gen: v6e
topology: v6e:2x2x1
jax: 0.10.0
libtpu: 0.0.40
codegen_flags: <defaults>
</compile_context>

<pallas_src>
import functools
import math

import jax
import jax.numpy as jnp
from jax.experimental import pallas as pl


# ----------------------------------------------------------------------------
# In-kernel helpers (traced inside the Pallas kernel; f32 math only)
# ----------------------------------------------------------------------------

def _rms(x, w, eps):
    # DeepseekV3RMSNorm: x * rsqrt(mean(x^2) + eps) * weight   (f32)
    var = jnp.mean(x * x, axis=-1, keepdims=True)
    return x * jax.lax.rsqrt(var + eps) * w


def _swiglu(x, wgu, wd, inter):
    # DeepSeekMLP: down( silu(gate(x)) * up(x) ).
    # wgu packs [gate | up] in two 128-lane-aligned groups (padded at init),
    # so both slices below start on a lane-group boundary.
    ipad = wgu.shape[1] // 2
    gu = jnp.dot(x, wgu, preferred_element_type=jnp.float32)     # (rows, 2*ipad)
    g = gu[:, :inter]
    u = gu[:, ipad:ipad + inter]
    h = (g * jax.nn.sigmoid(g)) * u
    return jnp.dot(h, wd, preferred_element_type=jnp.float32)


def _softmax_av(s, v):
    # softmax(s) @ v with post-matmul normalization; EXACT divide (the
    # denominator is a (rows, 1) column, so cost is negligible).
    m = jnp.max(s, axis=-1, keepdims=True)
    p = jnp.exp(s - m)
    den = jnp.sum(p, axis=-1, keepdims=True)
    o = jnp.dot(p, v, preferred_element_type=jnp.float32)
    return o / den
    # TODO(synk): fully-masked rows (all keys -inf) give a uniform softmax here
    # instead of PyTorch's NaN propagation; differs only for fully-padded rows.


# ----------------------------------------------------------------------------
# Single fused Pallas kernel: whole DeepSeekVisionDecoder forward
# ----------------------------------------------------------------------------

def _fused_decoder_kernel(
        x_ref, addend_ref,
        wgu_in_ref, wd_in_ref, wdp_ref, bdp_ref,
        ln1_ref, ln2_ref, wproj_ref, wo_ref, wgu_ref, wd_ref,
        cos_ref, sin_ref, self_bias_ref,
        qtok_ref, wq_ref, bq_ref, wkv_ref, bkv_ref, woc_ref, boc_ref,
        cnw_ref, wgu_tok_ref, wd_tok_ref, onw_ref, cross_bias_ref,
        o_ref,
        *, num_layers, heads, head_dim, inter_in, inter_ffn, inter_tok, eps):
    d_model = heads * head_dim

    # ---- input stage: SwiGLU MLP -> dim projection -> + pos/spatial addend --
    x_in = x_ref[...]                                            # (M, Din)
    h0 = _swiglu(x_in, wgu_in_ref[...], wd_in_ref[...], inter_in)
    x = (jnp.dot(h0, wdp_ref[...], preferred_element_type=jnp.float32)
         + bdp_ref[...] + addend_ref[...])                       # (M, D)

    cos_d = cos_ref[...]                                         # (M, D), head-tiled
    sin_d = sin_ref[...]                                         # (M, D), head-tiled
    self_bias = self_bias_ref[...]                               # (M, M)

    # ---- transformer stack (statically unrolled, weights stacked on axis 0) -
    for l in range(num_layers):
        h1 = _rms(x, ln1_ref[l], eps)
        wproj = wproj_ref[l]                                     # (D, 5*pad)
        pad = wproj.shape[1] // 5
        proj = jnp.dot(h1, wproj, preferred_element_type=jnp.float32)
        # All block starts are multiples of 128 lanes (padded at init).
        q = proj[:, 0 * pad:0 * pad + d_model]                   # Wq * scale
        qr = proj[:, 1 * pad:1 * pad + d_model]                  # (Wq @ R) * scale
        k = proj[:, 2 * pad:2 * pad + d_model]
        kr = proj[:, 3 * pad:3 * pad + d_model]
        v = proj[:, 4 * pad:4 * pad + d_model]
        qf = q * cos_d + qr * sin_d                              # RoPE, full width
        kf = k * cos_d + kr * sin_d

        o_heads = []
        for hh in range(heads):                                  # static unroll
            lo = hh * head_dim
            hi = lo + head_dim
            s = jax.lax.dot_general(qf[:, lo:hi], kf[:, lo:hi],
                                    (((1,), (1,)), ((), ())),
                                    preferred_element_type=jnp.float32)
            s = s + self_bias                                    # batch-block mask
            o_heads.append(_softmax_av(s, v[:, lo:hi]))          # (M, Dh)
        o_all = jnp.concatenate(o_heads, axis=-1)                # (M, D)
        attn = jnp.dot(o_all, wo_ref[l], preferred_element_type=jnp.float32)

        x = x + attn                                             # residual
        h2 = _rms(x, ln2_ref[l], eps)
        x = x + _swiglu(h2, wgu_ref[l], wd_ref[l], inter_ffn)    # residual

    # ---- multi-token head: cross-attention -> cross_norm -> SwiGLU -> norm --
    qtok = qtok_ref[...]                                         # (B*K, D)
    q_all = (jnp.dot(qtok, wq_ref[...], preferred_element_type=jnp.float32)
             + bq_ref[...])                                      # scale pre-folded
    wkv = wkv_ref[...]                                           # (D, 2*pad)
    kvpad = wkv.shape[1] // 2
    kvp = (jnp.dot(x, wkv, preferred_element_type=jnp.float32)
           + bkv_ref[...])                                       # (M, 2*pad)
    kx = kvp[:, :d_model]
    vx = kvp[:, kvpad:kvpad + d_model]
    cross_bias = cross_bias_ref[...]                             # (B*K, M)

    o_heads = []
    for hh in range(heads):                                      # static unroll
        lo = hh * head_dim
        hi = lo + head_dim
        s = jax.lax.dot_general(q_all[:, lo:hi], kx[:, lo:hi],
                                (((1,), (1,)), ((), ())),
                                preferred_element_type=jnp.float32)
        s = s + cross_bias
        o_heads.append(_softmax_av(s, vx[:, lo:hi]))             # (B*K, Dh)
    o_all = jnp.concatenate(o_heads, axis=-1)                    # (B*K, D)
    attended = (jnp.dot(o_all, woc_ref[...], preferred_element_type=jnp.float32)
                + boc_ref[...])                                  # out_proj

    y = _rms(qtok + attended, cnw_ref[...], eps)                 # cross_norm
    y = y + _swiglu(y, wgu_tok_ref[...], wd_tok_ref[...], inter_tok)
    o_ref[...] = _rms(y, onw_ref[...], eps).astype(o_ref.dtype)  # output_norm


# ----------------------------------------------------------------------------
# Host-side (XLA) glue: RoPE tables, spatial encoding, attention-bias builders
# ----------------------------------------------------------------------------

def _round_up(x, m):
    return ((x + m - 1) // m) * m


def _rot_half_matrix(dh):
    # rotate_half(x) == x @ R  (per head), with the sign baked in.
    half = dh // 2
    r = jnp.zeros((dh, dh), jnp.float32)
    r = r.at[half:, :half].set(-jnp.eye(half, dtype=jnp.float32))
    r = r.at[:half, half:].set(jnp.eye(half, dtype=jnp.float32))
    return r


def _padded_blocks(blocks, pad):
    # Pack blocks (d, w_i) side by side, each starting on a `pad`-lane boundary.
    d = blocks[0].shape[0]
    out = jnp.zeros((d, len(blocks) * pad), jnp.float32)
    for i, blk in enumerate(blocks):
        out = out.at[:, i * pad:i * pad + blk.shape[1]].set(blk)
    return out


def rope_tables(n, dh, theta, batch, heads):
    inv_freq = 1.0 / (theta ** (jnp.arange(0, dh, 2, dtype=jnp.float32) / dh))
    t = jnp.arange(n, dtype=jnp.float32)
    freqs = jnp.outer(t, inv_freq)                               # (n, dh/2)
    emb = jnp.concatenate([freqs, freqs], axis=-1)               # (n, dh)
    # Tile over batch (rows are batch-major) and over heads (same RoPE/head),
    # so the kernel applies RoPE once over the full D-wide Q/K blocks.
    cos = jnp.tile(jnp.cos(emb), (batch, heads))                 # (B*n, D)
    sin = jnp.tile(jnp.sin(emb), (batch, heads))
    return cos, sin


def encode_spatial_positions(spatial_positions, d_model):
    d4 = d_model // 4
    div_term = jnp.exp(jnp.arange(d4, dtype=jnp.float32)
                       * (-(jnp.log(jnp.float32(10000.0)) / d4)))
    x_pos = spatial_positions[:, :, 0:1]
    y_pos = spatial_positions[:, :, 1:2]
    enc = jnp.concatenate(
        [jnp.sin(x_pos * div_term), jnp.cos(x_pos * div_term),
         jnp.sin(y_pos * div_term), jnp.cos(y_pos * div_term)], axis=-1)
    if enc.shape[-1] < d_model:
        enc = jnp.pad(enc, ((0, 0), (0, 0), (0, d_model - enc.shape[-1])))
    return enc * 0.1


def _attention_biases(batch, n, k, attention_mask):
    # Block-diagonal "same batch" additive bias for flattened-row attention,
    # plus the module's optional key-padding mask (0 -> -inf, 1 -> 0).
    neg = jnp.float32(-1e30)
    col_b = jnp.repeat(jnp.arange(batch), n)                     # (M,)
    self_bias = jnp.where(col_b[:, None] == col_b[None, :], 0.0, neg)
    q_b = jnp.repeat(jnp.arange(batch), k)                       # (B*K,)
    cross_bias = jnp.where(q_b[:, None] == col_b[None, :], 0.0, neg)
    if attention_mask is not None:
        key_ok = attention_mask.reshape(batch * n).astype(jnp.float32) > 0
        self_bias = jnp.where(key_ok[None, :], self_bias, neg)
        cross_bias = jnp.where(key_ok[None, :], cross_bias, neg)
    return self_bias.astype(jnp.float32), cross_bias.astype(jnp.float32)


# ----------------------------------------------------------------------------
# Forward pass: one pallas_call for the whole module
# ----------------------------------------------------------------------------

def vision_decoder_forward(params, patch_embeddings, cfg,
                           spatial_positions=None, attention_mask=None):
    b, n, din = patch_embeddings.shape
    d_model = cfg['output_dim']
    heads = cfg['num_heads']
    head_dim = d_model // heads
    inter = cfg['intermediate_size']
    k_tok = cfg['num_tokens']
    it = d_model * 3
    eps = cfg['rms_norm_eps']
    m = b * n
    f32 = jnp.float32

    x2 = patch_embeddings.reshape(m, din).astype(f32)

    # --- tiny host/XLA glue: additive tables precomputed once per call -------
    # TODO(synk): pos-embedding linear interpolation for N > 1024 not implemented
    # (learned-table path only, as exercised here).
    addend = jnp.broadcast_to(params['pos_emb'][:, :n], (b, n, d_model))
    if spatial_positions is not None:
        addend = addend + encode_spatial_positions(spatial_positions, d_model)
    addend = addend.reshape(m, d_model).astype(f32)

    cos_d, sin_d = rope_tables(n, head_dim, cfg['rope_theta'], b, heads)
    self_bias, cross_bias = _attention_biases(b, n, k_tok, attention_mask)

    # TODO(synk): num_tokens == 1 pooling path and use_moe=True branches are not
    # implemented; config uses the dense multi-token path.
    qtok = jnp.broadcast_to(params['query_tokens'],
                            (b, k_tok, d_model)).reshape(b * k_tok, d_model)

    lp = params['layers']
    ca = params['cross_attn']

    out = pl.pallas_call(
        functools.partial(_fused_decoder_kernel,
                          num_layers=cfg['num_layers'], heads=heads,
                          head_dim=head_dim, inter_in=inter, inter_ffn=inter,
                          inter_tok=it, eps=eps),
        out_shape=jax.ShapeDtypeStruct((b * k_tok, d_model), f32),
    )(x2, addend,
      params['inp']['wgu'], params['inp']['wd'],
      params['dim_proj']['w'], params['dim_proj']['b'],
      lp['ln1'], lp['ln2'], lp['wproj'], lp['wo'], lp['wgu'], lp['wd'],
      cos_d, sin_d, self_bias,
      qtok, ca['wq'], ca['bq'], ca['wkv'], ca['bkv'], ca['wo'], ca['bo'],
      params['cross_norm'], params['token_gen']['wgu'], params['token_gen']['wd'],
      params['output_norm'], cross_bias)

    return out.reshape(b, k_tok, d_model)


# ----------------------------------------------------------------------------
# Deterministic parameter init (fused, lane-aligned weight layouts built here)
# ----------------------------------------------------------------------------

def init_params(key, cfg):
    din = cfg['input_dim']
    d_model = cfg['output_dim']
    inter = cfg['intermediate_size']
    heads = cfg['num_heads']
    head_dim = d_model // heads
    k_tok = cfg['num_tokens']
    it = d_model * 3
    pad = _round_up(d_model, 128)      # 128-lane group per projection block
    ipad = _round_up(inter, 128)
    ipad_tok = _round_up(it, 128)
    scale = 1.0 / math.sqrt(head_dim)  # softmax scale, folded into Q weights
    keys = iter(jax.random.split(key, 64))

    def nrm(shape, s=0.02):
        return jax.random.normal(next(keys), shape, jnp.float32) * s

    def swiglu_w(d_in, d_hidden, hidden_pad):
        # fused [gate | up] with each block starting on a 128-lane boundary
        return _padded_blocks([nrm((d_in, d_hidden)), nrm((d_in, d_hidden))],
                              hidden_pad)

    # per-head block-diagonal rotate-half operator, folded into Wq/Wk below
    rbd = jnp.kron(jnp.eye(heads, dtype=jnp.float32), _rot_half_matrix(head_dim))

    ln1s, ln2s, wprojs, wos, wgus, wds = [], [], [], [], [], []
    for _ in range(cfg['num_layers']):
        wq, wk, wv = nrm((d_model, d_model)), nrm((d_model, d_model)), nrm((d_model, d_model))
        # fused [Q*s | (Q@R)*s | K | K@R | V], lane-aligned, scale pre-folded
        wprojs.append(_padded_blocks(
            [wq * scale, (wq @ rbd) * scale, wk, wk @ rbd, wv], pad))
        ln1s.append(jnp.ones((1, d_model), jnp.float32))
        ln2s.append(jnp.ones((1, d_model), jnp.float32))
        wos.append(nrm((d_model, d_model)))
        wgus.append(swiglu_w(d_model, inter, ipad))
        wds.append(nrm((inter, d_model)))

    params = {
        'inp': {'wgu': swiglu_w(din, inter, ipad), 'wd': nrm((inter, din))},
        'dim_proj': {'w': nrm((din, d_model)),
                     'b': jnp.zeros((1, d_model), jnp.float32)},
        'pos_emb': nrm((1, 1024, d_model)),
        'query_tokens': nrm((1, k_tok, d_model)),
        'layers': {
            'ln1': jnp.stack(ln1s), 'ln2': jnp.stack(ln2s),
            'wproj': jnp.stack(wprojs), 'wo': jnp.stack(wos),
            'wgu': jnp.stack(wgus), 'wd': jnp.stack(wds),
        },
        'token_gen': {'wgu': swiglu_w(d_model, it, ipad_tok),
                      'wd': nrm((it, d_model))},
        'cross_attn': {
            # softmax scale folded into Wq / bq (bq is zero here anyway)
            'wq': nrm((d_model, d_model)) * scale,
            'bq': jnp.zeros((1, d_model), jnp.float32) * scale,
            # fused lane-aligned [K | V] projection
            'wkv': _padded_blocks([nrm((d_model, d_model)),
                                   nrm((d_model, d_model))], pad),
            'bkv': jnp.zeros((1, 2 * pad), jnp.float32),
            'wo': nrm((d_model, d_model)),
            'bo': jnp.zeros((1, d_model), jnp.float32),
        },
        'cross_norm': jnp.ones((1, d_model), jnp.float32),
        'output_norm': jnp.ones((1, d_model), jnp.float32),
    }
    return params


# ----------------------------------------------------------------------------
# Main
# ----------------------------------------------------------------------------

if __name__ == "__main__":
    cfg = dict(
        input_dim=32,
        output_dim=64,
        intermediate_size=96,
        num_layers=2,
        num_heads=2,
        num_tokens=4,
        rms_norm_eps=1e-6,
        rope_theta=10000.0,
    )

    key = jax.random.PRNGKey(0)
    pkey, xkey, skey = jax.random.split(key, 3)

    params = init_params(pkey, cfg)

    B, N = 2, 16
    patch_embeddings = jax.random.normal(xkey, (B, N, cfg['input_dim']), jnp.float32)
    spatial_positions = jax.random.uniform(skey, (B, N, 2), jnp.float32)

    fwd = jax.jit(lambda p, x, s: vision_decoder_forward(
        p, x, cfg, spatial_positions=s, attention_mask=None))

    out = fwd(params, patch_embeddings, spatial_positions)
    out = jax.block_until_ready(out)

    assert out.shape == (B, cfg['num_tokens'], cfg['output_dim']), out.shape
    assert bool(jnp.all(jnp.isfinite(out)))
    print("KERNEL_OK")
</pallas_src>

<mosaic_0001>
module attributes {stable_mosaic.version = 11 : i64} {
  func.func @_fused_decoder_kernel(%arg0: memref<32x32xf32, #tpu.memory_space<vmem>>, %arg1: memref<32x64xf32, #tpu.memory_space<vmem>>, %arg2: memref<32x256xf32, #tpu.memory_space<vmem>>, %arg3: memref<96x32xf32, #tpu.memory_space<vmem>>, %arg4: memref<32x64xf32, #tpu.memory_space<vmem>>, %arg5: memref<1x64xf32, #tpu.memory_space<vmem>>, %arg6: memref<2x1x64xf32, #tpu.memory_space<vmem>>, %arg7: memref<2x1x64xf32, #tpu.memory_space<vmem>>, %arg8: memref<2x64x640xf32, #tpu.memory_space<vmem>>, %arg9: memref<2x64x64xf32, #tpu.memory_space<vmem>>, %arg10: memref<2x64x256xf32, #tpu.memory_space<vmem>>, %arg11: memref<2x96x64xf32, #tpu.memory_space<vmem>>, %arg12: memref<32x64xf32, #tpu.memory_space<vmem>>, %arg13: memref<32x64xf32, #tpu.memory_space<vmem>>, %arg14: memref<32x32xf32, #tpu.memory_space<vmem>>, %arg15: memref<8x64xf32, #tpu.memory_space<vmem>>, %arg16: memref<64x64xf32, #tpu.memory_space<vmem>>, %arg17: memref<1x64xf32, #tpu.memory_space<vmem>>, %arg18: memref<64x256xf32, #tpu.memory_space<vmem>>, %arg19: memref<1x256xf32, #tpu.memory_space<vmem>>, %arg20: memref<64x64xf32, #tpu.memory_space<vmem>>, %arg21: memref<1x64xf32, #tpu.memory_space<vmem>>, %arg22: memref<1x64xf32, #tpu.memory_space<vmem>>, %arg23: memref<64x512xf32, #tpu.memory_space<vmem>>, %arg24: memref<192x64xf32, #tpu.memory_space<vmem>>, %arg25: memref<1x64xf32, #tpu.memory_space<vmem>>, %arg26: memref<8x32xf32, #tpu.memory_space<vmem>>, %arg27: memref<8x64xf32, #tpu.memory_space<vmem>>) attributes {dimension_semantics = [], scalar_prefetch = 0 : i64, scratch_operands = 0 : i64, tpu.core_type = #tpu.core_type<tc>} {
    %c0 = arith.constant 0 : index
    %c0_0 = arith.constant 0 : index
    %0 = vector.load %arg0[%c0, %c0_0] : memref<32x32xf32, #tpu.memory_space<vmem>>, vector<32x32xf32>
    %c0_1 = arith.constant 0 : index
    %c0_2 = arith.constant 0 : index
    %1 = vector.load %arg2[%c0_1, %c0_2] : memref<32x256xf32, #tpu.memory_space<vmem>>, vector<32x256xf32>
    %c0_3 = arith.constant 0 : index
    %c0_4 = arith.constant 0 : index
    %2 = vector.load %arg3[%c0_3, %c0_4] : memref<96x32xf32, #tpu.memory_space<vmem>>, vector<96x32xf32>
    %cst = arith.constant dense<0.000000e+00> : vector<32x256xf32>
    %3 = tpu.matmul %0, %1, %cst {dimension_numbers = #tpu.dot_dimension_numbers<[1], [0], [0], [1], [0, 0, 1, 1], [], []>} : vector<32x32xf32>, vector<32x256xf32>, vector<32x256xf32> -> vector<32x256xf32>
    %4 = vector.extract_strided_slice %3 {offsets = [0, 0], sizes = [32, 96], strides = [1, 1]} : vector<32x256xf32> to vector<32x96xf32>
    %5 = vector.extract_strided_slice %3 {offsets = [0, 128], sizes = [32, 96], strides = [1, 1]} : vector<32x256xf32> to vector<32x96xf32>
    %6 = arith.negf %4 : vector<32x96xf32>
    %7 = math.exp %6 : vector<32x96xf32>
    %cst_5 = arith.constant 1.000000e+00 : f32
    %8 = vector.broadcast %cst_5 : f32 to vector<32x96xf32>
    %9 = arith.addf %8, %7 : vector<32x96xf32>
    %10 = arith.divf %8, %9 : vector<32x96xf32>
    %11 = arith.mulf %4, %10 : vector<32x96xf32>
    %12 = arith.mulf %11, %5 : vector<32x96xf32>
    %cst_6 = arith.constant dense<0.000000e+00> : vector<32x32xf32>
    %13 = tpu.matmul %12, %2, %cst_6 {dimension_numbers = #tpu.dot_dimension_numbers<[1], [0], [0], [1], [0, 0, 1, 1], [], []>} : vector<32x96xf32>, vector<96x32xf32>, vector<32x32xf32> -> vector<32x32xf32>
    %c0_7 = arith.constant 0 : index
    %c0_8 = arith.constant 0 : index
    %14 = vector.load %arg4[%c0_7, %c0_8] : memref<32x64xf32, #tpu.memory_space<vmem>>, vector<32x64xf32>
    %cst_9 = arith.constant dense<0.000000e+00> : vector<32x64xf32>
    %15 = tpu.matmul %13, %14, %cst_9 {dimension_numbers = #tpu.dot_dimension_numbers<[1], [0], [0], [1], [0, 0, 1, 1], [], []>} : vector<32x32xf32>, vector<32x64xf32>, vector<32x64xf32> -> vector<32x64xf32>
    %c0_10 = arith.constant 0 : index
    %c0_11 = arith.constant 0 : index
    %16 = vector.load %arg5[%c0_10, %c0_11] : memref<1x64xf32, #tpu.memory_space<vmem>>, vector<1x64xf32>
    %17 = vector.broadcast %16 : vector<1x64xf32> to vector<32x64xf32>
    %18 = arith.addf %15, %17 : vector<32x64xf32>
    %c0_12 = arith.constant 0 : index
    %c0_13 = arith.constant 0 : index
    %19 = vector.load %arg1[%c0_12, %c0_13] : memref<32x64xf32, #tpu.memory_space<vmem>>, vector<32x64xf32>
    %20 = arith.addf %18, %19 : vector<32x64xf32>
    %c0_14 = arith.constant 0 : index
    %c0_15 = arith.constant 0 : index
    %21 = vector.load %arg12[%c0_14, %c0_15] : memref<32x64xf32, #tpu.memory_space<vmem>>, vector<32x64xf32>
    %c0_16 = arith.constant 0 : index
    %c0_17 = arith.constant 0 : index
    %22 = vector.load %arg13[%c0_16, %c0_17] : memref<32x64xf32, #tpu.memory_space<vmem>>, vector<32x64xf32>
    %c0_18 = arith.constant 0 : index
    %c0_19 = arith.constant 0 : index
    %23 = vector.load %arg14[%c0_18, %c0_19] : memref<32x32xf32, #tpu.memory_space<vmem>>, vector<32x32xf32>
    %c0_20 = arith.constant 0 : index
    %c0_21 = arith.constant 0 : index
    %c0_22 = arith.constant 0 : index
    %24 = vector.load %arg6[%c0_20, %c0_21, %c0_22] : memref<2x1x64xf32, #tpu.memory_space<vmem>>, vector<1x1x64xf32>
    %25 = vector.shape_cast %24 : vector<1x1x64xf32> to vector<1x64xf32>
    %26 = arith.mulf %20, %20 : vector<32x64xf32>
    %cst_23 = arith.constant dense<0.000000e+00> : vector<32xf32>
    %27 = vector.multi_reduction <add>, %26, %cst_23 [1] : vector<32x64xf32> to vector<32xf32>
    %28 = vector.shape_cast %27 : vector<32xf32> to vector<32x1xf32>
    %cst_24 = arith.constant 6.400000e+01 : f32
    %29 = vector.broadcast %cst_24 : f32 to vector<32x1xf32>
    %30 = arith.divf %28, %29 : vector<32x1xf32>
    %cst_25 = arith.constant 9.99999997E-7 : f32
    %31 = vector.broadcast %cst_25 : f32 to vector<32x1xf32>
    %32 = arith.addf %30, %31 : vector<32x1xf32>
    %33 = math.rsqrt %32 : vector<32x1xf32>
    %34 = vector.broadcast %33 : vector<32x1xf32> to vector<32x64xf32>
    %35 = arith.mulf %20, %34 : vector<32x64xf32>
    %36 = vector.broadcast %25 : vector<1x64xf32> to vector<32x64xf32>
    %37 = arith.mulf %35, %36 : vector<32x64xf32>
    %c0_26 = arith.constant 0 : index
    %c0_27 = arith.constant 0 : index
    %c0_28 = arith.constant 0 : index
    %38 = vector.load %arg8[%c0_26, %c0_27, %c0_28] : memref<2x64x640xf32, #tpu.memory_space<vmem>>, vector<1x64x640xf32>
    %39 = vector.shape_cast %38 : vector<1x64x640xf32> to vector<64x640xf32>
    %cst_29 = arith.constant dense<0.000000e+00> : vector<32x640xf32>
    %40 = tpu.matmul %37, %39, %cst_29 {dimension_numbers = #tpu.dot_dimension_numbers<[1], [0], [0], [1], [0, 0, 1, 1], [], []>} : vector<32x64xf32>, vector<64x640xf32>, vector<32x640xf32> -> vector<32x640xf32>
    %41 = vector.extract_strided_slice %40 {offsets = [0, 0], sizes = [32, 64], strides = [1, 1]} : vector<32x640xf32> to vector<32x64xf32>
    %42 = vector.extract_strided_slice %40 {offsets = [0, 128], sizes = [32, 64], strides = [1, 1]} : vector<32x640xf32> to vector<32x64xf32>
    %43 = vector.extract_strided_slice %40 {offsets = [0, 256], sizes = [32, 64], strides = [1, 1]} : vector<32x640xf32> to vector<32x64xf32>
    %44 = vector.extract_strided_slice %40 {offsets = [0, 384], sizes = [32, 64], strides = [1, 1]} : vector<32x640xf32> to vector<32x64xf32>
    %45 = vector.extract_strided_slice %40 {offsets = [0, 512], sizes = [32, 64], strides = [1, 1]} : vector<32x640xf32> to vector<32x64xf32>
    %46 = arith.mulf %41, %21 : vector<32x64xf32>
    %47 = arith.mulf %42, %22 : vector<32x64xf32>
    %48 = arith.addf %46, %47 : vector<32x64xf32>
    %49 = arith.mulf %43, %21 : vector<32x64xf32>
    %50 = arith.mulf %44, %22 : vector<32x64xf32>
    %51 = arith.addf %49, %50 : vector<32x64xf32>
    %52 = vector.extract_strided_slice %48 {offsets = [0, 0], sizes = [32, 32], strides = [1, 1]} : vector<32x64xf32> to vector<32x32xf32>
    %53 = vector.extract_strided_slice %51 {offsets = [0, 0], sizes = [32, 32], strides = [1, 1]} : vector<32x64xf32> to vector<32x32xf32>
    %cst_30 = arith.constant dense<0.000000e+00> : vector<32x32xf32>
    %54 = tpu.matmul %52, %53, %cst_30 {dimension_numbers = #tpu.dot_dimension_numbers<[1], [1], [0], [0], [0, 0, 1, 0], [], []>} : vector<32x32xf32>, vector<32x32xf32>, vector<32x32xf32> -> vector<32x32xf32>
    %55 = arith.addf %54, %23 : vector<32x32xf32>
    %56 = vector.extract_strided_slice %45 {offsets = [0, 0], sizes = [32, 32], strides = [1, 1]} : vector<32x64xf32> to vector<32x32xf32>
    %cst_31 = arith.constant dense<0xFF800000> : vector<32xf32>
    %57 = vector.multi_reduction <maximumf>, %55, %cst_31 [1] : vector<32x32xf32> to vector<32xf32>
    %58 = vector.shape_cast %57 : vector<32xf32> to vector<32x1xf32>
    %59 = vector.broadcast %58 : vector<32x1xf32> to vector<32x32xf32>
    %60 = arith.subf %55, %59 : vector<32x32xf32>
    %61 = math.exp %60 : vector<32x32xf32>
    %cst_32 = arith.constant dense<0.000000e+00> : vector<32xf32>
    %62 = vector.multi_reduction <add>, %61, %cst_32 [1] : vector<32x32xf32> to vector<32xf32>
    %63 = vector.shape_cast %62 : vector<32xf32> to vector<32x1xf32>
    %cst_33 = arith.constant dense<0.000000e+00> : vector<32x32xf32>
    %64 = tpu.matmul %61, %56, %cst_33 {dimension_numbers = #tpu.dot_dimension_numbers<[1], [0], [0], [1], [0, 0, 1, 1], [], []>} : vector<32x32xf32>, vector<32x32xf32>, vector<32x32xf32> -> vector<32x32xf32>
    %65 = vector.broadcast %63 : vector<32x1xf32> to vector<32x32xf32>
    %66 = arith.divf %64, %65 : vector<32x32xf32>
    %67 = vector.extract_strided_slice %48 {offsets = [0, 32], sizes = [32, 32], strides = [1, 1]} : vector<32x64xf32> to vector<32x32xf32>
    %68 = vector.extract_strided_slice %51 {offsets = [0, 32], sizes = [32, 32], strides = [1, 1]} : vector<32x64xf32> to vector<32x32xf32>
    %cst_34 = arith.constant dense<0.000000e+00> : vector<32x32xf32>
    %69 = tpu.matmul %67, %68, %cst_34 {dimension_numbers = #tpu.dot_dimension_numbers<[1], [1], [0], [0], [0, 0, 1, 0], [], []>} : vector<32x32xf32>, vector<32x32xf32>, vector<32x32xf32> -> vector<32x32xf32>
    %70 = arith.addf %69, %23 : vector<32x32xf32>
    %71 = vector.extract_strided_slice %45 {offsets = [0, 32], sizes = [32, 32], strides = [1, 1]} : vector<32x64xf32> to vector<32x32xf32>
    %cst_35 = arith.constant dense<0xFF800000> : vector<32xf32>
    %72 = vector.multi_reduction <maximumf>, %70, %cst_35 [1] : vector<32x32xf32> to vector<32xf32>
    %73 = vector.shape_cast %72 : vector<32xf32> to vector<32x1xf32>
    %74 = vector.broadcast %73 : vector<32x1xf32> to vector<32x32xf32>
    %75 = arith.subf %70, %74 : vector<32x32xf32>
    %76 = math.exp %75 : vector<32x32xf32>
    %cst_36 = arith.constant dense<0.000000e+00> : vector<32xf32>
    %77 = vector.multi_reduction <add>, %76, %cst_36 [1] : vector<32x32xf32> to vector<32xf32>
    %78 = vector.shape_cast %77 : vector<32xf32> to vector<32x1xf32>
    %cst_37 = arith.constant dense<0.000000e+00> : vector<32x32xf32>
    %79 = tpu.matmul %76, %71, %cst_37 {dimension_numbers = #tpu.dot_dimension_numbers<[1], [0], [0], [1], [0, 0, 1, 1], [], []>} : vector<32x32xf32>, vector<32x32xf32>, vector<32x32xf32> -> vector<32x32xf32>
    %80 = vector.broadcast %78 : vector<32x1xf32> to vector<32x32xf32>
    %81 = arith.divf %79, %80 : vector<32x32xf32>
    %82 = tpu.concatenate %66, %81 in 1 : vector<32x32xf32>, vector<32x32xf32> -> vector<32x64xf32>
    %c0_38 = arith.constant 0 : index
    %c0_39 = arith.constant 0 : index
    %c0_40 = arith.constant 0 : index
    %83 = vector.load %arg9[%c0_38, %c0_39, %c0_40] : memref<2x64x64xf32, #tpu.memory_space<vmem>>, vector<1x64x64xf32>
    %84 = vector.shape_cast %83 : vector<1x64x64xf32> to vector<64x64xf32>
    %cst_41 = arith.constant dense<0.000000e+00> : vector<32x64xf32>
    %85 = tpu.matmul %82, %84, %cst_41 {dimension_numbers = #tpu.dot_dimension_numbers<[1], [0], [0], [1], [0, 0, 1, 1], [], []>} : vector<32x64xf32>, vector<64x64xf32>, vector<32x64xf32> -> vector<32x64xf32>
    %86 = arith.addf %20, %85 : vector<32x64xf32>
    %c0_42 = arith.constant 0 : index
    %c0_43 = arith.constant 0 : index
    %c0_44 = arith.constant 0 : index
    %87 = vector.load %arg7[%c0_42, %c0_43, %c0_44] : memref<2x1x64xf32, #tpu.memory_space<vmem>>, vector<1x1x64xf32>
    %88 = vector.shape_cast %87 : vector<1x1x64xf32> to vector<1x64xf32>
    %89 = arith.mulf %86, %86 : vector<32x64xf32>
    %cst_45 = arith.constant dense<0.000000e+00> : vector<32xf32>
    %90 = vector.multi_reduction <add>, %89, %cst_45 [1] : vector<32x64xf32> to vector<32xf32>
    %91 = vector.shape_cast %90 : vector<32xf32> to vector<32x1xf32>
    %cst_46 = arith.constant 6.400000e+01 : f32
    %92 = vector.broadcast %cst_46 : f32 to vector<32x1xf32>
    %93 = arith.divf %91, %92 : vector<32x1xf32>
    %cst_47 = arith.constant 9.99999997E-7 : f32
    %94 = vector.broadcast %cst_47 : f32 to vector<32x1xf32>
    %95 = arith.addf %93, %94 : vector<32x1xf32>
    %96 = math.rsqrt %95 : vector<32x1xf32>
    %97 = vector.broadcast %96 : vector<32x1xf32> to vector<32x64xf32>
    %98 = arith.mulf %86, %97 : vector<32x64xf32>
    %99 = vector.broadcast %88 : vector<1x64xf32> to vector<32x64xf32>
    %100 = arith.mulf %98, %99 : vector<32x64xf32>
    %c0_48 = arith.constant 0 : index
    %c0_49 = arith.constant 0 : index
    %c0_50 = arith.constant 0 : index
    %101 = vector.load %arg10[%c0_48, %c0_49, %c0_50] : memref<2x64x256xf32, #tpu.memory_space<vmem>>, vector<1x64x256xf32>
    %102 = vector.shape_cast %101 : vector<1x64x256xf32> to vector<64x256xf32>
    %c0_51 = arith.constant 0 : index
    %c0_52 = arith.constant 0 : index
    %c0_53 = arith.constant 0 : index
    %103 = vector.load %arg11[%c0_51, %c0_52, %c0_53] : memref<2x96x64xf32, #tpu.memory_space<vmem>>, vector<1x96x64xf32>
    %104 = vector.shape_cast %103 : vector<1x96x64xf32> to vector<96x64xf32>
    %cst_54 = arith.constant dense<0.000000e+00> : vector<32x256xf32>
    %105 = tpu.matmul %100, %102, %cst_54 {dimension_numbers = #tpu.dot_dimension_numbers<[1], [0], [0], [1], [0, 0, 1, 1], [], []>} : vector<32x64xf32>, vector<64x256xf32>, vector<32x256xf32> -> vector<32x256xf32>
    %106 = vector.extract_strided_slice %105 {offsets = [0, 0], sizes = [32, 96], strides = [1, 1]} : vector<32x256xf32> to vector<32x96xf32>
    %107 = vector.extract_strided_slice %105 {offsets = [0, 128], sizes = [32, 96], strides = [1, 1]} : vector<32x256xf32> to vector<32x96xf32>
    %108 = arith.negf %106 : vector<32x96xf32>
    %109 = math.exp %108 : vector<32x96xf32>
    %cst_55 = arith.constant 1.000000e+00 : f32
    %110 = vector.broadcast %cst_55 : f32 to vector<32x96xf32>
    %111 = arith.addf %110, %109 : vector<32x96xf32>
    %112 = arith.divf %110, %111 : vector<32x96xf32>
    %113 = arith.mulf %106, %112 : vector<32x96xf32>
    %114 = arith.mulf %113, %107 : vector<32x96xf32>
    %cst_56 = arith.constant dense<0.000000e+00> : vector<32x64xf32>
    %115 = tpu.matmul %114, %104, %cst_56 {dimension_numbers = #tpu.dot_dimension_numbers<[1], [0], [0], [1], [0, 0, 1, 1], [], []>} : vector<32x96xf32>, vector<96x64xf32>, vector<32x64xf32> -> vector<32x64xf32>
    %116 = arith.addf %86, %115 : vector<32x64xf32>
    %c1 = arith.constant 1 : index
    %c0_57 = arith.constant 0 : index
    %c0_58 = arith.constant 0 : index
    %117 = vector.load %arg6[%c1, %c0_57, %c0_58] : memref<2x1x64xf32, #tpu.memory_space<vmem>>, vector<1x1x64xf32>
    %118 = vector.shape_cast %117 : vector<1x1x64xf32> to vector<1x64xf32>
    %119 = arith.mulf %116, %116 : vector<32x64xf32>
    %cst_59 = arith.constant dense<0.000000e+00> : vector<32xf32>
    %120 = vector.multi_reduction <add>, %119, %cst_59 [1] : vector<32x64xf32> to vector<32xf32>
    %121 = vector.shape_cast %120 : vector<32xf32> to vector<32x1xf32>
    %cst_60 = arith.constant 6.400000e+01 : f32
    %122 = vector.broadcast %cst_60 : f32 to vector<32x1xf32>
    %123 = arith.divf %121, %122 : vector<32x1xf32>
    %cst_61 = arith.constant 9.99999997E-7 : f32
    %124 = vector.broadcast %cst_61 : f32 to vector<32x1xf32>
    %125 = arith.addf %123, %124 : vector<32x1xf32>
    %126 = math.rsqrt %125 : vector<32x1xf32>
    %127 = vector.broadcast %126 : vector<32x1xf32> to vector<32x64xf32>
    %128 = arith.mulf %116, %127 : vector<32x64xf32>
    %129 = vector.broadcast %118 : vector<1x64xf32> to vector<32x64xf32>
    %130 = arith.mulf %128, %129 : vector<32x64xf32>
    %c1_62 = arith.constant 1 : index
    %c0_63 = arith.constant 0 : index
    %c0_64 = arith.constant 0 : index
    %131 = vector.load %arg8[%c1_62, %c0_63, %c0_64] : memref<2x64x640xf32, #tpu.memory_space<vmem>>, vector<1x64x640xf32>
    %132 = vector.shape_cast %131 : vector<1x64x640xf32> to vector<64x640xf32>
    %cst_65 = arith.constant dense<0.000000e+00> : vector<32x640xf32>
    %133 = tpu.matmul %130, %132, %cst_65 {dimension_numbers = #tpu.dot_dimension_numbers<[1], [0], [0], [1], [0, 0, 1, 1], [], []>} : vector<32x64xf32>, vector<64x640xf32>, vector<32x640xf32> -> vector<32x640xf32>
    %134 = vector.extract_strided_slice %133 {offsets = [0, 0], sizes = [32, 64], strides = [1, 1]} : vector<32x640xf32> to vector<32x64xf32>
    %135 = vector.extract_strided_slice %133 {offsets = [0, 128], sizes = [32, 64], strides = [1, 1]} : vector<32x640xf32> to vector<32x64xf32>
    %136 = vector.extract_strided_slice %133 {offsets = [0, 256], sizes = [32, 64], strides = [1, 1]} : vector<32x640xf32> to vector<32x64xf32>
    %137 = vector.extract_strided_slice %133 {offsets = [0, 384], sizes = [32, 64], strides = [1, 1]} : vector<32x640xf32> to vector<32x64xf32>
    %138 = vector.extract_strided_slice %133 {offsets = [0, 512], sizes = [32, 64], strides = [1, 1]} : vector<32x640xf32> to vector<32x64xf32>
    %139 = arith.mulf %134, %21 : vector<32x64xf32>
    %140 = arith.mulf %135, %22 : vector<32x64xf32>
    %141 = arith.addf %139, %140 : vector<32x64xf32>
    %142 = arith.mulf %136, %21 : vector<32x64xf32>
    %143 = arith.mulf %137, %22 : vector<32x64xf32>
    %144 = arith.addf %142, %143 : vector<32x64xf32>
    %145 = vector.extract_strided_slice %141 {offsets = [0, 0], sizes = [32, 32], strides = [1, 1]} : vector<32x64xf32> to vector<32x32xf32>
    %146 = vector.extract_strided_slice %144 {offsets = [0, 0], sizes = [32, 32], strides = [1, 1]} : vector<32x64xf32> to vector<32x32xf32>
    %cst_66 = arith.constant dense<0.000000e+00> : vector<32x32xf32>
    %147 = tpu.matmul %145, %146, %cst_66 {dimension_numbers = #tpu.dot_dimension_numbers<[1], [1], [0], [0], [0, 0, 1, 0], [], []>} : vector<32x32xf32>, vector<32x32xf32>, vector<32x32xf32> -> vector<32x32xf32>
    %148 = arith.addf %147, %23 : vector<32x32xf32>
    %149 = vector.extract_strided_slice %138 {offsets = [0, 0], sizes = [32, 32], strides = [1, 1]} : vector<32x64xf32> to vector<32x32xf32>
    %cst_67 = arith.constant dense<0xFF800000> : vector<32xf32>
    %150 = vector.multi_reduction <maximumf>, %148, %cst_67 [1] : vector<32x32xf32> to vector<32xf32>
    %151 = vector.shape_cast %150 : vector<32xf32> to vector<32x1xf32>
    %152 = vector.broadcast %151 : vector<32x1xf32> to vector<32x32xf32>
    %153 = arith.subf %148, %152 : vector<32x32xf32>
    %154 = math.exp %153 : vector<32x32xf32>
    %cst_68 = arith.constant dense<0.000000e+00> : vector<32xf32>
    %155 = vector.multi_reduction <add>, %154, %cst_68 [1] : vector<32x32xf32> to vector<32xf32>
    %156 = vector.shape_cast %155 : vector<32xf32> to vector<32x1xf32>
    %cst_69 = arith.constant dense<0.000000e+00> : vector<32x32xf32>
    %157 = tpu.matmul %154, %149, %cst_69 {dimension_numbers = #tpu.dot_dimension_numbers<[1], [0], [0], [1], [0, 0, 1, 1], [], []>} : vector<32x32xf32>, vector<32x32xf32>, vector<32x32xf32> -> vector<32x32xf32>
    %158 = vector.broadcast %156 : vector<32x1xf32> to vector<32x32xf32>
    %159 = arith.divf %157, %158 : vector<32x32xf32>
    %160 = vector.extract_strided_slice %141 {offsets = [0, 32], sizes = [32, 32], strides = [1, 1]} : vector<32x64xf32> to vector<32x32xf32>
    %161 = vector.extract_strided_slice %144 {offsets = [0, 32], sizes = [32, 32], strides = [1, 1]} : vector<32x64xf32> to vector<32x32xf32>
    %cst_70 = arith.constant dense<0.000000e+00> : vector<32x32xf32>
    %162 = tpu.matmul %160, %161, %cst_70 {dimension_numbers = #tpu.dot_dimension_numbers<[1], [1], [0], [0], [0, 0, 1, 0], [], []>} : vector<32x32xf32>, vector<32x32xf32>, vector<32x32xf32> -> vector<32x32xf32>
    %163 = arith.addf %162, %23 : vector<32x32xf32>
    %164 = vector.extract_strided_slice %138 {offsets = [0, 32], sizes = [32, 32], strides = [1, 1]} : vector<32x64xf32> to vector<32x32xf32>
    %cst_71 = arith.constant dense<0xFF800000> : vector<32xf32>
    %165 = vector.multi_reduction <maximumf>, %163, %cst_71 [1] : vector<32x32xf32> to vector<32xf32>
    %166 = vector.shape_cast %165 : vector<32xf32> to vector<32x1xf32>
    %167 = vector.broadcast %166 : vector<32x1xf32> to vector<32x32xf32>
    %168 = arith.subf %163, %167 : vector<32x32xf32>
    %169 = math.exp %168 : vector<32x32xf32>
    %cst_72 = arith.constant dense<0.000000e+00> : vector<32xf32>
    %170 = vector.multi_reduction <add>, %169, %cst_72 [1] : vector<32x32xf32> to vector<32xf32>
    %171 = vector.shape_cast %170 : vector<32xf32> to vector<32x1xf32>
    %cst_73 = arith.constant dense<0.000000e+00> : vector<32x32xf32>
    %172 = tpu.matmul %169, %164, %cst_73 {dimension_numbers = #tpu.dot_dimension_numbers<[1], [0], [0], [1], [0, 0, 1, 1], [], []>} : vector<32x32xf32>, vector<32x32xf32>, vector<32x32xf32> -> vector<32x32xf32>
    %173 = vector.broadcast %171 : vector<32x1xf32> to vector<32x32xf32>
    %174 = arith.divf %172, %173 : vector<32x32xf32>
    %175 = tpu.concatenate %159, %174 in 1 : vector<32x32xf32>, vector<32x32xf32> -> vector<32x64xf32>
    %c1_74 = arith.constant 1 : index
    %c0_75 = arith.constant 0 : index
    %c0_76 = arith.constant 0 : index
    %176 = vector.load %arg9[%c1_74, %c0_75, %c0_76] : memref<2x64x64xf32, #tpu.memory_space<vmem>>, vector<1x64x64xf32>
    %177 = vector.shape_cast %176 : vector<1x64x64xf32> to vector<64x64xf32>
    %cst_77 = arith.constant dense<0.000000e+00> : vector<32x64xf32>
    %178 = tpu.matmul %175, %177, %cst_77 {dimension_numbers = #tpu.dot_dimension_numbers<[1], [0], [0], [1], [0, 0, 1, 1], [], []>} : vector<32x64xf32>, vector<64x64xf32>, vector<32x64xf32> -> vector<32x64xf32>
    %179 = arith.addf %116, %178 : vector<32x64xf32>
    %c1_78 = arith.constant 1 : index
    %c0_79 = arith.constant 0 : index
    %c0_80 = arith.constant 0 : index
    %180 = vector.load %arg7[%c1_78, %c0_79, %c0_80] : memref<2x1x64xf32, #tpu.memory_space<vmem>>, vector<1x1x64xf32>
    %181 = vector.shape_cast %180 : vector<1x1x64xf32> to vector<1x64xf32>
    %182 = arith.mulf %179, %179 : vector<32x64xf32>
    %cst_81 = arith.constant dense<0.000000e+00> : vector<32xf32>
    %183 = vector.multi_reduction <add>, %182, %cst_81 [1] : vector<32x64xf32> to vector<32xf32>
    %184 = vector.shape_cast %183 : vector<32xf32> to vector<32x1xf32>
    %cst_82 = arith.constant 6.400000e+01 : f32
    %185 = vector.broadcast %cst_82 : f32 to vector<32x1xf32>
    %186 = arith.divf %184, %185 : vector<32x1xf32>
    %cst_83 = arith.constant 9.99999997E-7 : f32
    %187 = vector.broadcast %cst_83 : f32 to vector<32x1xf32>
    %188 = arith.addf %186, %187 : vector<32x1xf32>
    %189 = math.rsqrt %188 : vector<32x1xf32>
    %190 = vector.broadcast %189 : vector<32x1xf32> to vector<32x64xf32>
    %191 = arith.mulf %179, %190 : vector<32x64xf32>
    %192 = vector.broadcast %181 : vector<1x64xf32> to vector<32x64xf32>
    %193 = arith.mulf %191, %192 : vector<32x64xf32>
    %c1_84 = arith.constant 1 : index
    %c0_85 = arith.constant 0 : index
    %c0_86 = arith.constant 0 : index
    %194 = vector.load %arg10[%c1_84, %c0_85, %c0_86] : memref<2x64x256xf32, #tpu.memory_space<vmem>>, vector<1x64x256xf32>
    %195 = vector.shape_cast %194 : vector<1x64x256xf32> to vector<64x256xf32>
    %c1_87 = arith.constant 1 : index
    %c0_88 = arith.constant 0 : index
    %c0_89 = arith.constant 0 : index
    %196 = vector.load %arg11[%c1_87, %c0_88, %c0_89] : memref<2x96x64xf32, #tpu.memory_space<vmem>>, vector<1x96x64xf32>
    %197 = vector.shape_cast %196 : vector<1x96x64xf32> to vector<96x64xf32>
    %cst_90 = arith.constant dense<0.000000e+00> : vector<32x256xf32>
    %198 = tpu.matmul %193, %195, %cst_90 {dimension_numbers = #tpu.dot_dimension_numbers<[1], [0], [0], [1], [0, 0, 1, 1], [], []>} : vector<32x64xf32>, vector<64x256xf32>, vector<32x256xf32> -> vector<32x256xf32>
    %199 = vector.extract_strided_slice %198 {offsets = [0, 0], sizes = [32, 96], strides = [1, 1]} : vector<32x256xf32> to vector<32x96xf32>
    %200 = vector.extract_strided_slice %198 {offsets = [0, 128], sizes = [32, 96], strides = [1, 1]} : vector<32x256xf32> to vector<32x96xf32>
    %201 = arith.negf %199 : vector<32x96xf32>
    %202 = math.exp %201 : vector<32x96xf32>
    %cst_91 = arith.constant 1.000000e+00 : f32
    %203 = vector.broadcast %cst_91 : f32 to vector<32x96xf32>
    %204 = arith.addf %203, %202 : vector<32x96xf32>
    %205 = arith.divf %203, %204 : vector<32x96xf32>
    %206 = arith.mulf %199, %205 : vector<32x96xf32>
    %207 = arith.mulf %206, %200 : vector<32x96xf32>
    %cst_92 = arith.constant dense<0.000000e+00> : vector<32x64xf32>
    %208 = tpu.matmul %207, %197, %cst_92 {dimension_numbers = #tpu.dot_dimension_numbers<[1], [0], [0], [1], [0, 0, 1, 1], [], []>} : vector<32x96xf32>, vector<96x64xf32>, vector<32x64xf32> -> vector<32x64xf32>
    %209 = arith.addf %179, %208 : vector<32x64xf32>
    %c0_93 = arith.constant 0 : index
    %c0_94 = arith.constant 0 : index
    %210 = vector.load %arg15[%c0_93, %c0_94] : memref<8x64xf32, #tpu.memory_space<vmem>>, vector<8x64xf32>
    %c0_95 = arith.constant 0 : index
    %c0_96 = arith.constant 0 : index
    %211 = vector.load %arg16[%c0_95, %c0_96] : memref<64x64xf32, #tpu.memory_space<vmem>>, vector<64x64xf32>
    %cst_97 = arith.constant dense<0.000000e+00> : vector<8x64xf32>
    %212 = tpu.matmul %210, %211, %cst_97 {dimension_numbers = #tpu.dot_dimension_numbers<[1], [0], [0], [1], [0, 0, 1, 1], [], []>} : vector<8x64xf32>, vector<64x64xf32>, vector<8x64xf32> -> vector<8x64xf32>
    %c0_98 = arith.constant 0 : index
    %c0_99 = arith.constant 0 : index
    %213 = vector.load %arg17[%c0_98, %c0_99] : memref<1x64xf32, #tpu.memory_space<vmem>>, vector<1x64xf32>
    %214 = vector.broadcast %213 : vector<1x64xf32> to vector<8x64xf32>
    %215 = arith.addf %212, %214 : vector<8x64xf32>
    %c0_100 = arith.constant 0 : index
    %c0_101 = arith.constant 0 : index
    %216 = vector.load %arg18[%c0_100, %c0_101] : memref<64x256xf32, #tpu.memory_space<vmem>>, vector<64x256xf32>
    %cst_102 = arith.constant dense<0.000000e+00> : vector<32x256xf32>
    %217 = tpu.matmul %209, %216, %cst_102 {dimension_numbers = #tpu.dot_dimension_numbers<[1], [0], [0], [1], [0, 0, 1, 1], [], []>} : vector<32x64xf32>, vector<64x256xf32>, vector<32x256xf32> -> vector<32x256xf32>
    %c0_103 = arith.constant 0 : index
    %c0_104 = arith.constant 0 : index
    %218 = vector.load %arg19[%c0_103, %c0_104] : memref<1x256xf32, #tpu.memory_space<vmem>>, vector<1x256xf32>
    %219 = vector.broadcast %218 : vector<1x256xf32> to vector<32x256xf32>
    %220 = arith.addf %217, %219 : vector<32x256xf32>
    %221 = vector.extract_strided_slice %220 {offsets = [0, 0], sizes = [32, 64], strides = [1, 1]} : vector<32x256xf32> to vector<32x64xf32>
    %222 = vector.extract_strided_slice %220 {offsets = [0, 128], sizes = [32, 64], strides = [1, 1]} : vector<32x256xf32> to vector<32x64xf32>
    %c0_105 = arith.constant 0 : index
    %c0_106 = arith.constant 0 : index
    %223 = vector.load %arg26[%c0_105, %c0_106] : memref<8x32xf32, #tpu.memory_space<vmem>>, vector<8x32xf32>
    %224 = vector.extract_strided_slice %215 {offsets = [0, 0], sizes = [8, 32], strides = [1, 1]} : vector<8x64xf32> to vector<8x32xf32>
    %225 = vector.extract_strided_slice %221 {offsets = [0, 0], sizes = [32, 32], strides = [1, 1]} : vector<32x64xf32> to vector<32x32xf32>
    %cst_107 = arith.constant dense<0.000000e+00> : vector<8x32xf32>
    %226 = tpu.matmul %224, %225, %cst_107 {dimension_numbers = #tpu.dot_dimension_numbers<[1], [1], [0], [0], [0, 0, 1, 0], [], []>} : vector<8x32xf32>, vector<32x32xf32>, vector<8x32xf32> -> vector<8x32xf32>
    %227 = arith.addf %226, %223 : vector<8x32xf32>
    %228 = vector.extract_strided_slice %222 {offsets = [0, 0], sizes = [32, 32], strides = [1, 1]} : vector<32x64xf32> to vector<32x32xf32>
    %cst_108 = arith.constant dense<0xFF800000> : vector<8xf32>
    %229 = vector.multi_reduction <maximumf>, %227, %cst_108 [1] : vector<8x32xf32> to vector<8xf32>
    %230 = vector.shape_cast %229 : vector<8xf32> to vector<8x1xf32>
    %231 = vector.broadcast %230 : vector<8x1xf32> to vector<8x32xf32>
    %232 = arith.subf %227, %231 : vector<8x32xf32>
    %233 = math.exp %232 : vector<8x32xf32>
    %cst_109 = arith.constant dense<0.000000e+00> : vector<8xf32>
    %234 = vector.multi_reduction <add>, %233, %cst_109 [1] : vector<8x32xf32> to vector<8xf32>
    %235 = vector.shape_cast %234 : vector<8xf32> to vector<8x1xf32>
    %cst_110 = arith.constant dense<0.000000e+00> : vector<8x32xf32>
    %236 = tpu.matmul %233, %228, %cst_110 {dimension_numbers = #tpu.dot_dimension_numbers<[1], [0], [0], [1], [0, 0, 1, 1], [], []>} : vector<8x32xf32>, vector<32x32xf32>, vector<8x32xf32> -> vector<8x32xf32>
    %237 = vector.broadcast %235 : vector<8x1xf32> to vector<8x32xf32>
    %238 = arith.divf %236, %237 : vector<8x32xf32>
    %239 = vector.extract_strided_slice %215 {offsets = [0, 32], sizes = [8, 32], strides = [1, 1]} : vector<8x64xf32> to vector<8x32xf32>
    %240 = vector.extract_strided_slice %221 {offsets = [0, 32], sizes = [32, 32], strides = [1, 1]} : vector<32x64xf32> to vector<32x32xf32>
    %cst_111 = arith.constant dense<0.000000e+00> : vector<8x32xf32>
    %241 = tpu.matmul %239, %240, %cst_111 {dimension_numbers = #tpu.dot_dimension_numbers<[1], [1], [0], [0], [0, 0, 1, 0], [], []>} : vector<8x32xf32>, vector<32x32xf32>, vector<8x32xf32> -> vector<8x32xf32>
    %242 = arith.addf %241, %223 : vector<8x32xf32>
    %243 = vector.extract_strided_slice %222 {offsets = [0, 32], sizes = [32, 32], strides = [1, 1]} : vector<32x64xf32> to vector<32x32xf32>
    %cst_112 = arith.constant dense<0xFF800000> : vector<8xf32>
    %244 = vector.multi_reduction <maximumf>, %242, %cst_112 [1] : vector<8x32xf32> to vector<8xf32>
    %245 = vector.shape_cast %244 : vector<8xf32> to vector<8x1xf32>
    %246 = vector.broadcast %245 : vector<8x1xf32> to vector<8x32xf32>
    %247 = arith.subf %242, %246 : vector<8x32xf32>
    %248 = math.exp %247 : vector<8x32xf32>
    %cst_113 = arith.constant dense<0.000000e+00> : vector<8xf32>
    %249 = vector.multi_reduction <add>, %248, %cst_113 [1] : vector<8x32xf32> to vector<8xf32>
    %250 = vector.shape_cast %249 : vector<8xf32> to vector<8x1xf32>
    %cst_114 = arith.constant dense<0.000000e+00> : vector<8x32xf32>
    %251 = tpu.matmul %248, %243, %cst_114 {dimension_numbers = #tpu.dot_dimension_numbers<[1], [0], [0], [1], [0, 0, 1, 1], [], []>} : vector<8x32xf32>, vector<32x32xf32>, vector<8x32xf32> -> vector<8x32xf32>
    %252 = vector.broadcast %250 : vector<8x1xf32> to vector<8x32xf32>
    %253 = arith.divf %251, %252 : vector<8x32xf32>
    %254 = tpu.concatenate %238, %253 in 1 : vector<8x32xf32>, vector<8x32xf32> -> vector<8x64xf32>
    %c0_115 = arith.constant 0 : index
    %c0_116 = arith.constant 0 : index
    %255 = vector.load %arg20[%c0_115, %c0_116] : memref<64x64xf32, #tpu.memory_space<vmem>>, vector<64x64xf32>
    %cst_117 = arith.constant dense<0.000000e+00> : vector<8x64xf32>
    %256 = tpu.matmul %254, %255, %cst_117 {dimension_numbers = #tpu.dot_dimension_numbers<[1], [0], [0], [1], [0, 0, 1, 1], [], []>} : vector<8x64xf32>, vector<64x64xf32>, vector<8x64xf32> -> vector<8x64xf32>
    %c0_118 = arith.constant 0 : index
    %c0_119 = arith.constant 0 : index
    %257 = vector.load %arg21[%c0_118, %c0_119] : memref<1x64xf32, #tpu.memory_space<vmem>>, vector<1x64xf32>
    %258 = vector.broadcast %257 : vector<1x64xf32> to vector<8x64xf32>
    %259 = arith.addf %256, %258 : vector<8x64xf32>
    %260 = arith.addf %210, %259 : vector<8x64xf32>
    %c0_120 = arith.constant 0 : index
    %c0_121 = arith.constant 0 : index
    %261 = vector.load %arg22[%c0_120, %c0_121] : memref<1x64xf32, #tpu.memory_space<vmem>>, vector<1x64xf32>
    %262 = arith.mulf %260, %260 : vector<8x64xf32>
    %cst_122 = arith.constant dense<0.000000e+00> : vector<8xf32>
    %263 = vector.multi_reduction <add>, %262, %cst_122 [1] : vector<8x64xf32> to vector<8xf32>
    %264 = vector.shape_cast %263 : vector<8xf32> to vector<8x1xf32>
    %cst_123 = arith.constant 6.400000e+01 : f32
    %265 = vector.broadcast %cst_123 : f32 to vector<8x1xf32>
    %266 = arith.divf %264, %265 : vector<8x1xf32>
    %cst_124 = arith.constant 9.99999997E-7 : f32
    %267 = vector.broadcast %cst_124 : f32 to vector<8x1xf32>
    %268 = arith.addf %266, %267 : vector<8x1xf32>
    %269 = math.rsqrt %268 : vector<8x1xf32>
    %270 = vector.broadcast %269 : vector<8x1xf32> to vector<8x64xf32>
    %271 = arith.mulf %260, %270 : vector<8x64xf32>
    %272 = vector.broadcast %261 : vector<1x64xf32> to vector<8x64xf32>
    %273 = arith.mulf %271, %272 : vector<8x64xf32>
    %c0_125 = arith.constant 0 : index
    %c0_126 = arith.constant 0 : index
    %274 = vector.load %arg23[%c0_125, %c0_126] : memref<64x512xf32, #tpu.memory_space<vmem>>, vector<64x512xf32>
    %c0_127 = arith.constant 0 : index
    %c0_128 = arith.constant 0 : index
    %275 = vector.load %arg24[%c0_127, %c0_128] : memref<192x64xf32, #tpu.memory_space<vmem>>, vector<192x64xf32>
    %cst_129 = arith.constant dense<0.000000e+00> : vector<8x512xf32>
    %276 = tpu.matmul %273, %274, %cst_129 {dimension_numbers = #tpu.dot_dimension_numbers<[1], [0], [0], [1], [0, 0, 1, 1], [], []>} : vector<8x64xf32>, vector<64x512xf32>, vector<8x512xf32> -> vector<8x512xf32>
    %277 = vector.extract_strided_slice %276 {offsets = [0, 0], sizes = [8, 192], strides = [1, 1]} : vector<8x512xf32> to vector<8x192xf32>
    %278 = vector.extract_strided_slice %276 {offsets = [0, 256], sizes = [8, 192], strides = [1, 1]} : vector<8x512xf32> to vector<8x192xf32>
    %279 = arith.negf %277 : vector<8x192xf32>
    %280 = math.exp %279 : vector<8x192xf32>
    %cst_130 = arith.constant 1.000000e+00 : f32
    %281 = vector.broadcast %cst_130 : f32 to vector<8x192xf32>
    %282 = arith.addf %281, %280 : vector<8x192xf32>
    %283 = arith.divf %281, %282 : vector<8x192xf32>
    %284 = arith.mulf %277, %283 : vector<8x192xf32>
    %285 = arith.mulf %284, %278 : vector<8x192xf32>
    %cst_131 = arith.constant dense<0.000000e+00> : vector<8x64xf32>
    %286 = tpu.matmul %285, %275, %cst_131 {dimension_numbers = #tpu.dot_dimension_numbers<[1], [0], [0], [1], [0, 0, 1, 1], [], []>} : vector<8x192xf32>, vector<192x64xf32>, vector<8x64xf32> -> vector<8x64xf32>
    %287 = arith.addf %273, %286 : vector<8x64xf32>
    %c0_132 = arith.constant 0 : index
    %c0_133 = arith.constant 0 : index
    %288 = vector.load %arg25[%c0_132, %c0_133] : memref<1x64xf32, #tpu.memory_space<vmem>>, vector<1x64xf32>
    %289 = arith.mulf %287, %287 : vector<8x64xf32>
    %cst_134 = arith.constant dense<0.000000e+00> : vector<8xf32>
    %290 = vector.multi_reduction <add>, %289, %cst_134 [1] : vector<8x64xf32> to vector<8xf32>
    %291 = vector.shape_cast %290 : vector<8xf32> to vector<8x1xf32>
    %cst_135 = arith.constant 6.400000e+01 : f32
    %292 = vector.broadcast %cst_135 : f32 to vector<8x1xf32>
    %293 = arith.divf %291, %292 : vector<8x1xf32>
    %cst_136 = arith.constant 9.99999997E-7 : f32
    %294 = vector.broadcast %cst_136 : f32 to vector<8x1xf32>
    %295 = arith.addf %293, %294 : vector<8x1xf32>
    %296 = math.rsqrt %295 : vector<8x1xf32>
    %297 = vector.broadcast %296 : vector<8x1xf32> to vector<8x64xf32>
    %298 = arith.mulf %287, %297 : vector<8x64xf32>
    %299 = vector.broadcast %288 : vector<1x64xf32> to vector<8x64xf32>
    %300 = arith.mulf %298, %299 : vector<8x64xf32>
    %c0_137 = arith.constant 0 : index
    %c0_138 = arith.constant 0 : index
    %301 = vector.load %arg27[%c0_137, %c0_138] : memref<8x64xf32, #tpu.memory_space<vmem>>, vector<8x64xf32>
    tpu.vector_store %arg27[%c0_137, %c0_138], %300 {strides = array<i32>} : memref<8x64xf32, #tpu.memory_space<vmem>>, vector<8x64xf32>,
    return
  }
}

</mosaic_0001>

<llo_original>
// kernel: eq.22
$region0: #{eq.22}
  %s0 = inlined_call_operand.vmem [shape: s32[2,4], index: 0, kind: input, shape index: {}]
  %s1 = inlined_call_operand.vmem [shape: s32[8], index: 1, kind: output, shape index: {}]
  $region1: #{eq.22} parent=0
    #allocation0 [shape = 'u8[4096]{0}', space=vmem, size = 0x1000, scoped, tag = 'scoped mem for output reshape']
    #allocation1 [shape = 'u8[4096]{0}', space=vmem, size = 0x1000, scoped, tag = 'scoped mem for input reshape']
    %s3 = sshll.u32 1, 2
    %s4 = ssub.s32 %s3, 1
    %v5 = vld [vmem:[%s0] sm:%s4]
    %6 = vst [vmem:[#allocation1] sm:%s4] %v5
    %v7 = vld [vmem:[#allocation1] sm:$0x1]
    %vm8 = vcmask 31744
    %9 = vst.msk [vmem:[#allocation0] sm:$0x1] %vm8, %v7
    %s10 = scalar_lea.vmem [#allocation1], 1
    %v11 = vld [vmem:[%s10] sm:$0x1]
    %12 = vrot.lane.b32.xlu0 %v11, 4
    %v13 = vpop.permute.xlu0 %12
    %vm14 = vcmask 64544
    %15 = vst.msk [vmem:[#allocation0] sm:$0x1] %vm14, %v13
    %s17 = sshll.u32 1, 1
    %s18 = ssub.s32 %s17, 1
    %v20 = vld [vmem:[#allocation0] sm:%s18]
    %s21 = sshll.u32 1, 1
    %s22 = ssub.s32 %s21, 1
    %23 = vst [vmem:[%s1] sm:%s22] %v20

// kernel: eq.15
$region0: #{eq.15}
  %s0 = inlined_call_operand.vmem [shape: s32[2,16], index: 0, kind: input, shape index: {}]
  %s1 = inlined_call_operand.vmem [shape: s32[32], index: 1, kind: output, shape index: {}]
  $region1: #{eq.15} parent=0
    #allocation0 [shape = 'u8[4096]{0}', space=vmem, size = 0x1000, scoped, tag = 'scoped mem for output reshape']
    #allocation1 [shape = 'u8[4096]{0}', space=vmem, size = 0x1000, scoped, tag = 'scoped mem for input reshape']
    %s3 = sshll.u32 1, 2
    %s4 = ssub.s32 %s3, 1
    %v5 = vld [vmem:[%s0] sm:%s4]
    %6 = vst [vmem:[#allocation1] sm:%s4] %v5
    %v7 = vld [vmem:[#allocation1] sm:$0x1]
    %vm8 = vcmask 130048
    %9 = vst.msk [vmem:[#allocation0] sm:$0x1] %vm8, %v7
    %s10 = scalar_lea.vmem [#allocation1], 1
    %v11 = vld [vmem:[%s10] sm:$0x1]
    %12 = vrot.lane.b32.xlu0 %v11, 16
    %v13 = vpop.permute.xlu0 %12
    %vm14 = vcmask 261248
    %15 = vst.msk [vmem:[#allocation0] sm:$0x1] %vm14, %v13
    %s17 = sshll.u32 1, 1
    %s18 = ssub.s32 %s17, 1
    %v20 = vld [vmem:[#allocation0] sm:%s18]
    %s21 = sshll.u32 1, 1
    %s22 = ssub.s32 %s21, 1
    %23 = vst [vmem:[%s1] sm:%s22] %v20

// kernel: tile.18
$region0: #{tile.18}
  #allocation0 [shape = 's32[1]{0}', space=sflag, size = 0x4, scoped, tag = 'scoped memory for tile.18']
  %s0 = inlined_call_operand.vmem [shape: f32[16,32], index: 0, kind: input, shape index: {}]
  %s1 = inlined_call_operand.vmem [shape: f32[2,16,2,32], index: 1, kind: output, shape index: {}]
  // Predicated region
  $region2: #{tile.18} parent=0 // pred_check
    _
  $region3: #{tile.18} parent=0 // pred_check_branch
    %3 = sbr.rel (0) target = $region5
  $region4: #{tile.18} parent=0 // pred_region
    _
  $region5: #{tile.18} parent=0 // pred_fallthru
    _
  %v4 = vld [vmem:[%s0] ss:$0 sm:$0xff]
  %5 = vst [vmem:[%s1] sm:$0x3] %v4
  %s6 = scalar_lea.vmem %s1, 32
  %7 = vst [vmem:[%s6] sm:$0x3] %v4
  %s8 = scalar_lea.vmem %s0, 1
  %v9 = vld [vmem:[%s8] ss:$0 sm:$0xff]
  %s10 = scalar_lea.vmem %s1, 2
  %11 = vst [vmem:[%s10] sm:$0x3] %v9
  %s12 = scalar_lea.vmem %s1, 34
  %13 = vst [vmem:[%s12] sm:$0x3] %v9
  %s14 = scalar_lea.vmem %s0, 2
  %v15 = vld [vmem:[%s14] ss:$0 sm:$0xff]
  %s16 = scalar_lea.vmem %s1, 4
  %17 = vst [vmem:[%s16] sm:$0x3] %v15
  %s18 = scalar_lea.vmem %s1, 36
  %19 = vst [vmem:[%s18] sm:$0x3] %v15
  %s20 = scalar_lea.vmem %s0, 3
  %v21 = vld [vmem:[%s20] ss:$0 sm:$0xff]
  %s22 = scalar_lea.vmem %s1, 6
  %23 = vst [vmem:[%s22] sm:$0x3] %v21
  %s24 = scalar_lea.vmem %s1, 38
  %25 = vst [vmem:[%s24] sm:$0x3] %v21
  %s26 = scalar_lea.vmem %s0, 4
  %v27 = vld [vmem:[%s26] ss:$0 sm:$0xff]
  %s28 = scalar_lea.vmem %s1, 8
  %29 = vst [vmem:[%s28] sm:$0x3] %v27
  %s30 = scalar_lea.vmem %s1, 40
  %31 = vst [vmem:[%s30] sm:$0x3] %v27
  %s32 = scalar_lea.vmem %s0, 5
  %v33 = vld [vmem:[%s32] ss:$0 sm:$0xff]
  %s34 = scalar_lea.vmem %s1, 10
  %35 = vst [vmem:[%s34] sm:$0x3] %v33
  %s36 = scalar_lea.vmem %s1, 42
  %37 = vst [vmem:[%s36] sm:$0x3] %v33
  %s38 = scalar_lea.vmem %s0, 6
  %v39 = vld [vmem:[%s38] ss:$0 sm:$0xff]
  %s40 = scalar_lea.vmem %s1, 12
  %41 = vst [vmem:[%s40] sm:$0x3] %v39
  %s42 = scalar_lea.vmem %s1, 44
  %43 = vst [vmem:[%s42] sm:$0x3] %v39
  %s44 = scalar_lea.vmem %s0, 7
  %v45 = vld [vmem:[%s44] ss:$0 sm:$0xff]
  %s46 = scalar_lea.vmem %s1, 14
  %47 = vst [vmem:[%s46] sm:$0x3] %v45
  %s48 = scalar_lea.vmem %s1, 46
  %49 = vst [vmem:[%s48] sm:$0x3] %v45
  %s50 = scalar_lea.vmem %s0, 8
  %v51 = vld [vmem:[%s50] ss:$0 sm:$0xff]
  %s52 = scalar_lea.vmem %s1, 16
  %53 = vst [vmem:[%s52] sm:$0x3] %v51
  %s54 = scalar_lea.vmem %s1, 48
  %55 = vst [vmem:[%s54] sm:$0x3] %v51
  %s56 = scalar_lea.vmem %s0, 8
  %s57 = scalar_lea.vmem %s56, 1
  %v58 = vld [vmem:[%s57] ss:$0 sm:$0xff]
  %s59 = scalar_lea.vmem %s1, 18
  %60 = vst [vmem:[%s59] sm:$0x3] %v58
  %s61 = scalar_lea.vmem %s1, 50
  %62 = vst [vmem:[%s61] sm:$0x3] %v58
  %s63 = scalar_lea.vmem %s0, 8
  %s64 = scalar_lea.vmem %s63, 2
  %v65 = vld [vmem:[%s64] ss:$0 sm:$0xff]
  %s66 = scalar_lea.vmem %s1, 20
  %67 = vst [vmem:[%s66] sm:$0x3] %v65
  %s68 = scalar_lea.vmem %s1, 52
  %69 = vst [vmem:[%s68] sm:$0x3] %v65
  %s70 = scalar_lea.vmem %s0, 8
  %s71 = scalar_lea.vmem %s70, 3
  %v72 = vld [vmem:[%s71] ss:$0 sm:$0xff]
  %s73 = scalar_lea.vmem %s1, 22
  %74 = vst [vmem:[%s73] sm:$0x3] %v72
  %s75 = scalar_lea.vmem %s1, 54
  %76 = vst [vmem:[%s75] sm:$0x3] %v72
  %s77 = scalar_lea.vmem %s0, 8
  %s78 = scalar_lea.vmem %s77, 4
  %v79 = vld [vmem:[%s78] ss:$0 sm:$0xff]
  %s80 = scalar_lea.vmem %s1, 24
  %81 = vst [vmem:[%s80] sm:$0x3] %v79
  %s82 = scalar_lea.vmem %s1, 56
  %83 = vst [vmem:[%s82] sm:$0x3] %v79
  %s84 = scalar_lea.vmem %s0, 8
  %s85 = scalar_lea.vmem %s84, 5
  %v86 = vld [vmem:[%s85] ss:$0 sm:$0xff]
  %s87 = scalar_lea.vmem %s1, 26
  %88 = vst [vmem:[%s87] sm:$0x3] %v86
  %s89 = scalar_lea.vmem %s1, 58
  %90 = vst [vmem:[%s89] sm:$0x3] %v86
  %s91 = scalar_lea.vmem %s0, 8
  %s92 = scalar_lea.vmem %s91, 6
  %v93 = vld [vmem:[%s92] ss:$0 sm:$0xff]
  %s94 = scalar_lea.vmem %s1, 28
  %95 = vst [vmem:[%s94] sm:$0x3] %v93
  %s96 = scalar_lea.vmem %s1, 60
  %97 = vst [vmem:[%s96] sm:$0x3] %v93
  %s98 = scalar_lea.vmem %s0, 8
  %s99 = scalar_lea.vmem %s98, 7
  %v100 = vld [vmem:[%s99] ss:$0 sm:$0xff]
  %s101 = scalar_lea.vmem %s1, 30
  %102 = vst [vmem:[%s101] sm:$0x3] %v100
  %s103 = scalar_lea.vmem %s1, 62
  %104 = vst [vmem:[%s103] sm:$0x3] %v100

// kernel: tile.19
$region0: #{tile.19}
  %s0 = inlined_call_operand.vmem [shape: f32[2,16,2,32], index: 0, kind: input, shape index: {}]
  %s1 = inlined_call_operand.vmem [shape: f32[32,64], index: 1, kind: output, shape index: {}]
  $region1: #{tile.19} parent=0
    #allocation0 [shape = 'u8[131072]{0}', space=vmem, size = 0x20000, scoped, tag = 'scoped mem for input reshape']
    %s3 = sshll.u32 1, 2
    %s4 = ssub.s32 %s3, 1
    %s5 = smul.addr 2, 31
    %s6 = scalar_lea.vmem %s0, %s5
    %v7 = vld [vmem:[%s6] sm:%s4]
    %s8 = scalar_lea.vmem [#allocation0], 248
    %9 = vst [vmem:[%s8] sm:%s4] %v7
    %s10 = smul.addr 2, 30
    %s11 = scalar_lea.vmem %s0, %s10
    %v12 = vld [vmem:[%s11] sm:%s4]
    %s13 = scalar_lea.vmem [#allocation0], 240
    %14 = vst [vmem:[%s13] sm:%s4] %v12
    %s15 = smul.addr 2, 29
    %s16 = scalar_lea.vmem %s0, %s15
    %v17 = vld [vmem:[%s16] sm:%s4]
    %s18 = scalar_lea.vmem [#allocation0], 232
    %19 = vst [vmem:[%s18] sm:%s4] %v17
    %s20 = smul.addr 2, 28
    %s21 = scalar_lea.vmem %s0, %s20
    %v22 = vld [vmem:[%s21] sm:%s4]
    %s23 = scalar_lea.vmem [#allocation0], 224
    %24 = vst [vmem:[%s23] sm:%s4] %v22
    %s25 = smul.addr 2, 27
    %s26 = scalar_lea.vmem %s0, %s25
    %v27 = vld [vmem:[%s26] sm:%s4]
    %s28 = scalar_lea.vmem [#allocation0], 216
    %29 = vst [vmem:[%s28] sm:%s4] %v27
    %s30 = smul.addr 2, 26
    %s31 = scalar_lea.vmem %s0, %s30
    %v32 = vld [vmem:[%s31] sm:%s4]
    %s33 = scalar_lea.vmem [#allocation0], 208
    %34 = vst [vmem:[%s33] sm:%s4] %v32
    %s35 = smul.addr 2, 25
    %s36 = scalar_lea.vmem %s0, %s35
    %v37 = vld [vmem:[%s36] sm:%s4]
    %s38 = scalar_lea.vmem [#allocation0], 200
    %39 = vst [vmem:[%s38] sm:%s4] %v37
    %s40 = smul.addr 2, 24
    %s41 = scalar_lea.vmem %s0, %s40
    %v42 = vld [vmem:[%s41] sm:%s4]
    %s43 = scalar_lea.vmem [#allocation0], 192
    %44 = vst [vmem:[%s43] sm:%s4] %v42
    %s45 = smul.addr 2, 23
    %s46 = scalar_lea.vmem %s0, %s45
    %v47 = vld [vmem:[%s46] sm:%s4]
    %s48 = scalar_lea.vmem [#allocation0], 184
    %49 = vst [vmem:[%s48] sm:%s4] %v47
    %s50 = smul.addr 2, 22
    %s51 = scalar_lea.vmem %s0, %s50
    %v52 = vld [vmem:[%s51] sm:%s4]
    %s53 = scalar_lea.vmem [#allocation0], 176
    %54 = vst [vmem:[%s53] sm:%s4] %v52
    %s55 = smul.addr 2, 21
    %s56 = scalar_lea.vmem %s0, %s55
    %v57 = vld [vmem:[%s56] sm:%s4]
    %s58 = scalar_lea.vmem [#allocation0], 168
    %59 = vst [vmem:[%s58] sm:%s4] %v57
    %s60 = smul.addr 2, 20
    %s61 = scalar_lea.vmem %s0, %s60
    %v62 = vld [vmem:[%s61] sm:%s4]
    %s63 = scalar_lea.vmem [#allocation0], 160
    %64 = vst [vmem:[%s63] sm:%s4] %v62
    %s65 = smul.addr 2, 19
    %s66 = scalar_lea.vmem %s0, %s65
    %v67 = vld [vmem:[%s66] sm:%s4]
    %s68 = scalar_lea.vmem [#allocation0], 152
    %69 = vst [vmem:[%s68] sm:%s4] %v67
    %s70 = smul.addr 2, 18
    %s71 = scalar_lea.vmem %s0, %s70
    %v72 = vld [vmem:[%s71] sm:%s4]
    %s73 = scalar_lea.vmem [#allocation0], 144
    %74 = vst [vmem:[%s73] sm:%s4] %v72
    %s75 = smul.addr 2, 17
    %s76 = scalar_lea.vmem %s0, %s75
    %v77 = vld [vmem:[%s76] sm:%s4]
    %s78 = scalar_lea.vmem [#allocation0], 136
    %79 = vst [vmem:[%s78] sm:%s4] %v77
    %s80 = smul.addr 2, 16
    %s81 = scalar_lea.vmem %s0, %s80
    %v82 = vld [vmem:[%s81] sm:%s4]
    %s83 = scalar_lea.vmem [#allocation0], 128
    %84 = vst [vmem:[%s83] sm:%s4] %v82
    %s85 = smul.addr 2, 15
    %s86 = scalar_lea.vmem %s0, %s85
    %v87 = vld [vmem:[%s86] sm:%s4]
    %s88 = scalar_lea.vmem [#allocation0], 120
    %89 = vst [vmem:[%s88] sm:%s4] %v87
    %s90 = smul.addr 2, 14
    %s91 = scalar_lea.vmem %s0, %s90
    %v92 = vld [vmem:[%s91] sm:%s4]
    %s93 = scalar_lea.vmem [#allocation0], 112
    %94 = vst [vmem:[%s93] sm:%s4] %v92
    %s95 = smul.addr 2, 13
    %s96 = scalar_lea.vmem %s0, %s95
    %v97 = vld [vmem:[%s96] sm:%s4]
    %s98 = scalar_lea.vmem [#allocation0], 104
    %99 = vst [vmem:[%s98] sm:%s4] %v97
    %s100 = smul.addr 2, 12
    %s101 = scalar_lea.vmem %s0, %s100
    %v102 = vld [vmem:[%s101] sm:%s4]
    %s103 = scalar_lea.vmem [#allocation0], 96
    %104 = vst [vmem:[%s103] sm:%s4] %v102
    %s105 = smul.addr 2, 11
    %s106 = scalar_lea.vmem %s0, %s105
    %v107 = vld [vmem:[%s106] sm:%s4]
    %s108 = scalar_lea.vmem [#allocation0], 88
    %109 = vst [vmem:[%s108] sm:%s4] %v107
    %s110 = smul.addr 2, 10
    %s111 = scalar_lea.vmem %s0, %s110
    %v112 = vld [vmem:[%s111] sm:%s4]
    %s113 = scalar_lea.vmem [#allocation0], 80
    %114 = vst [vmem:[%s113] sm:%s4] %v112
    %s115 = smul.addr 2, 9
    %s116 = scalar_lea.vmem %s0, %s115
    %v117 = vld [vmem:[%s116] sm:%s4]
    %s118 = scalar_lea.vmem [#allocation0], 72
    %119 = vst [vmem:[%s118] sm:%s4] %v117
    %s120 = smul.addr 2, 8
    %s121 = scalar_lea.vmem %s0, %s120
    %v122 = vld [vmem:[%s121] sm:%s4]
    %s123 = scalar_lea.vmem [#allocation0], 64
    %124 = vst [vmem:[%s123] sm:%s4] %v122
    %s125 = smul.addr 2, 7
    %s126 = scalar_lea.vmem %s0, %s125
    %v127 = vld [vmem:[%s126] sm:%s4]
    %s128 = scalar_lea.vmem [#allocation0], 56
    %129 = vst [vmem:[%s128] sm:%s4] %v127
    %s130 = smul.addr 2, 6
    %s131 = scalar_lea.vmem %s0, %s130
    %v132 = vld [vmem:[%s131] sm:%s4]
    %s133 = scalar_lea.vmem [#allocation0], 48
    %134 = vst [vmem:[%s133] sm:%s4] %v132
    %s135 = smul.addr 2, 5
    %s136 = scalar_lea.vmem %s0, %s135
    %v137 = vld [vmem:[%s136] sm:%s4]
    %s138 = scalar_lea.vmem [#allocation0], 40
    %139 = vst [vmem:[%s138] sm:%s4] %v137
    %s140 = smul.addr 2, 4
    %s141 = scalar_lea.vmem %s0, %s140
    %v142 = vld [vmem:[%s141] sm:%s4]
    %s143 = scalar_lea.vmem [#allocation0], 32
    %144 = vst [vmem:[%s143] sm:%s4] %v142
    %s145 = smul.addr 2, 3
    %s146 = scalar_lea.vmem %s0, %s145
    %v147 = vld [vmem:[%s146] sm:%s4]
    %s148 = scalar_lea.vmem [#allocation0], 24
    %149 = vst [vmem:[%s148] sm:%s4] %v147
    %s150 = smul.addr 2, 2
    %s151 = scalar_lea.vmem %s0, %s150
    %v152 = vld [vmem:[%s151] sm:%s4]
    %s153 = scalar_lea.vmem [#allocation0], 16
    %154 = vst [vmem:[%s153] sm:%s4] %v152
    %s155 = scalar_lea.vmem %s0, 2
    %v156 = vld [vmem:[%s155] sm:%s4]
    %s157 = scalar_lea.vmem [#allocation0], 8
    %158 = vst [vmem:[%s157] sm:%s4] %v156
    %v159 = vld [vmem:[%s0] sm:%s4]
    %160 = vst [vmem:[#allocation0] sm:%s4] %v159
    %v161 = vld [vmem:[#allocation0] ss:$8 sm:$0xf]
    %v162 = vld [vmem:[#allocation0] ss:$8 sm:$0xf0]
    %vm163 = vcmask 1047556
    %v164 = vsel %vm163, %v162, %v161
    %vm165 = vcmask 261120
    %166 = vst.msk [vmem:[%s1] sm:$0xff] %vm165, %v164
    %s167 = scalar_lea.vmem [#allocation0], 64
    %v168 = vld [vmem:[%s167] ss:$8 sm:$0xf]
    %s169 = scalar_lea.vmem [#allocation0], 64
    %v170 = vld [vmem:[%s169] ss:$8 sm:$0xf0]
    %vm171 = vcmask 1047556
    %v172 = vsel %vm171, %v170, %v168
    %vm173 = vcmask 261120
    %s174 = scalar_lea.vmem %s1, 8
    %175 = vst.msk [vmem:[%s174] sm:$0xff] %vm173, %v172
    %s176 = scalar_lea.vmem [#allocation0], 128
    %v177 = vld [vmem:[%s176] ss:$8 sm:$0xf]
    %s178 = scalar_lea.vmem [#allocation0], 128
    %v179 = vld [vmem:[%s178] ss:$8 sm:$0xf0]
    %vm180 = vcmask 1047556
    %v181 = vsel %vm180, %v179, %v177
    %vm182 = vcmask 261120
    %s183 = scalar_lea.vmem %s1, 16
    %184 = vst.msk [vmem:[%s183] sm:$0xff] %vm182, %v181
    %s185 = scalar_lea.vmem [#allocation0], 192
    %v186 = vld [vmem:[%s185] ss:$8 sm:$0xf]
    %s187 = scalar_lea.vmem [#allocation0], 192
    %v188 = vld [vmem:[%s187] ss:$8 sm:$0xf0]
    %vm189 = vcmask 1047556
    %v190 = vsel %vm189, %v188, %v186
    %vm191 = vcmask 261120
    %s192 = scalar_lea.vmem %s1, 24
    %193 = vst.msk [vmem:[%s192] sm:$0xff] %vm191, %v190
    %s194 = scalar_lea.vmem [#allocation0], 1
    %v195 = vld [vmem:[%s194] ss:$8 sm:$0xf]
    %s196 = scalar_lea.vmem [#allocation0], 1
    %v197 = vld [vmem:[%s196] ss:$8 sm:$0xf0]
    %vm198 = vcmask 1047556
    %v199 = vsel %vm198, %v197, %v195
    %200 = vrot.lane.b32.xlu0 %v199, 32
    %v201 = vpop.permute.xlu0 %200
    %vm202 = vcmask 523520
    %203 = vst.msk [vmem:[%s1] sm:$0xff] %vm202, %v201
    %s204 = scalar_lea.vmem [#allocation0], 65
    %v205 = vld [vmem:[%s204] ss:$8 sm:$0xf]
    %s206 = scalar_lea.vmem [#allocation0], 65
    %v207 = vld [vmem:[%s206] ss:$8 sm:$0xf0]
    %vm208 = vcmask 1047556
    %v209 = vsel %vm208, %v207, %v205
    %210 = vrot.lane.b32.xlu0 %v209, 32
    %v211 = vpop.permute.xlu0 %210
    %vm212 = vcmask 523520
    %s213 = scalar_lea.vmem %s1, 8
    %214 = vst.msk [vmem:[%s213] sm:$0xff] %vm212, %v211
    %s215 = scalar_lea.vmem [#allocation0], 129
    %v216 = vld [vmem:[%s215] ss:$8 sm:$0xf]
    %s217 = scalar_lea.vmem [#allocation0], 129
    %v218 = vld [vmem:[%s217] ss:$8 sm:$0xf0]
    %vm219 = vcmask 1047556
    %v220 = vsel %vm219, %v218, %v216
    %221 = vrot.lane.b32.xlu0 %v220, 32
    %v222 = vpop.permute.xlu0 %221
    %vm223 = vcmask 523520
    %s224 = scalar_lea.vmem %s1, 16
    %225 = vst.msk [vmem:[%s224] sm:$0xff] %vm223, %v222
    %s226 = scalar_lea.vmem [#allocation0], 193
    %v227 = vld [vmem:[%s226] ss:$8 sm:$0xf]
    %s228 = scalar_lea.vmem [#allocation0], 193
    %v229 = vld [vmem:[%s228] ss:$8 sm:$0xf0]
    %vm230 = vcmask 1047556
    %v231 = vsel %vm230, %v229, %v227
    %232 = vrot.lane.b32.xlu0 %v231, 32
    %v233 = vpop.permute.xlu0 %232
    %vm234 = vcmask 523520
    %s235 = scalar_lea.vmem %s1, 24
    %236 = vst.msk [vmem:[%s235] sm:$0xff] %vm234, %v233

// kernel: _lambda_.1
$region0: #{_lambda_.1}
  #allocation0 [shape = 'u32[]', space=smem, size = 0x4, offset = 0x4, fixed_abs, tag = 'smem constant byte address 0x4 - core index']
  #allocation1 [shape = 'u32[144,128]{1,0:T(1,128)}', space=vmem, size = 0x12000, scoped, tag = 'internal scratch']
  %s0 = inlined_call_operand.vmem [shape: f32[32,32], index: 0, kind: input, shape index: {}]
  %s1 = inlined_call_operand.vmem [shape: f32[32,64], index: 1, kind: input, shape index: {}]
  %s2 = inlined_call_operand.vmem [shape: f32[32,256], index: 2, kind: input, shape index: {}]
  %s3 = inlined_call_operand.vmem [shape: f32[96,32], index: 3, kind: input, shape index: {}]
  %s4 = inlined_call_operand.hbm [shape: f32[32,64], index: 4, kind: input, shape index: {}]
  %s5 = inlined_call_operand.vmem [shape: f32[1,64], index: 5, kind: input, shape index: {}]
  %s6 = inlined_call_operand.vmem [shape: f32[2,1,64], index: 6, kind: input, shape index: {}]
  %s7 = inlined_call_operand.vmem [shape: f32[2,1,64], index: 7, kind: input, shape index: {}]
  %s8 = inlined_call_operand.vmem [shape: f32[2,64,640], index: 8, kind: input, shape index: {}]
  %s9 = inlined_call_operand.vmem [shape: f32[2,64,64], index: 9, kind: input, shape index: {}]
  %s10 = inlined_call_operand.vmem [shape: f32[2,64,256], index: 10, kind: input, shape index: {}]
  %s11 = inlined_call_operand.vmem [shape: f32[2,96,64], index: 11, kind: input, shape index: {}]
  %s12 = inlined_call_operand.vmem [shape: f32[32,64], index: 12, kind: input, shape index: {}]
  %s13 = inlined_call_operand.vmem [shape: f32[32,64], index: 13, kind: input, shape index: {}]
  %s14 = inlined_call_operand.vmem [shape: f32[32,32], index: 14, kind: input, shape index: {}]
  %s15 = inlined_call_operand.vmem [shape: f32[8,64], index: 15, kind: input, shape index: {}]
  %s16 = inlined_call_operand.vmem [shape: f32[64,64], index: 16, kind: input, shape index: {}]
  %s17 = inlined_call_operand.vmem [shape: f32[1,64], index: 17, kind: input, shape index: {}]
  %s18 = inlined_call_operand.vmem [shape: f32[64,256], index: 18, kind: input, shape index: {}]
  %s19 = inlined_call_operand.vmem [shape: f32[1,256], index: 19, kind: input, shape index: {}]
  %s20 = inlined_call_operand.vmem [shape: f32[64,64], index: 20, kind: input, shape index: {}]
  %s21 = inlined_call_operand.hbm [shape: f32[1,64], index: 21, kind: input, shape index: {}]
  %s22 = inlined_call_operand.hbm [shape: f32[1,64], index: 22, kind: input, shape index: {}]
  %s23 = inlined_call_operand.vmem [shape: f32[64,512], index: 23, kind: input, shape index: {}]
  %s24 = inlined_call_operand.vmem [shape: f32[192,64], index: 24, kind: input, shape index: {}]
  %s25 = inlined_call_operand.hbm [shape: f32[1,64], index: 25, kind: input, shape index: {}]
  %s26 = inlined_call_operand.vmem [shape: f32[8,32], index: 26, kind: input, shape index: {}]
  %s27 = inlined_call_operand.hbm [shape: f32[8,64], index: 27, kind: output, shape index: {}]
  %s28 = sld [smem:[#allocation0]]
  $region134: #{_lambda_.1} parent=0
    _
  %s30 = ssub.s32 1, %s28
  %s31 = scalar_select 0, %s30, %s28
  $region1: #{_lambda_.1} parent=0
    #allocation2 [shape = 'u8[16384]{0}', space=vmem, size = 0x4000, scoped, tag = 'input window, operand 4, single buffered']
    #allocation3 [shape = 's32[1]{0}', space=sflag, size = 0x4, scoped, tag = 'scoped memory for _lambda_.1']
    #allocation4 [shape = 's32[1]{0}', space=sflag, size = 0x4, scoped, tag = 'scoped memory for _lambda_.1']
    #allocation5 [shape = 'u8[512]{0}', space=vmem, size = 0x400, scoped, tag = 'input window, operand 21, single buffered']
    #allocation6 [shape = 's32[1]{0}', space=sflag, size = 0x4, scoped, tag = 'scoped memory for _lambda_.1']
    #allocation7 [shape = 'u8[512]{0}', space=vmem, size = 0x400, scoped, tag = 'input window, operand 22, single buffered']
    #allocation8 [shape = 'u8[512]{0}', space=vmem, size = 0x400, scoped, tag = 'input window, operand 25, single buffered']
    #allocation9 [shape = 's32[1]{0}', space=sflag, size = 0x4, scoped, tag = 'scoped memory for _lambda_.1']
    #allocation10 [shape = 'u8[4096]{0}', space=vmem, size = 0x1000, scoped, tag = 'output window, operand 0, single buffered']
    %32 = vsyncpa [#allocation3], 0
    %33 = vsyncpa [#allocation6], 0
    %34 = vsyncpa [#allocation9], 0
    %35 = vsyncpa [#allocation4], 0
    // Predicated region
    $region2: #{_lambda_.1} parent=1 // pred_check
      _
    $region3: #{_lambda_.1} parent=1 // pred_check_branch
      %37 = sbr.rel (0) target = $region5
    $region4: #{_lambda_.1} parent=1 // pred_region
      _
    $region5: #{_lambda_.1} parent=1 // pred_fallthru
      _
    // Predicated region
    $region6: #{_lambda_.1} parent=1 // pred_check
      _
    $region7: #{_lambda_.1} parent=1 // pred_check_branch
      %39 = sbr.rel (0) target = $region9
    $region8: #{_lambda_.1} parent=1 // pred_region
      _
    $region9: #{_lambda_.1} parent=1 // pred_fallthru
      _
    // Predicated region
    $region10: #{_lambda_.1} parent=1 // pred_check
      _
    $region11: #{_lambda_.1} parent=1 // pred_check_branch
      %41 = sbr.rel (0) target = $region13
    $region12: #{_lambda_.1} parent=1 // pred_region
      _
    $region13: #{_lambda_.1} parent=1 // pred_fallthru
      _
    // Predicated region
    $region14: #{_lambda_.1} parent=1 // pred_check
      _
    $region15: #{_lambda_.1} parent=1 // pred_check_branch
      %43 = sbr.rel (0) target = $region17
    $region16: #{_lambda_.1} parent=1 // pred_region
      _
    $region17: #{_lambda_.1} parent=1 // pred_fallthru
      _
    // Predicated region
    $region18: #{_lambda_.1} parent=1 // pred_check
      _
    $region19: #{_lambda_.1} parent=1 // pred_check_branch
      %45 = sbr.rel (0) target = $region21
    $region20: #{_lambda_.1} parent=1 // pred_region
      %s47 = ssub.s32 512, 512
      %48 = vsyncadd [#allocation3], %s47
      %s49 = sshll.u32 [#allocation2], 4
      %s50 = int_to_ptr.vmem [resolvable:$true] %s49
      %55 = dma.hbm_to_vmem [thread:$0]  %s4, 512, %s50, [#allocation3], 128, 128, 8
    $region21: #{_lambda_.1} parent=1 // pred_fallthru
      _
    // Predicated region
    $region22: #{_lambda_.1} parent=1 // pred_check
      _
    $region23: #{_lambda_.1} parent=1 // pred_check_branch
      %57 = sbr.rel (0) target = $region25
    $region24: #{_lambda_.1} parent=1 // pred_region
      _
    $region25: #{_lambda_.1} parent=1 // pred_fallthru
      _
    // Predicated region
    $region26: #{_lambda_.1} parent=1 // pred_check
      _
    $region27: #{_lambda_.1} parent=1 // pred_check_branch
      %59 = sbr.rel (0) target = $region29
    $region28: #{_lambda_.1} parent=1 // pred_region
      _
    $region29: #{_lambda_.1} parent=1 // pred_fallthru
      _
    // Predicated region
    $region30: #{_lambda_.1} parent=1 // pred_check
      _
    $region31: #{_lambda_.1} parent=1 // pred_check_branch
      %61 = sbr.rel (0) target = $region33
    $region32: #{_lambda_.1} parent=1 // pred_region
      _
    $region33: #{_lambda_.1} parent=1 // pred_fallthru
      _
    // Predicated region
    $region34: #{_lambda_.1} parent=1 // pred_check
      _
    $region35: #{_lambda_.1} parent=1 // pred_check_branch
      %63 = sbr.rel (0) target = $region37
    $region36: #{_lambda_.1} parent=1 // pred_region
      _
    $region37: #{_lambda_.1} parent=1 // pred_fallthru
      _
    // Predicated region
    $region38: #{_lambda_.1} parent=1 // pred_check
      _
    $region39: #{_lambda_.1} parent=1 // pred_check_branch
      %65 = sbr.rel (0) target = $region41
    $region40: #{_lambda_.1} parent=1 // pred_region
      _
    $region41: #{_lambda_.1} parent=1 // pred_fallthru
      _
    // Predicated region
    $region42: #{_lambda_.1} parent=1 // pred_check
      _
    $region43: #{_lambda_.1} parent=1 // pred_check_branch
      %67 = sbr.rel (0) target = $region45
    $region44: #{_lambda_.1} parent=1 // pred_region
      _
    $region45: #{_lambda_.1} parent=1 // pred_fallthru
      _
    // Predicated region
    $region46: #{_lambda_.1} parent=1 // pred_check
      _
    $region47: #{_lambda_.1} parent=1 // pred_check_branch
      %69 = sbr.rel (0) target = $region49
    $region48: #{_lambda_.1} parent=1 // pred_region
      _
    $region49: #{_lambda_.1} parent=1 // pred_fallthru
      _
    // Predicated region
    $region50: #{_lambda_.1} parent=1 // pred_check
      _
    $region51: #{_lambda_.1} parent=1 // pred_check_branch
      %71 = sbr.rel (0) target = $region53
    $region52: #{_lambda_.1} parent=1 // pred_region
      _
    $region53: #{_lambda_.1} parent=1 // pred_fallthru
      _
    // Predicated region
    $region54: #{_lambda_.1} parent=1 // pred_check
      _
    $region55: #{_lambda_.1} parent=1 // pred_check_branch
      %73 = sbr.rel (0) target = $region57
    $region56: #{_lambda_.1} parent=1 // pred_region
      _
    $region57: #{_lambda_.1} parent=1 // pred_fallthru
      _
    // Predicated region
    $region58: #{_lambda_.1} parent=1 // pred_check
      _
    $region59: #{_lambda_.1} parent=1 // pred_check_branch
      %75 = sbr.rel (0) target = $region61
    $region60: #{_lambda_.1} parent=1 // pred_region
      _
    $region61: #{_lambda_.1} parent=1 // pred_fallthru
      _
    // Predicated region
    $region62: #{_lambda_.1} parent=1 // pred_check
      _
    $region63: #{_lambda_.1} parent=1 // pred_check_branch
      %77 = sbr.rel (0) target = $region65
    $region64: #{_lambda_.1} parent=1 // pred_region
      _
    $region65: #{_lambda_.1} parent=1 // pred_fallthru
      _
    // Predicated region
    $region66: #{_lambda_.1} parent=1 // pred_check
      _
    $region67: #{_lambda_.1} parent=1 // pred_check_branch
      %79 = sbr.rel (0) target = $region69
    $region68: #{_lambda_.1} parent=1 // pred_region
      _
    $region69: #{_lambda_.1} parent=1 // pred_fallthru
      _
    // Predicated region
    $region70: #{_lambda_.1} parent=1 // pred_check
      _
    $region71: #{_lambda_.1} parent=1 // pred_check_branch
      %81 = sbr.rel (0) target = $region73
    $region72: #{_lambda_.1} parent=1 // pred_region
      _
    $region73: #{_lambda_.1} parent=1 // pred_fallthru
      _
    // Predicated region
    $region74: #{_lambda_.1} parent=1 // pred_check
      _
    $region75: #{_lambda_.1} parent=1 // pred_check_branch
      %83 = sbr.rel (0) target = $region77
    $region76: #{_lambda_.1} parent=1 // pred_region
      _
    $region77: #{_lambda_.1} parent=1 // pred_fallthru
      _
    // Predicated region
    $region78: #{_lambda_.1} parent=1 // pred_check
      _
    $region79: #{_lambda_.1} parent=1 // pred_check_branch
      %85 = sbr.rel (0) target = $region81
    $region80: #{_lambda_.1} parent=1 // pred_region
      _
    $region81: #{_lambda_.1} parent=1 // pred_fallthru
      _
    // Predicated region
    $region82: #{_lambda_.1} parent=1 // pred_check
      _
    $region83: #{_lambda_.1} parent=1 // pred_check_branch
      %87 = sbr.rel (0) target = $region85
    $region84: #{_lambda_.1} parent=1 // pred_region
      _
    $region85: #{_lambda_.1} parent=1 // pred_fallthru
      _
    // Predicated region
    $region86: #{_lambda_.1} parent=1 // pred_check
      _
    $region87: #{_lambda_.1} parent=1 // pred_check_branch
      %89 = sbr.rel (0) target = $region89
    $region88: #{_lambda_.1} parent=1 // pred_region
      %s91 = ssub.s32 16, 16
      %92 = vsyncadd [#allocation6], %s91
      %s94 = sshll.u32 [#allocation5], 4
      %s95 = int_to_ptr.vmem [resolvable:$true] %s94
      %97 = dma.hbm_to_vmem [thread:$0]  %s21, 16, %s95, [#allocation6]
    $region89: #{_lambda_.1} parent=1 // pred_fallthru
      _
    // Predicated region
    $region90: #{_lambda_.1} parent=1 // pred_check
      _
    $region91: #{_lambda_.1} parent=1 // pred_check_branch
      %99 = sbr.rel (0) target = $region93
    $region92: #{_lambda_.1} parent=1 // pred_region
      %s101 = ssub.s32 16, 16
      %102 = vsyncadd [#allocation6], %s101
      %s104 = sshll.u32 [#allocation7], 4
      %s105 = int_to_ptr.vmem [resolvable:$true] %s104
      %107 = dma.hbm_to_vmem [thread:$0]  %s22, 16, %s105, [#allocation6]
    $region93: #{_lambda_.1} parent=1 // pred_fallthru
      _
    // Predicated region
    $region94: #{_lambda_.1} parent=1 // pred_check
      _
    $region95: #{_lambda_.1} parent=1 // pred_check_branch
      %109 = sbr.rel (0) target = $region97
    $region96: #{_lambda_.1} parent=1 // pred_region
      _
    $region97: #{_lambda_.1} parent=1 // pred_fallthru
      _
    // Predicated region
    $region98: #{_lambda_.1} parent=1 // pred_check
      _
    $region99: #{_lambda_.1} parent=1 // pred_check_branch
      %111 = sbr.rel (0) target = $region101
    $region100: #{_lambda_.1} parent=1 // pred_region
      _
    $region101: #{_lambda_.1} parent=1 // pred_fallthru
      _
    // Predicated region
    $region102: #{_lambda_.1} parent=1 // pred_check
      _
    $region103: #{_lambda_.1} parent=1 // pred_check_branch
      %113 = sbr.rel (0) target = $region105
    $region104: #{_lambda_.1} parent=1 // pred_region
      %s115 = ssub.s32 16, 16
      %116 = vsyncadd [#allocation9], %s115
      %s118 = sshll.u32 [#allocation8], 4
      %s119 = int_to_ptr.vmem [resolvable:$true] %s118
      %121 = dma.hbm_to_vmem [thread:$0]  %s25, 16, %s119, [#allocation9]
    $region105: #{_lambda_.1} parent=1 // pred_fallthru
      _
    // Predicated region
    $region106: #{_lambda_.1} parent=1 // pred_check
      _
    $region107: #{_lambda_.1} parent=1 // pred_check_branch
      %123 = sbr.rel (0) target = $region109
    $region108: #{_lambda_.1} parent=1 // pred_region
      _
    $region109: #{_lambda_.1} parent=1 // pred_fallthru
      _
    // Predicated region
    $region110: #{_lambda_.1} parent=1 // pred_check
      _
    $region111: #{_lambda_.1} parent=1 // pred_check_branch
      %125 = sbr.rel (0) target = $region113
    $region112: #{_lambda_.1} parent=1 // pred_region
      %126 = dma.done [#allocation3], 512
    $region113: #{_lambda_.1} parent=1 // pred_fallthru
      _
    // Predicated region
    $region114: #{_lambda_.1} parent=1 // pred_check
      _
    $region115: #{_lambda_.1} parent=1 // pred_check_branch
      %128 = sbr.rel (0) target = $region117
    $region116: #{_lambda_.1} parent=1 // pred_region
      %129 = dma.done [#allocation6], 16
    $region117: #{_lambda_.1} parent=1 // pred_fallthru
      _
    // Predicated region
    $region118: #{_lambda_.1} parent=1 // pred_check
      _
    $region119: #{_lambda_.1} parent=1 // pred_check_branch
      %131 = sbr.rel (0) target = $region121
    $region120: #{_lambda_.1} parent=1 // pred_region
      %132 = dma.done [#allocation6], 16
    $region121: #{_lambda_.1} parent=1 // pred_fallthru
      _
    // Predicated region
    $region122: #{_lambda_.1} parent=1 // pred_check
      _
    $region123: #{_lambda_.1} parent=1 // pred_check_branch
      %134 = sbr.rel (0) target = $region125
    $region124: #{_lambda_.1} parent=1 // pred_region
      %135 = dma.done [#allocation9], 16
    $region125: #{_lambda_.1} parent=1 // pred_fallthru
      _
    %v136 = vld [vmem:[%s0] sm:$0xff]
    %v137 = vld [vmem:[%s0 + $0x8] sm:$0xff]
    %v138 = vld [vmem:[%s0 + $0x10] sm:$0xff]
    %v139 = vld [vmem:[%s0 + $0x18] sm:$0xff]
    %v140 = vld [vmem:[%s2] sm:$0xff]
    %v141 = vld [vmem:[%s2 + $0x8] sm:$0xff]
    %v142 = vld [vmem:[%s2 + $0x10] sm:$0xff]
    %v143 = vld [vmem:[%s2 + $0x18] sm:$0xff]
    %v144 = vld [vmem:[%s2 + $0x20] sm:$0xff]
    %v145 = vld [vmem:[%s2 + $0x28] sm:$0xff]
    %v146 = vld [vmem:[%s2 + $0x30] sm:$0xff]
    %v147 = vld [vmem:[%s2 + $0x38] sm:$0xff]
    %v148 = vld [vmem:[%s3] sm:$0xff]
    %v149 = vld [vmem:[%s3 + $0x8] sm:$0xff]
    %v150 = vld [vmem:[%s3 + $0x10] sm:$0xff]
    %v151 = vld [vmem:[%s3 + $0x18] sm:$0xff]
    %v152 = vld [vmem:[%s3 + $0x20] sm:$0xff]
    %v153 = vld [vmem:[%s3 + $0x28] sm:$0xff]
    %v154 = vld [vmem:[%s3 + $0x30] sm:$0xff]
    %v155 = vld [vmem:[%s3 + $0x38] sm:$0xff]
    %v156 = vld [vmem:[%s3 + $0x40] sm:$0xff]
    %v157 = vld [vmem:[%s3 + $0x48] sm:$0xff]
    %v158 = vld [vmem:[%s3 + $0x50] sm:$0xff]
    %v159 = vld [vmem:[%s3 + $0x58] sm:$0xff]
    %vm160 = vcmask 261120
    %v162 = vsel %vm160, %v136, 0
    %v165 = vsel %vm160, %v137, 0
    %v168 = vsel %vm160, %v138, 0
    %v171 = vsel %vm160, %v139, 0
    %173 = vmatprep.subr.mxu0 0.0
    %174 = vmatpush1.msra.mxu0 0.0
    %175 = vmatprep.subr.mxu0 0.0
    %176 = vmatpush1.msra.mxu0 0.0
    %177 = vmatprep.subr.mxu0 0.0
    %178 = vmatpush1.msra.mxu0 0.0
    %179 = vmatprep.subr.mxu0 0.0
    %180 = vmatpush1.msra.mxu0 0.0
    %181 = vmatprep.subr.mxu0 0.0
    %182 = vmatpush1.msra.mxu0 0.0
    %183 = vmatprep.subr.mxu0 0.0
    %184 = vmatpush1.msra.mxu0 0.0
    %185 = vmatprep.subr.mxu0 0.0
    %186 = vmatpush1.msra.mxu0 0.0
    %187 = vmatprep.subr.mxu0 0.0
    %188 = vmatpush1.msra.mxu0 0.0
    %189 = vmatprep.subr.mxu0 0.0
    %190 = vmatpush1.msra.mxu0 0.0
    %191 = vmatprep.subr.mxu0 0.0
    %192 = vmatpush1.msra.mxu0 0.0
    %193 = vmatprep.subr.mxu0 0.0
    %194 = vmatpush1.msra.mxu0 0.0
    %195 = vmatprep.subr.mxu0 0.0
    %196 = vmatpush1.msra.mxu0 0.0
    %197 = vmatprep.subr.mxu0 %v147
    %198 = vmatpush1.msra.mxu0 %v146
    %199 = vmatprep.subr.mxu0 %v145
    %200 = vmatpush1.msra.mxu0 %v144
    %201 = vmatprep.subr.mxu0 %v143
    %202 = vmatpush1.msra.mxu0 %v142
    %203 = vmatprep.subr.mxu0 %v141
    %204 = vmatpush1.msra.mxu0 %v140
    %205 = vmatprep.subr.mxu0 0.0
    %206 = vmatpush2.msra.mxu0 0.0
    %207 = vmatprep.subr.mxu0 0.0
    %208 = vmatpush2.msra.mxu0 0.0
    %209 = vmatprep.subr.mxu0 0.0
    %210 = vmatpush2.msra.mxu0 0.0
    %211 = vmatprep.subr.mxu0 0.0
    %212 = vmatpush2.msra.mxu0 0.0
    %213 = vmatprep.subr.mxu0 0.0
    %214 = vmatpush2.msra.mxu0 0.0
    %215 = vmatprep.subr.mxu0 0.0
    %216 = vmatpush2.msra.mxu0 0.0
    %217 = vmatprep.subr.mxu0 0.0
    %218 = vmatpush2.msra.mxu0 0.0
    %219 = vmatprep.subr.mxu0 0.0
    %220 = vmatpush2.msra.mxu0 0.0
    %221 = vmatprep.subr.mxu0 0.0
    %222 = vmatpush2.msra.mxu0 0.0
    %223 = vmatprep.subr.mxu0 0.0
    %224 = vmatpush2.msra.mxu0 0.0
    %225 = vmatprep.subr.mxu0 0.0
    %226 = vmatpush2.msra.mxu0 0.0
    %227 = vmatprep.subr.mxu0 0.0
    %228 = vmatpush2.msra.mxu0 0.0
    %229 = vmatprep.subr.mxu0 0.0
    %230 = vmatpush2.msra.mxu0 0.0
    %231 = vmatprep.subr.mxu0 0.0
    %232 = vmatpush2.msra.mxu0 0.0
    %233 = vmatprep.subr.mxu0 0.0
    %234 = vmatpush2.msra.mxu0 0.0
    %235 = vmatprep.subr.mxu0 0.0
    %236 = vmatpush2.msra.mxu0 0.0
    %237 = vmatprep.mubr.f32.mxu0 0.0
    %238 = vmatmul.mubr.f32.gmra.mxu0 %v162
    %v239 = vpop.f32.mrf.mxu0
    %v240 = vadd.f32 0.0, %v239
    %v241 = vpop.f32.mrf.mxu0
    %v242 = vadd.f32 0.0, %v241
    %243 = vmatprep.mubr.f32.mxu0 0.0
    %244 = vmatmul.mubr.f32.gmra.mxu0 %v165
    %v245 = vpop.f32.mrf.mxu0
    %v246 = vadd.f32 0.0, %v245
    %v247 = vpop.f32.mrf.mxu0
    %v248 = vadd.f32 0.0, %v247
    %249 = vmatprep.mubr.f32.mxu0 0.0
    %250 = vmatmul.mubr.f32.gmra.mxu0 %v168
    %v251 = vpop.f32.mrf.mxu0
    %v252 = vadd.f32 0.0, %v251
    %v253 = vpop.f32.mrf.mxu0
    %v254 = vadd.f32 0.0, %v253
    %255 = vmatprep.mubr.f32.mxu0 0.0
    %256 = vmatmul.mubr.f32.gmra.mxu0 %v171
    %v257 = vpop.f32.mrf.mxu0
    %v258 = vadd.f32 0.0, %v257
    %v259 = vpop.f32.mrf.mxu0
    %v260 = vadd.f32 0.0, %v259
    %261 = vdwg.mxu0
    %v262 = vxor.u32 %v240, 2147483648
    %v263 = vxor.u32 %v246, 2147483648
    %v264 = vxor.u32 %v252, 2147483648
    %v265 = vxor.u32 %v258, 2147483648
    %v266 = vmul.f32 %v262, 1.442695
    %v267 = vpow.pop %v266
    %v268 = vmul.f32 %v263, 1.442695
    %v269 = vpow.pop %v268
    %v270 = vmul.f32 %v264, 1.442695
    %v271 = vpow.pop %v270
    %v272 = vmul.f32 %v265, 1.442695
    %v273 = vpow.pop %v272
    %v274 = vadd.f32 %v267, 1.0
    %v275 = vadd.f32 %v269, 1.0
    %v276 = vadd.f32 %v271, 1.0
    %v277 = vadd.f32 %v273, 1.0
    %v278 = vrcp.pop %v274
    %v279 = vmul.f32 1.0, %v278
    %v280 = vrcp.pop %v275
    %v281 = vmul.f32 1.0, %v280
    %v282 = vrcp.pop %v276
    %v283 = vmul.f32 1.0, %v282
    %v284 = vrcp.pop %v277
    %v285 = vmul.f32 1.0, %v284
    %v286 = vmul.f32 %v240, %v279
    %v287 = vmul.f32 %v246, %v281
    %v288 = vmul.f32 %v252, %v283
    %v289 = vmul.f32 %v258, %v285
    %v290 = vmul.f32 %v286, %v242
    %v291 = vmul.f32 %v287, %v248
    %v292 = vmul.f32 %v288, %v254
    %v293 = vmul.f32 %v289, %v260
    %vm294 = vcmask 785408
    %v296 = vsel %vm294, %v290, 0
    %v299 = vsel %vm294, %v291, 0
    %v302 = vsel %vm294, %v292, 0
    %v305 = vsel %vm294, %v293, 0
    %307 = vmatprep.subr.mxu0 0.0
    %308 = vmatpush1.msra.mxu0 0.0
    %309 = vmatprep.subr.mxu0 0.0
    %310 = vmatpush1.msra.mxu0 0.0
    %311 = vmatprep.subr.mxu0 0.0
    %312 = vmatpush1.msra.mxu0 0.0
    %313 = vmatprep.subr.mxu0 0.0
    %314 = vmatpush1.msra.mxu0 0.0
    %315 = vmatprep.subr.mxu0 0.0
    %316 = vmatpush1.msra.mxu0 %v159
    %317 = vmatprep.subr.mxu0 0.0
    %318 = vmatpush1.msra.mxu0 %v158
    %319 = vmatprep.subr.mxu0 0.0
    %320 = vmatpush1.msra.mxu0 %v157
    %321 = vmatprep.subr.mxu0 0.0
    %322 = vmatpush1.msra.mxu0 %v156
    %323 = vmatprep.subr.mxu0 0.0
    %324 = vmatpush1.msra.mxu0 %v155
    %325 = vmatprep.subr.mxu0 0.0
    %326 = vmatpush1.msra.mxu0 %v154
    %327 = vmatprep.subr.mxu0 0.0
    %328 = vmatpush1.msra.mxu0 %v153
    %329 = vmatprep.subr.mxu0 0.0
    %330 = vmatpush1.msra.mxu0 %v152
    %331 = vmatprep.subr.mxu0 0.0
    %332 = vmatpush1.msra.mxu0 %v151
    %333 = vmatprep.subr.mxu0 0.0
    %334 = vmatpush1.msra.mxu0 %v150
    %335 = vmatprep.subr.mxu0 0.0
    %336 = vmatpush1.msra.mxu0 %v149
    %337 = vmatprep.subr.mxu0 0.0
    %338 = vmatpush1.msra.mxu0 %v148
    %339 = vmatprep.subr.mxu0 0.0
    %340 = vmatpush2.msra.mxu0 0.0
    %341 = vmatprep.subr.mxu0 0.0
    %342 = vmatpush2.msra.mxu0 0.0
    %343 = vmatprep.subr.mxu0 0.0
    %344 = vmatpush2.msra.mxu0 0.0
    %345 = vmatprep.subr.mxu0 0.0
    %346 = vmatpush2.msra.mxu0 0.0
    %347 = vmatprep.subr.mxu0 0.0
    %348 = vmatpush2.msra.mxu0 0.0
    %349 = vmatprep.subr.mxu0 0.0
    %350 = vmatpush2.msra.mxu0 0.0
    %351 = vmatprep.subr.mxu0 0.0
    %352 = vmatpush2.msra.mxu0 0.0
    %353 = vmatprep.subr.mxu0 0.0
    %354 = vmatpush2.msra.mxu0 0.0
    %355 = vmatprep.subr.mxu0 0.0
    %356 = vmatpush2.msra.mxu0 0.0
    %357 = vmatprep.subr.mxu0 0.0
    %358 = vmatpush2.msra.mxu0 0.0
    %359 = vmatprep.subr.mxu0 0.0
    %360 = vmatpush2.msra.mxu0 0.0
    %361 = vmatprep.subr.mxu0 0.0
    %362 = vmatpush2.msra.mxu0 0.0
    %363 = vmatprep.subr.mxu0 0.0
    %364 = vmatpush2.msra.mxu0 0.0
    %365 = vmatprep.subr.mxu0 0.0
    %366 = vmatpush2.msra.mxu0 0.0
    %367 = vmatprep.subr.mxu0 0.0
    %368 = vmatpush2.msra.mxu0 0.0
    %369 = vmatprep.subr.mxu0 0.0
    %370 = vmatpush2.msra.mxu0 0.0
    %371 = vmatprep.mubr.f32.mxu0 0.0
    %372 = vmatmul.mubr.f32.gmra.mxu0 %v296
    %v373 = vpop.f32.mrf.mxu0
    %v374 = vadd.f32 0.0, %v373
    %v375 = vpop.f32.mrf.mxu0
    %376 = vmatprep.mubr.f32.mxu0 0.0
    %377 = vmatmul.mubr.f32.gmra.mxu0 %v299
    %v378 = vpop.f32.mrf.mxu0
    %v379 = vadd.f32 0.0, %v378
    %v380 = vpop.f32.mrf.mxu0
    %381 = vmatprep.mubr.f32.mxu0 0.0
    %382 = vmatmul.mubr.f32.gmra.mxu0 %v302
    %v383 = vpop.f32.mrf.mxu0
    %v384 = vadd.f32 0.0, %v383
    %v385 = vpop.f32.mrf.mxu0
    %386 = vmatprep.mubr.f32.mxu0 0.0
    %387 = vmatmul.mubr.f32.gmra.mxu0 %v305
    %v388 = vpop.f32.mrf.mxu0
    %v389 = vadd.f32 0.0, %v388
    %v390 = vpop.f32.mrf.mxu0
    %391 = vdwg.mxu0
    %v392 = vld [vmem:[#allocation2] sm:$0xff]
    %v393 = vld [vmem:[#allocation2 + $0x8] sm:$0xff]
    %v394 = vld [vmem:[#allocation2 + $0x10] sm:$0xff]
    %v395 = vld [vmem:[#allocation2 + $0x18] sm:$0xff]
    %v396 = vld [vmem:[%s5] sm:$0x1]
    %v398 = vlaneseq
    %v399 = vshrl.u32 %v398, 7
    %v400 = vsub.s32 0, %v399
    %v401 = vrot.slane %v396, %v400
    %v404 = vsel %vm160, %v374, 0
    %v407 = vsel %vm160, %v379, 0
    %v410 = vsel %vm160, %v384, 0
    %v413 = vsel %vm160, %v389, 0
    %415 = vmatprep.subr.mxu0 0.0
    %416 = vmatpush1.msra.mxu0 0.0
    %417 = vmatprep.subr.mxu0 0.0
    %418 = vmatpush1.msra.mxu0 0.0
    %419 = vmatprep.subr.mxu0 0.0
    %420 = vmatpush1.msra.mxu0 0.0
    %421 = vmatprep.subr.mxu0 0.0
    %422 = vmatpush1.msra.mxu0 0.0
    %423 = vmatprep.subr.mxu0 0.0
    %424 = vmatpush1.msra.mxu0 0.0
    %425 = vmatprep.subr.mxu0 0.0
    %426 = vmatpush1.msra.mxu0 0.0
    %427 = vmatprep.subr.mxu0 0.0
    %428 = vmatpush1.msra.mxu0 0.0
    %429 = vmatprep.subr.mxu0 0.0
    %430 = vmatpush1.msra.mxu0 0.0
    %431 = vmatprep.subr.mxu0 0.0
    %432 = vmatpush1.msra.mxu0 0.0
    %433 = vmatprep.subr.mxu0 0.0
    %434 = vmatpush1.msra.mxu0 0.0
    %435 = vmatprep.subr.mxu0 0.0
    %436 = vmatpush1.msra.mxu0 0.0
    %437 = vmatprep.subr.mxu0 0.0
    %438 = vmatpush1.msra.mxu0 0.0
    %439 = vmatprep.subr.mxu0 0.0
    %440 = vmatpush1.msra.mxu0 %v395
    %441 = vmatprep.subr.mxu0 0.0
    %442 = vmatpush1.msra.mxu0 %v394
    %443 = vmatprep.subr.mxu0 0.0
    %444 = vmatpush1.msra.mxu0 %v393
    %445 = vmatprep.subr.mxu0 0.0
    %446 = vmatpush1.msra.mxu0 %v392
    %447 = vmatprep.subr.mxu0 0.0
    %448 = vmatpush2.msra.mxu0 0.0
    %449 = vmatprep.subr.mxu0 0.0
    %450 = vmatpush2.msra.mxu0 0.0
    %451 = vmatprep.subr.mxu0 0.0
    %452 = vmatpush2.msra.mxu0 0.0
    %453 = vmatprep.subr.mxu0 0.0
    %454 = vmatpush2.msra.mxu0 0.0
    %455 = vmatprep.subr.mxu0 0.0
    %456 = vmatpush2.msra.mxu0 0.0
    %457 = vmatprep.subr.mxu0 0.0
    %458 = vmatpush2.msra.mxu0 0.0
    %459 = vmatprep.subr.mxu0 0.0
    %460 = vmatpush2.msra.mxu0 0.0
    %461 = vmatprep.subr.mxu0 0.0
    %462 = vmatpush2.msra.mxu0 0.0
    %463 = vmatprep.subr.mxu0 0.0
    %464 = vmatpush2.msra.mxu0 0.0
    %465 = vmatprep.subr.mxu0 0.0
    %466 = vmatpush2.msra.mxu0 0.0
    %467 = vmatprep.subr.mxu0 0.0
    %468 = vmatpush2.msra.mxu0 0.0
    %469 = vmatprep.subr.mxu0 0.0
    %470 = vmatpush2.msra.mxu0 0.0
    %471 = vmatprep.subr.mxu0 0.0
    %472 = vmatpush2.msra.mxu0 0.0
    %473 = vmatprep.subr.mxu0 0.0
    %474 = vmatpush2.msra.mxu0 0.0
    %475 = vmatprep.subr.mxu0 0.0
    %476 = vmatpush2.msra.mxu0 0.0
    %477 = vmatprep.subr.mxu0 0.0
    %478 = vmatpush2.msra.mxu0 0.0
    %479 = vmatprep.mubr.f32.mxu0 0.0
    %480 = vmatmul.mubr.f32.gmra.mxu0 %v404
    %v481 = vpop.f32.mrf.mxu0
    %v482 = vadd.f32 %v401, %v481
    %v483 = vpop.f32.mrf.mxu0
    %484 = vmatprep.mubr.f32.mxu0 0.0
    %485 = vmatmul.mubr.f32.gmra.mxu0 %v407
    %v486 = vpop.f32.mrf.mxu0
    %v487 = vadd.f32 %v401, %v486
    %v488 = vpop.f32.mrf.mxu0
    %489 = vmatprep.mubr.f32.mxu0 0.0
    %490 = vmatmul.mubr.f32.gmra.mxu0 %v410
    %v491 = vpop.f32.mrf.mxu0
    %v492 = vadd.f32 %v401, %v491
    %v493 = vpop.f32.mrf.mxu0
    %494 = vmatprep.mubr.f32.mxu0 0.0
    %495 = vmatmul.mubr.f32.gmra.mxu0 %v413
    %v496 = vpop.f32.mrf.mxu0
    %v497 = vadd.f32 %v401, %v496
    %v498 = vpop.f32.mrf.mxu0
    %499 = vdwg.mxu0
    %v500 = vld [vmem:[%s1] sm:$0xff]
    %v501 = vld [vmem:[%s1 + $0x8] sm:$0xff]
    %v502 = vld [vmem:[%s1 + $0x10] sm:$0xff]
    %v503 = vld [vmem:[%s1 + $0x18] sm:$0xff]
    %v504 = vadd.f32 %v482, %v500
    %v505 = vadd.f32 %v487, %v501
    %v506 = vadd.f32 %v492, %v502
    %v507 = vadd.f32 %v497, %v503
    %v508 = vld [vmem:[%s12] sm:$0xff]
    %v509 = vld [vmem:[%s12 + $0x8] sm:$0xff]
    %v510 = vld [vmem:[%s12 + $0x10] sm:$0xff]
    %v511 = vld [vmem:[%s12 + $0x18] sm:$0xff]
    %v512 = vld [vmem:[%s13] sm:$0xff]
    %v513 = vld [vmem:[%s13 + $0x8] sm:$0xff]
    %v514 = vld [vmem:[%s13 + $0x10] sm:$0xff]
    %v515 = vld [vmem:[%s13 + $0x18] sm:$0xff]
    %v516 = vld [vmem:[%s14] sm:$0xff]
    %v517 = vld [vmem:[%s14 + $0x8] sm:$0xff]
    %v518 = vld [vmem:[%s14 + $0x10] sm:$0xff]
    %v519 = vld [vmem:[%s14 + $0x18] sm:$0xff]
    %v520 = vld [vmem:[%s6] sm:$0x1]
    %v521 = vmul.f32 %v504, %v504
    %v522 = vmul.f32 %v505, %v505
    %v523 = vmul.f32 %v506, %v506
    %v524 = vmul.f32 %v507, %v507
    %vm525 = vcmask 523264
    %v526 = vsel %vm525, %v521, 0.0
    %527 = vadd.xlane.f32.xlu0 %v526
    %v528 = vpop.xlane.xlu0 %527
    %v529 = vsel %vm525, %v522, 0.0
    %530 = vadd.xlane.f32.xlu0 %v529
    %v531 = vpop.xlane.xlu0 %530
    %v532 = vsel %vm525, %v523, 0.0
    %533 = vadd.xlane.f32.xlu0 %v532
    %v534 = vpop.xlane.xlu0 %533
    %v535 = vsel %vm525, %v524, 0.0
    %536 = vadd.xlane.f32.xlu0 %v535
    %v537 = vpop.xlane.xlu0 %536
    %v538 = vrcp.pop 64.0
    %v539 = vmul.f32 %v528, %v538
    %v540 = vmul.f32 %v531, %v538
    %v541 = vmul.f32 %v534, %v538
    %v542 = vmul.f32 %v537, %v538
    %v543 = vadd.f32 %v539, 1e-06
    %v544 = vadd.f32 %v540, 1e-06
    %v545 = vadd.f32 %v541, 1e-06
    %v546 = vadd.f32 %v542, 1e-06
    %v547 = vrsqrt.pop %v543
    %v548 = vrsqrt.pop %v544
    %v549 = vrsqrt.pop %v545
    %v550 = vrsqrt.pop %v546
    %v551 = vmul.f32 %v504, %v547
    %v552 = vmul.f32 %v505, %v548
    %v553 = vmul.f32 %v506, %v549
    %v554 = vmul.f32 %v507, %v550
    %v556 = vlaneseq
    %v557 = vshrl.u32 %v556, 7
    %v558 = vsub.s32 0, %v557
    %v559 = vrot.slane %v520, %v558
    %v561 = vmul.f32 %v551, %v559
    %v562 = vmul.f32 %v552, %v559
    %v563 = vmul.f32 %v553, %v559
    %v564 = vmul.f32 %v554, %v559
    %v565 = vld [vmem:[%s8] sm:$0xff]
    %v566 = vld [vmem:[%s8 + $0x8] sm:$0xff]
    %v567 = vld [vmem:[%s8 + $0x10] sm:$0xff]
    %v568 = vld [vmem:[%s8 + $0x18] sm:$0xff]
    %v569 = vld [vmem:[%s8 + $0x20] sm:$0xff]
    %v570 = vld [vmem:[%s8 + $0x28] sm:$0xff]
    %v571 = vld [vmem:[%s8 + $0x30] sm:$0xff]
    %v572 = vld [vmem:[%s8 + $0x38] sm:$0xff]
    %v573 = vld [vmem:[%s8 + $0x40] sm:$0xff]
    %v574 = vld [vmem:[%s8 + $0x48] sm:$0xff]
    %v575 = vld [vmem:[%s8 + $0x50] sm:$0xff]
    %v576 = vld [vmem:[%s8 + $0x58] sm:$0xff]
    %v577 = vld [vmem:[%s8 + $0x60] sm:$0xff]
    %v578 = vld [vmem:[%s8 + $0x68] sm:$0xff]
    %v579 = vld [vmem:[%s8 + $0x70] sm:$0xff]
    %v580 = vld [vmem:[%s8 + $0x78] sm:$0xff]
    %v581 = vld [vmem:[%s8 + $0x80] sm:$0xff]
    %v582 = vld [vmem:[%s8 + $0x88] sm:$0xff]
    %v583 = vld [vmem:[%s8 + $0x90] sm:$0xff]
    %v584 = vld [vmem:[%s8 + $0x98] sm:$0xff]
    %v585 = vld [vmem:[%s8 + $0xa0] sm:$0xff]
    %v586 = vld [vmem:[%s8 + $0xa8] sm:$0xff]
    %v587 = vld [vmem:[%s8 + $0xb0] sm:$0xff]
    %v588 = vld [vmem:[%s8 + $0xb8] sm:$0xff]
    %v589 = vld [vmem:[%s8 + $0xc0] sm:$0xff]
    %v590 = vld [vmem:[%s8 + $0xc8] sm:$0xff]
    %v591 = vld [vmem:[%s8 + $0xd0] sm:$0xff]
    %v592 = vld [vmem:[%s8 + $0xd8] sm:$0xff]
    %v593 = vld [vmem:[%s8 + $0xe0] sm:$0xff]
    %v594 = vld [vmem:[%s8 + $0xe8] sm:$0xff]
    %v595 = vld [vmem:[%s8 + $0xf0] sm:$0xff]
    %v596 = vld [vmem:[%s8 + $0xf8] sm:$0xff]
    %v597 = vld [vmem:[%s8 + $0x100] sm:$0xff]
    %v598 = vld [vmem:[%s8 + $0x108] sm:$0xff]
    %v599 = vld [vmem:[%s8 + $0x110] sm:$0xff]
    %v600 = vld [vmem:[%s8 + $0x118] sm:$0xff]
    %v601 = vld [vmem:[%s8 + $0x120] sm:$0xff]
    %v602 = vld [vmem:[%s8 + $0x128] sm:$0xff]
    %v603 = vld [vmem:[%s8 + $0x130] sm:$0xff]
    %v604 = vld [vmem:[%s8 + $0x138] sm:$0xff]
    %v606 = vsel %vm525, %v561, 0
    %v609 = vsel %vm525, %v562, 0
    %v612 = vsel %vm525, %v563, 0
    %v615 = vsel %vm525, %v564, 0
    %617 = vmatprep.subr.mxu0 0.0
    %618 = vmatpush1.msra.mxu0 0.0
    %619 = vmatprep.subr.mxu0 0.0
    %620 = vmatpush1.msra.mxu0 0.0
    %621 = vmatprep.subr.mxu0 0.0
    %622 = vmatpush1.msra.mxu0 0.0
    %623 = vmatprep.subr.mxu0 0.0
    %624 = vmatpush1.msra.mxu0 0.0
    %625 = vmatprep.subr.mxu0 0.0
    %626 = vmatpush1.msra.mxu0 0.0
    %627 = vmatprep.subr.mxu0 0.0
    %628 = vmatpush1.msra.mxu0 0.0
    %629 = vmatprep.subr.mxu0 0.0
    %630 = vmatpush1.msra.mxu0 0.0
    %631 = vmatprep.subr.mxu0 0.0
    %632 = vmatpush1.msra.mxu0 0.0
    %633 = vmatprep.subr.mxu0 %v601
    %634 = vmatpush1.msra.mxu0 %v600
    %635 = vmatprep.subr.mxu0 %v596
    %636 = vmatpush1.msra.mxu0 %v595
    %637 = vmatprep.subr.mxu0 %v591
    %638 = vmatpush1.msra.mxu0 %v590
    %639 = vmatprep.subr.mxu0 %v586
    %640 = vmatpush1.msra.mxu0 %v585
    %641 = vmatprep.subr.mxu0 %v581
    %642 = vmatpush1.msra.mxu0 %v580
    %643 = vmatprep.subr.mxu0 %v576
    %644 = vmatpush1.msra.mxu0 %v575
    %645 = vmatprep.subr.mxu0 %v571
    %646 = vmatpush1.msra.mxu0 %v570
    %647 = vmatprep.subr.mxu0 %v566
    %648 = vmatpush1.msra.mxu0 %v565
    %649 = vmatprep.subr.mxu0 0.0
    %650 = vmatpush2.msra.mxu0 0.0
    %651 = vmatprep.subr.mxu0 0.0
    %652 = vmatpush2.msra.mxu0 0.0
    %653 = vmatprep.subr.mxu0 0.0
    %654 = vmatpush2.msra.mxu0 0.0
    %655 = vmatprep.subr.mxu0 0.0
    %656 = vmatpush2.msra.mxu0 0.0
    %657 = vmatprep.subr.mxu0 0.0
    %658 = vmatpush2.msra.mxu0 0.0
    %659 = vmatprep.subr.mxu0 0.0
    %660 = vmatpush2.msra.mxu0 0.0
    %661 = vmatprep.subr.mxu0 0.0
    %662 = vmatpush2.msra.mxu0 0.0
    %663 = vmatprep.subr.mxu0 0.0
    %664 = vmatpush2.msra.mxu0 0.0
    %665 = vmatprep.subr.mxu0 0.0
    %666 = vmatpush2.msra.mxu0 0.0
    %667 = vmatprep.subr.mxu0 0.0
    %668 = vmatpush2.msra.mxu0 0.0
    %669 = vmatprep.subr.mxu0 0.0
    %670 = vmatpush2.msra.mxu0 0.0
    %671 = vmatprep.subr.mxu0 0.0
    %672 = vmatpush2.msra.mxu0 0.0
    %673 = vmatprep.subr.mxu0 0.0
    %674 = vmatpush2.msra.mxu0 0.0
    %675 = vmatprep.subr.mxu0 0.0
    %676 = vmatpush2.msra.mxu0 0.0
    %677 = vmatprep.subr.mxu0 0.0
    %678 = vmatpush2.msra.mxu0 0.0
    %679 = vmatprep.subr.mxu0 0.0
    %680 = vmatpush2.msra.mxu0 0.0
    %681 = vmatprep.mubr.f32.mxu0 0.0
    %682 = vmatmul.mubr.f32.gmra.mxu0 %v606
    %v683 = vpop.f32.mrf.mxu0
    %v684 = vadd.f32 0.0, %v683
    %v685 = vpop.f32.mrf.mxu0
    %v686 = vadd.f32 0.0, %v685
    %687 = vmatprep.mubr.f32.mxu0 0.0
    %688 = vmatmul.mubr.f32.gmra.mxu0 %v609
    %v689 = vpop.f32.mrf.mxu0
    %v690 = vadd.f32 0.0, %v689
    %v691 = vpop.f32.mrf.mxu0
    %v692 = vadd.f32 0.0, %v691
    %693 = vmatprep.mubr.f32.mxu0 0.0
    %694 = vmatmul.mubr.f32.gmra.mxu0 %v612
    %v695 = vpop.f32.mrf.mxu0
    %v696 = vadd.f32 0.0, %v695
    %v697 = vpop.f32.mrf.mxu0
    %v698 = vadd.f32 0.0, %v697
    %699 = vmatprep.mubr.f32.mxu0 0.0
    %700 = vmatmul.mubr.f32.gmra.mxu0 %v615
    %v701 = vpop.f32.mrf.mxu0
    %v702 = vadd.f32 0.0, %v701
    %v703 = vpop.f32.mrf.mxu0
    %v704 = vadd.f32 0.0, %v703
    %705 = vdwg.mxu0
    %706 = vmatprep.subr.mxu0 0.0
    %707 = vmatpush1.msra.mxu0 0.0
    %708 = vmatprep.subr.mxu0 0.0
    %709 = vmatpush1.msra.mxu0 0.0
    %710 = vmatprep.subr.mxu0 0.0
    %711 = vmatpush1.msra.mxu0 0.0
    %712 = vmatprep.subr.mxu0 0.0
    %713 = vmatpush1.msra.mxu0 0.0
    %714 = vmatprep.subr.mxu0 0.0
    %715 = vmatpush1.msra.mxu0 0.0
    %716 = vmatprep.subr.mxu0 0.0
    %717 = vmatpush1.msra.mxu0 0.0
    %718 = vmatprep.subr.mxu0 0.0
    %719 = vmatpush1.msra.mxu0 0.0
    %720 = vmatprep.subr.mxu0 0.0
    %721 = vmatpush1.msra.mxu0 0.0
    %722 = vmatprep.subr.mxu0 %v603
    %723 = vmatpush1.msra.mxu0 %v602
    %724 = vmatprep.subr.mxu0 %v598
    %725 = vmatpush1.msra.mxu0 %v597
    %726 = vmatprep.subr.mxu0 %v593
    %727 = vmatpush1.msra.mxu0 %v592
    %728 = vmatprep.subr.mxu0 %v588
    %729 = vmatpush1.msra.mxu0 %v587
    %730 = vmatprep.subr.mxu0 %v583
    %731 = vmatpush1.msra.mxu0 %v582
    %732 = vmatprep.subr.mxu0 %v578
    %733 = vmatpush1.msra.mxu0 %v577
    %734 = vmatprep.subr.mxu0 %v573
    %735 = vmatpush1.msra.mxu0 %v572
    %736 = vmatprep.subr.mxu0 %v568
    %737 = vmatpush1.msra.mxu0 %v567
    %738 = vmatprep.subr.mxu0 0.0
    %739 = vmatpush2.msra.mxu0 0.0
    %740 = vmatprep.subr.mxu0 0.0
    %741 = vmatpush2.msra.mxu0 0.0
    %742 = vmatprep.subr.mxu0 0.0
    %743 = vmatpush2.msra.mxu0 0.0
    %744 = vmatprep.subr.mxu0 0.0
    %745 = vmatpush2.msra.mxu0 0.0
    %746 = vmatprep.subr.mxu0 0.0
    %747 = vmatpush2.msra.mxu0 0.0
    %748 = vmatprep.subr.mxu0 0.0
    %749 = vmatpush2.msra.mxu0 0.0
    %750 = vmatprep.subr.mxu0 0.0
    %751 = vmatpush2.msra.mxu0 0.0
    %752 = vmatprep.subr.mxu0 0.0
    %753 = vmatpush2.msra.mxu0 0.0
    %754 = vmatprep.subr.mxu0 0.0
    %755 = vmatpush2.msra.mxu0 0.0
    %756 = vmatprep.subr.mxu0 0.0
    %757 = vmatpush2.msra.mxu0 0.0
    %758 = vmatprep.subr.mxu0 0.0
    %759 = vmatpush2.msra.mxu0 0.0
    %760 = vmatprep.subr.mxu0 0.0
    %761 = vmatpush2.msra.mxu0 0.0
    %762 = vmatprep.subr.mxu0 0.0
    %763 = vmatpush2.msra.mxu0 0.0
    %764 = vmatprep.subr.mxu0 0.0
    %765 = vmatpush2.msra.mxu0 0.0
    %766 = vmatprep.subr.mxu0 0.0
    %767 = vmatpush2.msra.mxu0 0.0
    %768 = vmatprep.subr.mxu0 0.0
    %769 = vmatpush2.msra.mxu0 0.0
    %770 = vmatprep.mubr.f32.mxu0 0.0
    %771 = vmatmul.mubr.f32.gmra.mxu0 %v606
    %v772 = vpop.f32.mrf.mxu0
    %v773 = vadd.f32 0.0, %v772
    %v774 = vpop.f32.mrf.mxu0
    %v775 = vadd.f32 0.0, %v774
    %776 = vmatprep.mubr.f32.mxu0 0.0
    %777 = vmatmul.mubr.f32.gmra.mxu0 %v609
    %v778 = vpop.f32.mrf.mxu0
    %v779 = vadd.f32 0.0, %v778
    %v780 = vpop.f32.mrf.mxu0
    %v781 = vadd.f32 0.0, %v780
    %782 = vmatprep.mubr.f32.mxu0 0.0
    %783 = vmatmul.mubr.f32.gmra.mxu0 %v612
    %v784 = vpop.f32.mrf.mxu0
    %v785 = vadd.f32 0.0, %v784
    %v786 = vpop.f32.mrf.mxu0
    %v787 = vadd.f32 0.0, %v786
    %788 = vmatprep.mubr.f32.mxu0 0.0
    %789 = vmatmul.mubr.f32.gmra.mxu0 %v615
    %v790 = vpop.f32.mrf.mxu0
    %v791 = vadd.f32 0.0, %v790
    %v792 = vpop.f32.mrf.mxu0
    %v793 = vadd.f32 0.0, %v792
    %794 = vdwg.mxu0
    %795 = vmatprep.subr.mxu0 0.0
    %796 = vmatpush1.msra.mxu0 0.0
    %797 = vmatprep.subr.mxu0 0.0
    %798 = vmatpush1.msra.mxu0 0.0
    %799 = vmatprep.subr.mxu0 0.0
    %800 = vmatpush1.msra.mxu0 0.0
    %801 = vmatprep.subr.mxu0 0.0
    %802 = vmatpush1.msra.mxu0 0.0
    %803 = vmatprep.subr.mxu0 0.0
    %804 = vmatpush1.msra.mxu0 0.0
    %805 = vmatprep.subr.mxu0 0.0
    %806 = vmatpush1.msra.mxu0 0.0
    %807 = vmatprep.subr.mxu0 0.0
    %808 = vmatpush1.msra.mxu0 0.0
    %809 = vmatprep.subr.mxu0 0.0
    %810 = vmatpush1.msra.mxu0 0.0
    %811 = vmatprep.subr.mxu0 0.0
    %812 = vmatpush1.msra.mxu0 %v604
    %813 = vmatprep.subr.mxu0 0.0
    %814 = vmatpush1.msra.mxu0 %v599
    %815 = vmatprep.subr.mxu0 0.0
    %816 = vmatpush1.msra.mxu0 %v594
    %817 = vmatprep.subr.mxu0 0.0
    %818 = vmatpush1.msra.mxu0 %v589
    %819 = vmatprep.subr.mxu0 0.0
    %820 = vmatpush1.msra.mxu0 %v584
    %821 = vmatprep.subr.mxu0 0.0
    %822 = vmatpush1.msra.mxu0 %v579
    %823 = vmatprep.subr.mxu0 0.0
    %824 = vmatpush1.msra.mxu0 %v574
    %825 = vmatprep.subr.mxu0 0.0
    %826 = vmatpush1.msra.mxu0 %v569
    %827 = vmatprep.subr.mxu0 0.0
    %828 = vmatpush2.msra.mxu0 0.0
    %829 = vmatprep.subr.mxu0 0.0
    %830 = vmatpush2.msra.mxu0 0.0
    %831 = vmatprep.subr.mxu0 0.0
    %832 = vmatpush2.msra.mxu0 0.0
    %833 = vmatprep.subr.mxu0 0.0
    %834 = vmatpush2.msra.mxu0 0.0
    %835 = vmatprep.subr.mxu0 0.0
    %836 = vmatpush2.msra.mxu0 0.0
    %837 = vmatprep.subr.mxu0 0.0
    %838 = vmatpush2.msra.mxu0 0.0
    %839 = vmatprep.subr.mxu0 0.0
    %840 = vmatpush2.msra.mxu0 0.0
    %841 = vmatprep.subr.mxu0 0.0
    %842 = vmatpush2.msra.mxu0 0.0
    %843 = vmatprep.subr.mxu0 0.0
    %844 = vmatpush2.msra.mxu0 0.0
    %845 = vmatprep.subr.mxu0 0.0
    %846 = vmatpush2.msra.mxu0 0.0
    %847 = vmatprep.subr.mxu0 0.0
    %848 = vmatpush2.msra.mxu0 0.0
    %849 = vmatprep.subr.mxu0 0.0
    %850 = vmatpush2.msra.mxu0 0.0
    %851 = vmatprep.subr.mxu0 0.0
    %852 = vmatpush2.msra.mxu0 0.0
    %853 = vmatprep.subr.mxu0 0.0
    %854 = vmatpush2.msra.mxu0 0.0
    %855 = vmatprep.subr.mxu0 0.0
    %856 = vmatpush2.msra.mxu0 0.0
    %857 = vmatprep.subr.mxu0 0.0
    %858 = vmatpush2.msra.mxu0 0.0
    %859 = vmatprep.mubr.f32.mxu0 0.0
    %860 = vmatmul.mubr.f32.gmra.mxu0 %v606
    %v861 = vpop.f32.mrf.mxu0
    %v862 = vadd.f32 0.0, %v861
    %v863 = vpop.f32.mrf.mxu0
    %864 = vmatprep.mubr.f32.mxu0 0.0
    %865 = vmatmul.mubr.f32.gmra.mxu0 %v609
    %v866 = vpop.f32.mrf.mxu0
    %v867 = vadd.f32 0.0, %v866
    %v868 = vpop.f32.mrf.mxu0
    %869 = vmatprep.mubr.f32.mxu0 0.0
    %870 = vmatmul.mubr.f32.gmra.mxu0 %v612
    %v871 = vpop.f32.mrf.mxu0
    %v872 = vadd.f32 0.0, %v871
    %v873 = vpop.f32.mrf.mxu0
    %874 = vmatprep.mubr.f32.mxu0 0.0
    %875 = vmatmul.mubr.f32.gmra.mxu0 %v615
    %v876 = vpop.f32.mrf.mxu0
    %v877 = vadd.f32 0.0, %v876
    %v878 = vpop.f32.mrf.mxu0
    %879 = vdwg.mxu0
    %v880 = vmul.f32 %v684, %v508
    %v881 = vmul.f32 %v690, %v509
    %v882 = vmul.f32 %v696, %v510
    %v883 = vmul.f32 %v702, %v511
    %v884 = vmul.f32 %v686, %v512
    %v885 = vmul.f32 %v692, %v513
    %v886 = vmul.f32 %v698, %v514
    %v887 = vmul.f32 %v704, %v515
    %v888 = vadd.f32 %v880, %v884
    %v889 = vadd.f32 %v881, %v885
    %v890 = vadd.f32 %v882, %v886
    %v891 = vadd.f32 %v883, %v887
    %v892 = vmul.f32 %v773, %v508
    %v893 = vmul.f32 %v779, %v509
    %v894 = vmul.f32 %v785, %v510
    %v895 = vmul.f32 %v791, %v511
    %v896 = vmul.f32 %v775, %v512
    %v897 = vmul.f32 %v781, %v513
    %v898 = vmul.f32 %v787, %v514
    %v899 = vmul.f32 %v793, %v515
    %v900 = vadd.f32 %v892, %v896
    %v901 = vadd.f32 %v893, %v897
    %v902 = vadd.f32 %v894, %v898
    %v903 = vadd.f32 %v895, %v899
    %v905 = vsel %vm160, %v888, 0
    %v908 = vsel %vm160, %v889, 0
    %v911 = vsel %vm160, %v890, 0
    %v914 = vsel %vm160, %v891, 0
    %v917 = vsel %vm160, %v900, 0
    %v920 = vsel %vm160, %v901, 0
    %v923 = vsel %vm160, %v902, 0
    %v926 = vsel %vm160, %v903, 0
    %928 = vmatprep.subr.mxu0 0.0
    %929 = vmatpush1.xpose.msra.mxu0 0.0
    %930 = vmatprep.subr.mxu0 0.0
    %931 = vmatpush1.xpose.msra.mxu0 0.0
    %932 = vmatprep.subr.mxu0 0.0
    %933 = vmatpush1.xpose.msra.mxu0 0.0
    %934 = vmatprep.subr.mxu0 0.0
    %935 = vmatpush1.xpose.msra.mxu0 0.0
    %936 = vmatprep.subr.mxu0 0.0
    %937 = vmatpush1.xpose.msra.mxu0 0.0
    %938 = vmatprep.subr.mxu0 0.0
    %939 = vmatpush1.xpose.msra.mxu0 0.0
    %940 = vmatprep.subr.mxu0 0.0
    %941 = vmatpush1.xpose.msra.mxu0 0.0
    %942 = vmatprep.subr.mxu0 0.0
    %943 = vmatpush1.xpose.msra.mxu0 0.0
    %944 = vmatprep.subr.mxu0 0.0
    %945 = vmatpush1.xpose.msra.mxu0 0.0
    %946 = vmatprep.subr.mxu0 0.0
    %947 = vmatpush1.xpose.msra.mxu0 0.0
    %948 = vmatprep.subr.mxu0 0.0
    %949 = vmatpush1.xpose.msra.mxu0 0.0
    %950 = vmatprep.subr.mxu0 0.0
    %951 = vmatpush1.xpose.msra.mxu0 0.0
    %952 = vmatprep.subr.mxu0 0.0
    %953 = vmatpush1.xpose.msra.mxu0 %v926
    %954 = vmatprep.subr.mxu0 0.0
    %955 = vmatpush1.xpose.msra.mxu0 %v923
    %956 = vmatprep.subr.mxu0 0.0
    %957 = vmatpush1.xpose.msra.mxu0 %v920
    %958 = vmatprep.subr.mxu0 0.0
    %959 = vmatpush1.xpose.msra.mxu0 %v917
    %960 = vmatprep.subr.mxu0 0.0
    %961 = vmatpush2.xpose.msra.mxu0 0.0
    %962 = vmatprep.subr.mxu0 0.0
    %963 = vmatpush2.xpose.msra.mxu0 0.0
    %964 = vmatprep.subr.mxu0 0.0
    %965 = vmatpush2.xpose.msra.mxu0 0.0
    %966 = vmatprep.subr.mxu0 0.0
    %967 = vmatpush2.xpose.msra.mxu0 0.0
    %968 = vmatprep.subr.mxu0 0.0
    %969 = vmatpush2.xpose.msra.mxu0 0.0
    %970 = vmatprep.subr.mxu0 0.0
    %971 = vmatpush2.xpose.msra.mxu0 0.0
    %972 = vmatprep.subr.mxu0 0.0
    %973 = vmatpush2.xpose.msra.mxu0 0.0
    %974 = vmatprep.subr.mxu0 0.0
    %975 = vmatpush2.xpose.msra.mxu0 0.0
    %976 = vmatprep.subr.mxu0 0.0
    %977 = vmatpush2.xpose.msra.mxu0 0.0
    %978 = vmatprep.subr.mxu0 0.0
    %979 = vmatpush2.xpose.msra.mxu0 0.0
    %980 = vmatprep.subr.mxu0 0.0
    %981 = vmatpush2.xpose.msra.mxu0 0.0
    %982 = vmatprep.subr.mxu0 0.0
    %983 = vmatpush2.xpose.msra.mxu0 0.0
    %984 = vmatprep.subr.mxu0 0.0
    %985 = vmatpush2.xpose.msra.mxu0 0.0
    %986 = vmatprep.subr.mxu0 0.0
    %987 = vmatpush2.xpose.msra.mxu0 0.0
    %988 = vmatprep.subr.mxu0 0.0
    %989 = vmatpush2.xpose.msra.mxu0 0.0
    %990 = vmatprep.subr.mxu0 0.0
    %991 = vmatpush2.xpose.msra.mxu0 0.0
    %992 = vmatprep.mubr.f32.mxu0 0.0
    %993 = vmatmul.mubr.f32.gmra.mxu0 %v905
    %v994 = vpop.f32.mrf.mxu0
    %v995 = vadd.f32 %v516, %v994
    %v996 = vpop.f32.mrf.mxu0
    %997 = vmatprep.mubr.f32.mxu0 0.0
    %998 = vmatmul.mubr.f32.gmra.mxu0 %v908
    %v999 = vpop.f32.mrf.mxu0
    %v1000 = vadd.f32 %v517, %v999
    %v1001 = vpop.f32.mrf.mxu0
    %1002 = vmatprep.mubr.f32.mxu0 0.0
    %1003 = vmatmul.mubr.f32.gmra.mxu0 %v911
    %v1004 = vpop.f32.mrf.mxu0
    %v1005 = vadd.f32 %v518, %v1004
    %v1006 = vpop.f32.mrf.mxu0
    %1007 = vmatprep.mubr.f32.mxu0 0.0
    %1008 = vmatmul.mubr.f32.gmra.mxu0 %v914
    %v1009 = vpop.f32.mrf.mxu0
    %v1010 = vadd.f32 %v519, %v1009
    %v1011 = vpop.f32.mrf.mxu0
    %1012 = vdwg.mxu0
    %v1013 = vsel %vm160, %v995, -inf
    %1014 = vmax.xlane.f32.xlu0 %v1013
    %v1015 = vpop.xlane.xlu0 %1014
    %v1016 = vsel %vm160, %v1000, -inf
    %1017 = vmax.xlane.f32.xlu0 %v1016
    %v1018 = vpop.xlane.xlu0 %1017
    %v1019 = vsel %vm160, %v1005, -inf
    %1020 = vmax.xlane.f32.xlu0 %v1019
    %v1021 = vpop.xlane.xlu0 %1020
    %v1022 = vsel %vm160, %v1010, -inf
    %1023 = vmax.xlane.f32.xlu0 %v1022
    %v1024 = vpop.xlane.xlu0 %1023
    %v1025 = vsub.f32 %v995, %v1015
    %v1026 = vsub.f32 %v1000, %v1018
    %v1027 = vsub.f32 %v1005, %v1021
    %v1028 = vsub.f32 %v1010, %v1024
    %v1029 = vmul.f32 %v1025, 1.442695
    %v1030 = vpow.pop %v1029
    %v1031 = vmul.f32 %v1026, 1.442695
    %v1032 = vpow.pop %v1031
    %v1033 = vmul.f32 %v1027, 1.442695
    %v1034 = vpow.pop %v1033
    %v1035 = vmul.f32 %v1028, 1.442695
    %v1036 = vpow.pop %v1035
    %v1037 = vsel %vm160, %v1030, 0.0
    %1038 = vadd.xlane.f32.xlu0 %v1037
    %v1039 = vpop.xlane.xlu0 %1038
    %v1040 = vsel %vm160, %v1032, 0.0
    %1041 = vadd.xlane.f32.xlu0 %v1040
    %v1042 = vpop.xlane.xlu0 %1041
    %v1043 = vsel %vm160, %v1034, 0.0
    %1044 = vadd.xlane.f32.xlu0 %v1043
    %v1045 = vpop.xlane.xlu0 %1044
    %v1046 = vsel %vm160, %v1036, 0.0
    %1047 = vadd.xlane.f32.xlu0 %v1046
    %v1048 = vpop.xlane.xlu0 %1047
    %v1050 = vsel %vm160, %v1030, 0
    %v1053 = vsel %vm160, %v1032, 0
    %v1056 = vsel %vm160, %v1034, 0
    %v1059 = vsel %vm160, %v1036, 0
    %1061 = vmatprep.subr.mxu0 0.0
    %1062 = vmatpush1.msra.mxu0 0.0
    %1063 = vmatprep.subr.mxu0 0.0
    %1064 = vmatpush1.msra.mxu0 0.0
    %1065 = vmatprep.subr.mxu0 0.0
    %1066 = vmatpush1.msra.mxu0 0.0
    %1067 = vmatprep.subr.mxu0 0.0
    %1068 = vmatpush1.msra.mxu0 0.0
    %1069 = vmatprep.subr.mxu0 0.0
    %1070 = vmatpush1.msra.mxu0 0.0
    %1071 = vmatprep.subr.mxu0 0.0
    %1072 = vmatpush1.msra.mxu0 0.0
    %1073 = vmatprep.subr.mxu0 0.0
    %1074 = vmatpush1.msra.mxu0 0.0
    %1075 = vmatprep.subr.mxu0 0.0
    %1076 = vmatpush1.msra.mxu0 0.0
    %1077 = vmatprep.subr.mxu0 0.0
    %1078 = vmatpush1.msra.mxu0 0.0
    %1079 = vmatprep.subr.mxu0 0.0
    %1080 = vmatpush1.msra.mxu0 0.0
    %1081 = vmatprep.subr.mxu0 0.0
    %1082 = vmatpush1.msra.mxu0 0.0
    %1083 = vmatprep.subr.mxu0 0.0
    %1084 = vmatpush1.msra.mxu0 0.0
    %1085 = vmatprep.subr.mxu0 0.0
    %1086 = vmatpush1.msra.mxu0 %v877
    %1087 = vmatprep.subr.mxu0 0.0
    %1088 = vmatpush1.msra.mxu0 %v872
    %1089 = vmatprep.subr.mxu0 0.0
    %1090 = vmatpush1.msra.mxu0 %v867
    %1091 = vmatprep.subr.mxu0 0.0
    %1092 = vmatpush1.msra.mxu0 %v862
    %1093 = vmatprep.subr.mxu0 0.0
    %1094 = vmatpush2.msra.mxu0 0.0
    %1095 = vmatprep.subr.mxu0 0.0
    %1096 = vmatpush2.msra.mxu0 0.0
    %1097 = vmatprep.subr.mxu0 0.0
    %1098 = vmatpush2.msra.mxu0 0.0
    %1099 = vmatprep.subr.mxu0 0.0
    %1100 = vmatpush2.msra.mxu0 0.0
    %1101 = vmatprep.subr.mxu0 0.0
    %1102 = vmatpush2.msra.mxu0 0.0
    %1103 = vmatprep.subr.mxu0 0.0
    %1104 = vmatpush2.msra.mxu0 0.0
    %1105 = vmatprep.subr.mxu0 0.0
    %1106 = vmatpush2.msra.mxu0 0.0
    %1107 = vmatprep.subr.mxu0 0.0
    %1108 = vmatpush2.msra.mxu0 0.0
    %1109 = vmatprep.subr.mxu0 0.0
    %1110 = vmatpush2.msra.mxu0 0.0
    %1111 = vmatprep.subr.mxu0 0.0
    %1112 = vmatpush2.msra.mxu0 0.0
    %1113 = vmatprep.subr.mxu0 0.0
    %1114 = vmatpush2.msra.mxu0 0.0
    %1115 = vmatprep.subr.mxu0 0.0
    %1116 = vmatpush2.msra.mxu0 0.0
    %1117 = vmatprep.subr.mxu0 0.0
    %1118 = vmatpush2.msra.mxu0 0.0
    %1119 = vmatprep.subr.mxu0 0.0
    %1120 = vmatpush2.msra.mxu0 0.0
    %1121 = vmatprep.subr.mxu0 0.0
    %1122 = vmatpush2.msra.mxu0 0.0
    %1123 = vmatprep.subr.mxu0 0.0
    %1124 = vmatpush2.msra.mxu0 0.0
    %1125 = vmatprep.mubr.f32.mxu0 0.0
    %1126 = vmatmul.mubr.f32.gmra.mxu0 %v1050
    %v1127 = vpop.f32.mrf.mxu0
    %v1128 = vadd.f32 0.0, %v1127
    %v1129 = vpop.f32.mrf.mxu0
    %1130 = vmatprep.mubr.f32.mxu0 0.0
    %1131 = vmatmul.mubr.f32.gmra.mxu0 %v1053
    %v1132 = vpop.f32.mrf.mxu0
    %v1133 = vadd.f32 0.0, %v1132
    %v1134 = vpop.f32.mrf.mxu0
    %1135 = vmatprep.mubr.f32.mxu0 0.0
    %1136 = vmatmul.mubr.f32.gmra.mxu0 %v1056
    %v1137 = vpop.f32.mrf.mxu0
    %v1138 = vadd.f32 0.0, %v1137
    %v1139 = vpop.f32.mrf.mxu0
    %1140 = vmatprep.mubr.f32.mxu0 0.0
    %1141 = vmatmul.mubr.f32.gmra.mxu0 %v1059
    %v1142 = vpop.f32.mrf.mxu0
    %v1143 = vadd.f32 0.0, %v1142
    %v1144 = vpop.f32.mrf.mxu0
    %1145 = vdwg.mxu0
    %v1146 = vrcp.pop %v1039
    %v1147 = vmul.f32 %v1128, %v1146
    %v1148 = vrcp.pop %v1042
    %v1149 = vmul.f32 %v1133, %v1148
    %v1150 = vrcp.pop %v1045
    %v1151 = vmul.f32 %v1138, %v1150
    %v1152 = vrcp.pop %v1048
    %v1153 = vmul.f32 %v1143, %v1152
    %1154 = vrot.lane.b32.xlu0 %v888, 96
    %v1155 = vpop.permute.xlu0 %1154
    %1156 = vrot.lane.b32.xlu0 %v889, 96
    %v1157 = vpop.permute.xlu0 %1156
    %1158 = vrot.lane.b32.xlu0 %v890, 96
    %v1159 = vpop.permute.xlu0 %1158
    %1160 = vrot.lane.b32.xlu0 %v891, 96
    %v1161 = vpop.permute.xlu0 %1160
    %1162 = vrot.lane.b32.xlu0 %v900, 96
    %v1163 = vpop.permute.xlu0 %1162
    %1164 = vrot.lane.b32.xlu0 %v901, 96
    %v1165 = vpop.permute.xlu0 %1164
    %1166 = vrot.lane.b32.xlu0 %v902, 96
    %v1167 = vpop.permute.xlu0 %1166
    %1168 = vrot.lane.b32.xlu0 %v903, 96
    %v1169 = vpop.permute.xlu0 %1168
    %v1170 = vsel %vm160, %v1155, 0
    %v1172 = vsel %vm160, %v1157, 0
    %v1174 = vsel %vm160, %v1159, 0
    %v1176 = vsel %vm160, %v1161, 0
    %v1178 = vsel %vm160, %v1163, 0
    %v1180 = vsel %vm160, %v1165, 0
    %v1182 = vsel %vm160, %v1167, 0
    %v1184 = vsel %vm160, %v1169, 0
    %1186 = vmatprep.subr.mxu0 0.0
    %1187 = vmatpush1.xpose.msra.mxu0 0.0
    %1188 = vmatprep.subr.mxu0 0.0
    %1189 = vmatpush1.xpose.msra.mxu0 0.0
    %1190 = vmatprep.subr.mxu0 0.0
    %1191 = vmatpush1.xpose.msra.mxu0 0.0
    %1192 = vmatprep.subr.mxu0 0.0
    %1193 = vmatpush1.xpose.msra.mxu0 0.0
    %1194 = vmatprep.subr.mxu0 0.0
    %1195 = vmatpush1.xpose.msra.mxu0 0.0
    %1196 = vmatprep.subr.mxu0 0.0
    %1197 = vmatpush1.xpose.msra.mxu0 0.0
    %1198 = vmatprep.subr.mxu0 0.0
    %1199 = vmatpush1.xpose.msra.mxu0 0.0
    %1200 = vmatprep.subr.mxu0 0.0
    %1201 = vmatpush1.xpose.msra.mxu0 0.0
    %1202 = vmatprep.subr.mxu0 0.0
    %1203 = vmatpush1.xpose.msra.mxu0 0.0
    %1204 = vmatprep.subr.mxu0 0.0
    %1205 = vmatpush1.xpose.msra.mxu0 0.0
    %1206 = vmatprep.subr.mxu0 0.0
    %1207 = vmatpush1.xpose.msra.mxu0 0.0
    %1208 = vmatprep.subr.mxu0 0.0
    %1209 = vmatpush1.xpose.msra.mxu0 0.0
    %1210 = vmatprep.subr.mxu0 0.0
    %1211 = vmatpush1.xpose.msra.mxu0 %v1184
    %1212 = vmatprep.subr.mxu0 0.0
    %1213 = vmatpush1.xpose.msra.mxu0 %v1182
    %1214 = vmatprep.subr.mxu0 0.0
    %1215 = vmatpush1.xpose.msra.mxu0 %v1180
    %1216 = vmatprep.subr.mxu0 0.0
    %1217 = vmatpush1.xpose.msra.mxu0 %v1178
    %1218 = vmatprep.subr.mxu0 0.0
    %1219 = vmatpush2.xpose.msra.mxu0 0.0
    %1220 = vmatprep.subr.mxu0 0.0
    %1221 = vmatpush2.xpose.msra.mxu0 0.0
    %1222 = vmatprep.subr.mxu0 0.0
    %1223 = vmatpush2.xpose.msra.mxu0 0.0
    %1224 = vmatprep.subr.mxu0 0.0
    %1225 = vmatpush2.xpose.msra.mxu0 0.0
    %1226 = vmatprep.subr.mxu0 0.0
    %1227 = vmatpush2.xpose.msra.mxu0 0.0
    %1228 = vmatprep.subr.mxu0 0.0
    %1229 = vmatpush2.xpose.msra.mxu0 0.0
    %1230 = vmatprep.subr.mxu0 0.0
    %1231 = vmatpush2.xpose.msra.mxu0 0.0
    %1232 = vmatprep.subr.mxu0 0.0
    %1233 = vmatpush2.xpose.msra.mxu0 0.0
    %1234 = vmatprep.subr.mxu0 0.0
    %1235 = vmatpush2.xpose.msra.mxu0 0.0
    %1236 = vmatprep.subr.mxu0 0.0
    %1237 = vmatpush2.xpose.msra.mxu0 0.0
    %1238 = vmatprep.subr.mxu0 0.0
    %1239 = vmatpush2.xpose.msra.mxu0 0.0
    %1240 = vmatprep.subr.mxu0 0.0
    %1241 = vmatpush2.xpose.msra.mxu0 0.0
    %1242 = vmatprep.subr.mxu0 0.0
    %1243 = vmatpush2.xpose.msra.mxu0 0.0
    %1244 = vmatprep.subr.mxu0 0.0
    %1245 = vmatpush2.xpose.msra.mxu0 0.0
    %1246 = vmatprep.subr.mxu0 0.0
    %1247 = vmatpush2.xpose.msra.mxu0 0.0
    %1248 = vmatprep.subr.mxu0 0.0
    %1249 = vmatpush2.xpose.msra.mxu0 0.0
    %1250 = vmatprep.mubr.f32.mxu0 0.0
    %1251 = vmatmul.mubr.f32.gmra.mxu0 %v1170
    %v1252 = vpop.f32.mrf.mxu0
    %v1253 = vadd.f32 %v516, %v1252
    %v1254 = vpop.f32.mrf.mxu0
    %1255 = vmatprep.mubr.f32.mxu0 0.0
    %1256 = vmatmul.mubr.f32.gmra.mxu0 %v1172
    %v1257 = vpop.f32.mrf.mxu0
    %v1258 = vadd.f32 %v517, %v1257
    %v1259 = vpop.f32.mrf.mxu0
    %1260 = vmatprep.mubr.f32.mxu0 0.0
    %1261 = vmatmul.mubr.f32.gmra.mxu0 %v1174
    %v1262 = vpop.f32.mrf.mxu0
    %v1263 = vadd.f32 %v518, %v1262
    %v1264 = vpop.f32.mrf.mxu0
    %1265 = vmatprep.mubr.f32.mxu0 0.0
    %1266 = vmatmul.mubr.f32.gmra.mxu0 %v1176
    %v1267 = vpop.f32.mrf.mxu0
    %v1268 = vadd.f32 %v519, %v1267
    %v1269 = vpop.f32.mrf.mxu0
    %1270 = vdwg.mxu0
    %v1271 = vsel %vm160, %v1253, -inf
    %1272 = vmax.xlane.f32.xlu0 %v1271
    %v1273 = vpop.xlane.xlu0 %1272
    %v1274 = vsel %vm160, %v1258, -inf
    %1275 = vmax.xlane.f32.xlu0 %v1274
    %v1276 = vpop.xlane.xlu0 %1275
    %v1277 = vsel %vm160, %v1263, -inf
    %1278 = vmax.xlane.f32.xlu0 %v1277
    %v1279 = vpop.xlane.xlu0 %1278
    %v1280 = vsel %vm160, %v1268, -inf
    %1281 = vmax.xlane.f32.xlu0 %v1280
    %v1282 = vpop.xlane.xlu0 %1281
    %v1283 = vsub.f32 %v1253, %v1273
    %v1284 = vsub.f32 %v1258, %v1276
    %v1285 = vsub.f32 %v1263, %v1279
    %v1286 = vsub.f32 %v1268, %v1282
    %v1287 = vmul.f32 %v1283, 1.442695
    %v1288 = vpow.pop %v1287
    %v1289 = vmul.f32 %v1284, 1.442695
    %v1290 = vpow.pop %v1289
    %v1291 = vmul.f32 %v1285, 1.442695
    %v1292 = vpow.pop %v1291
    %v1293 = vmul.f32 %v1286, 1.442695
    %v1294 = vpow.pop %v1293
    %v1295 = vsel %vm160, %v1288, 0.0
    %1296 = vadd.xlane.f32.xlu0 %v1295
    %v1297 = vpop.xlane.xlu0 %1296
    %v1298 = vsel %vm160, %v1290, 0.0
    %1299 = vadd.xlane.f32.xlu0 %v1298
    %v1300 = vpop.xlane.xlu0 %1299
    %v1301 = vsel %vm160, %v1292, 0.0
    %1302 = vadd.xlane.f32.xlu0 %v1301
    %v1303 = vpop.xlane.xlu0 %1302
    %v1304 = vsel %vm160, %v1294, 0.0
    %1305 = vadd.xlane.f32.xlu0 %v1304
    %v1306 = vpop.xlane.xlu0 %1305
    %1311 = vrot.lane.b32.xlu0 %v862, 96
    %v1312 = vpop.permute.xlu0 %1311
    %1313 = vrot.lane.b32.xlu0 %v867, 96
    %v1314 = vpop.permute.xlu0 %1313
    %1315 = vrot.lane.b32.xlu0 %v872, 96
    %v1316 = vpop.permute.xlu0 %1315
    %1317 = vrot.lane.b32.xlu0 %v877, 96
    %v1318 = vpop.permute.xlu0 %1317
    %v1324 = vsel %vm160, %v1288, 0
    %v1327 = vsel %vm160, %v1290, 0
    %v1330 = vsel %vm160, %v1292, 0
    %v1333 = vsel %vm160, %v1294, 0
    %1335 = vmatprep.subr.mxu0 0.0
    %1336 = vmatpush1.msra.mxu0 0.0
    %1337 = vmatprep.subr.mxu0 0.0
    %1338 = vmatpush1.msra.mxu0 0.0
    %1339 = vmatprep.subr.mxu0 0.0
    %1340 = vmatpush1.msra.mxu0 0.0
    %1341 = vmatprep.subr.mxu0 0.0
    %1342 = vmatpush1.msra.mxu0 0.0
    %1343 = vmatprep.subr.mxu0 0.0
    %1344 = vmatpush1.msra.mxu0 0.0
    %1345 = vmatprep.subr.mxu0 0.0
    %1346 = vmatpush1.msra.mxu0 0.0
    %1347 = vmatprep.subr.mxu0 0.0
    %1348 = vmatpush1.msra.mxu0 0.0
    %1349 = vmatprep.subr.mxu0 0.0
    %1350 = vmatpush1.msra.mxu0 0.0
    %1351 = vmatprep.subr.mxu0 0.0
    %1352 = vmatpush1.msra.mxu0 0.0
    %1353 = vmatprep.subr.mxu0 0.0
    %1354 = vmatpush1.msra.mxu0 0.0
    %1355 = vmatprep.subr.mxu0 0.0
    %1356 = vmatpush1.msra.mxu0 0.0
    %1357 = vmatprep.subr.mxu0 0.0
    %1358 = vmatpush1.msra.mxu0 0.0
    %1359 = vmatprep.subr.mxu0 0.0
    %1360 = vmatpush1.msra.mxu0 %v1318
    %1361 = vmatprep.subr.mxu0 0.0
    %1362 = vmatpush1.msra.mxu0 %v1316
    %1363 = vmatprep.subr.mxu0 0.0
    %1364 = vmatpush1.msra.mxu0 %v1314
    %1365 = vmatprep.subr.mxu0 0.0
    %1366 = vmatpush1.msra.mxu0 %v1312
    %1367 = vmatprep.subr.mxu0 0.0
    %1368 = vmatpush2.msra.mxu0 0.0
    %1369 = vmatprep.subr.mxu0 0.0
    %1370 = vmatpush2.msra.mxu0 0.0
    %1371 = vmatprep.subr.mxu0 0.0
    %1372 = vmatpush2.msra.mxu0 0.0
    %1373 = vmatprep.subr.mxu0 0.0
    %1374 = vmatpush2.msra.mxu0 0.0
    %1375 = vmatprep.subr.mxu0 0.0
    %1376 = vmatpush2.msra.mxu0 0.0
    %1377 = vmatprep.subr.mxu0 0.0
    %1378 = vmatpush2.msra.mxu0 0.0
    %1379 = vmatprep.subr.mxu0 0.0
    %1380 = vmatpush2.msra.mxu0 0.0
    %1381 = vmatprep.subr.mxu0 0.0
    %1382 = vmatpush2.msra.mxu0 0.0
    %1383 = vmatprep.subr.mxu0 0.0
    %1384 = vmatpush2.msra.mxu0 0.0
    %1385 = vmatprep.subr.mxu0 0.0
    %1386 = vmatpush2.msra.mxu0 0.0
    %1387 = vmatprep.subr.mxu0 0.0
    %1388 = vmatpush2.msra.mxu0 0.0
    %1389 = vmatprep.subr.mxu0 0.0
    %1390 = vmatpush2.msra.mxu0 0.0
    %1391 = vmatprep.subr.mxu0 0.0
    %1392 = vmatpush2.msra.mxu0 0.0
    %1393 = vmatprep.subr.mxu0 0.0
    %1394 = vmatpush2.msra.mxu0 0.0
    %1395 = vmatprep.subr.mxu0 0.0
    %1396 = vmatpush2.msra.mxu0 0.0
    %1397 = vmatprep.subr.mxu0 0.0
    %1398 = vmatpush2.msra.mxu0 0.0
    %1399 = vmatprep.mubr.f32.mxu0 0.0
    %1400 = vmatmul.mubr.f32.gmra.mxu0 %v1324
    %v1401 = vpop.f32.mrf.mxu0
    %v1402 = vadd.f32 0.0, %v1401
    %v1403 = vpop.f32.mrf.mxu0
    %1404 = vmatprep.mubr.f32.mxu0 0.0
    %1405 = vmatmul.mubr.f32.gmra.mxu0 %v1327
    %v1406 = vpop.f32.mrf.mxu0
    %v1407 = vadd.f32 0.0, %v1406
    %v1408 = vpop.f32.mrf.mxu0
    %1409 = vmatprep.mubr.f32.mxu0 0.0
    %1410 = vmatmul.mubr.f32.gmra.mxu0 %v1330
    %v1411 = vpop.f32.mrf.mxu0
    %v1412 = vadd.f32 0.0, %v1411
    %v1413 = vpop.f32.mrf.mxu0
    %1414 = vmatprep.mubr.f32.mxu0 0.0
    %1415 = vmatmul.mubr.f32.gmra.mxu0 %v1333
    %v1416 = vpop.f32.mrf.mxu0
    %v1417 = vadd.f32 0.0, %v1416
    %v1418 = vpop.f32.mrf.mxu0
    %1419 = vdwg.mxu0
    %v1420 = vrcp.pop %v1297
    %v1421 = vmul.f32 %v1402, %v1420
    %v1422 = vrcp.pop %v1300
    %v1423 = vmul.f32 %v1407, %v1422
    %v1424 = vrcp.pop %v1303
    %v1425 = vmul.f32 %v1412, %v1424
    %v1426 = vrcp.pop %v1306
    %v1427 = vmul.f32 %v1417, %v1426
    %1432 = vrot.lane.b32.xlu0 %v1421, 32
    %v1433 = vpop.permute.xlu0 %1432
    %1434 = vrot.lane.b32.xlu0 %v1423, 32
    %v1435 = vpop.permute.xlu0 %1434
    %1436 = vrot.lane.b32.xlu0 %v1425, 32
    %v1437 = vpop.permute.xlu0 %1436
    %1438 = vrot.lane.b32.xlu0 %v1427, 32
    %v1439 = vpop.permute.xlu0 %1438
    %v1444 = vsel %vm160, %v1147, %v1433
    %v1445 = vsel %vm160, %v1149, %v1435
    %v1446 = vsel %vm160, %v1151, %v1437
    %v1447 = vsel %vm160, %v1153, %v1439
    %v1448 = vld [vmem:[%s9] sm:$0xff]
    %v1449 = vld [vmem:[%s9 + $0x8] sm:$0xff]
    %v1450 = vld [vmem:[%s9 + $0x10] sm:$0xff]
    %v1451 = vld [vmem:[%s9 + $0x18] sm:$0xff]
    %v1452 = vld [vmem:[%s9 + $0x20] sm:$0xff]
    %v1453 = vld [vmem:[%s9 + $0x28] sm:$0xff]
    %v1454 = vld [vmem:[%s9 + $0x30] sm:$0xff]
    %v1455 = vld [vmem:[%s9 + $0x38] sm:$0xff]
    %v1457 = vsel %vm525, %v1444, 0
    %v1460 = vsel %vm525, %v1445, 0
    %v1463 = vsel %vm525, %v1446, 0
    %v1466 = vsel %vm525, %v1447, 0
    %1468 = vmatprep.subr.mxu0 0.0
    %1469 = vmatpush1.msra.mxu0 0.0
    %1470 = vmatprep.subr.mxu0 0.0
    %1471 = vmatpush1.msra.mxu0 0.0
    %1472 = vmatprep.subr.mxu0 0.0
    %1473 = vmatpush1.msra.mxu0 0.0
    %1474 = vmatprep.subr.mxu0 0.0
    %1475 = vmatpush1.msra.mxu0 0.0
    %1476 = vmatprep.subr.mxu0 0.0
    %1477 = vmatpush1.msra.mxu0 0.0
    %1478 = vmatprep.subr.mxu0 0.0
    %1479 = vmatpush1.msra.mxu0 0.0
    %1480 = vmatprep.subr.mxu0 0.0
    %1481 = vmatpush1.msra.mxu0 0.0
    %1482 = vmatprep.subr.mxu0 0.0
    %1483 = vmatpush1.msra.mxu0 0.0
    %1484 = vmatprep.subr.mxu0 0.0
    %1485 = vmatpush1.msra.mxu0 %v1455
    %1486 = vmatprep.subr.mxu0 0.0
    %1487 = vmatpush1.msra.mxu0 %v1454
    %1488 = vmatprep.subr.mxu0 0.0
    %1489 = vmatpush1.msra.mxu0 %v1453
    %1490 = vmatprep.subr.mxu0 0.0
    %1491 = vmatpush1.msra.mxu0 %v1452
    %1492 = vmatprep.subr.mxu0 0.0
    %1493 = vmatpush1.msra.mxu0 %v1451
    %1494 = vmatprep.subr.mxu0 0.0
    %1495 = vmatpush1.msra.mxu0 %v1450
    %1496 = vmatprep.subr.mxu0 0.0
    %1497 = vmatpush1.msra.mxu0 %v1449
    %1498 = vmatprep.subr.mxu0 0.0
    %1499 = vmatpush1.msra.mxu0 %v1448
    %1500 = vmatprep.subr.mxu0 0.0
    %1501 = vmatpush2.msra.mxu0 0.0
    %1502 = vmatprep.subr.mxu0 0.0
    %1503 = vmatpush2.msra.mxu0 0.0
    %1504 = vmatprep.subr.mxu0 0.0
    %1505 = vmatpush2.msra.mxu0 0.0
    %1506 = vmatprep.subr.mxu0 0.0
    %1507 = vmatpush2.msra.mxu0 0.0
    %1508 = vmatprep.subr.mxu0 0.0
    %1509 = vmatpush2.msra.mxu0 0.0
    %1510 = vmatprep.subr.mxu0 0.0
    %1511 = vmatpush2.msra.mxu0 0.0
    %1512 = vmatprep.subr.mxu0 0.0
    %1513 = vmatpush2.msra.mxu0 0.0
    %1514 = vmatprep.subr.mxu0 0.0
    %1515 = vmatpush2.msra.mxu0 0.0
    %1516 = vmatprep.subr.mxu0 0.0
    %1517 = vmatpush2.msra.mxu0 0.0
    %1518 = vmatprep.subr.mxu0 0.0
    %1519 = vmatpush2.msra.mxu0 0.0
    %1520 = vmatprep.subr.mxu0 0.0
    %1521 = vmatpush2.msra.mxu0 0.0
    %1522 = vmatprep.subr.mxu0 0.0
    %1523 = vmatpush2.msra.mxu0 0.0
    %1524 = vmatprep.subr.mxu0 0.0
    %1525 = vmatpush2.msra.mxu0 0.0
    %1526 = vmatprep.subr.mxu0 0.0
    %1527 = vmatpush2.msra.mxu0 0.0
    %1528 = vmatprep.subr.mxu0 0.0
    %1529 = vmatpush2.msra.mxu0 0.0
    %1530 = vmatprep.subr.mxu0 0.0
    %1531 = vmatpush2.msra.mxu0 0.0
    %1532 = vmatprep.mubr.f32.mxu0 0.0
    %1533 = vmatmul.mubr.f32.gmra.mxu0 %v1457
    %v1534 = vpop.f32.mrf.mxu0
    %v1535 = vadd.f32 0.0, %v1534
    %v1536 = vpop.f32.mrf.mxu0
    %1537 = vmatprep.mubr.f32.mxu0 0.0
    %1538 = vmatmul.mubr.f32.gmra.mxu0 %v1460
    %v1539 = vpop.f32.mrf.mxu0
    %v1540 = vadd.f32 0.0, %v1539
    %v1541 = vpop.f32.mrf.mxu0
    %1542 = vmatprep.mubr.f32.mxu0 0.0
    %1543 = vmatmul.mubr.f32.gmra.mxu0 %v1463
    %v1544 = vpop.f32.mrf.mxu0
    %v1545 = vadd.f32 0.0, %v1544
    %v1546 = vpop.f32.mrf.mxu0
    %1547 = vmatprep.mubr.f32.mxu0 0.0
    %1548 = vmatmul.mubr.f32.gmra.mxu0 %v1466
    %v1549 = vpop.f32.mrf.mxu0
    %v1550 = vadd.f32 0.0, %v1549
    %v1551 = vpop.f32.mrf.mxu0
    %1552 = vdwg.mxu0
    %v1553 = vadd.f32 %v504, %v1535
    %v1554 = vadd.f32 %v505, %v1540
    %v1555 = vadd.f32 %v506, %v1545
    %v1556 = vadd.f32 %v507, %v1550
    %v1557 = vld [vmem:[%s7] sm:$0x1]
    %v1558 = vmul.f32 %v1553, %v1553
    %v1559 = vmul.f32 %v1554, %v1554
    %v1560 = vmul.f32 %v1555, %v1555
    %v1561 = vmul.f32 %v1556, %v1556
    %v1562 = vsel %vm525, %v1558, 0.0
    %1563 = vadd.xlane.f32.xlu0 %v1562
    %v1564 = vpop.xlane.xlu0 %1563
    %v1565 = vsel %vm525, %v1559, 0.0
    %1566 = vadd.xlane.f32.xlu0 %v1565
    %v1567 = vpop.xlane.xlu0 %1566
    %v1568 = vsel %vm525, %v1560, 0.0
    %1569 = vadd.xlane.f32.xlu0 %v1568
    %v1570 = vpop.xlane.xlu0 %1569
    %v1571 = vsel %vm525, %v1561, 0.0
    %1572 = vadd.xlane.f32.xlu0 %v1571
    %v1573 = vpop.xlane.xlu0 %1572
    %v1574 = vmul.f32 %v1564, %v538
    %v1575 = vmul.f32 %v1567, %v538
    %v1576 = vmul.f32 %v1570, %v538
    %v1577 = vmul.f32 %v1573, %v538
    %v1578 = vadd.f32 %v1574, 1e-06
    %v1579 = vadd.f32 %v1575, 1e-06
    %v1580 = vadd.f32 %v1576, 1e-06
    %v1581 = vadd.f32 %v1577, 1e-06
    %v1582 = vrsqrt.pop %v1578
    %v1583 = vrsqrt.pop %v1579
    %v1584 = vrsqrt.pop %v1580
    %v1585 = vrsqrt.pop %v1581
    %v1586 = vmul.f32 %v1553, %v1582
    %v1587 = vmul.f32 %v1554, %v1583
    %v1588 = vmul.f32 %v1555, %v1584
    %v1589 = vmul.f32 %v1556, %v1585
    %v1591 = vlaneseq
    %v1592 = vshrl.u32 %v1591, 7
    %v1593 = vsub.s32 0, %v1592
    %v1594 = vrot.slane %v1557, %v1593
    %v1596 = vmul.f32 %v1586, %v1594
    %v1597 = vmul.f32 %v1587, %v1594
    %v1598 = vmul.f32 %v1588, %v1594
    %v1599 = vmul.f32 %v1589, %v1594
    %v1600 = vld [vmem:[%s10] sm:$0xff]
    %v1601 = vld [vmem:[%s10 + $0x8] sm:$0xff]
    %v1602 = vld [vmem:[%s10 + $0x10] sm:$0xff]
    %v1603 = vld [vmem:[%s10 + $0x18] sm:$0xff]
    %v1604 = vld [vmem:[%s10 + $0x20] sm:$0xff]
    %v1605 = vld [vmem:[%s10 + $0x28] sm:$0xff]
    %v1606 = vld [vmem:[%s10 + $0x30] sm:$0xff]
    %v1607 = vld [vmem:[%s10 + $0x38] sm:$0xff]
    %v1608 = vld [vmem:[%s10 + $0x40] sm:$0xff]
    %v1609 = vld [vmem:[%s10 + $0x48] sm:$0xff]
    %v1610 = vld [vmem:[%s10 + $0x50] sm:$0xff]
    %v1611 = vld [vmem:[%s10 + $0x58] sm:$0xff]
    %v1612 = vld [vmem:[%s10 + $0x60] sm:$0xff]
    %v1613 = vld [vmem:[%s10 + $0x68] sm:$0xff]
    %v1614 = vld [vmem:[%s10 + $0x70] sm:$0xff]
    %v1615 = vld [vmem:[%s10 + $0x78] sm:$0xff]
    %v1616 = vld [vmem:[%s11] sm:$0xff]
    %v1617 = vld [vmem:[%s11 + $0x8] sm:$0xff]
    %v1618 = vld [vmem:[%s11 + $0x10] sm:$0xff]
    %v1619 = vld [vmem:[%s11 + $0x18] sm:$0xff]
    %v1620 = vld [vmem:[%s11 + $0x20] sm:$0xff]
    %v1621 = vld [vmem:[%s11 + $0x28] sm:$0xff]
    %v1622 = vld [vmem:[%s11 + $0x30] sm:$0xff]
    %v1623 = vld [vmem:[%s11 + $0x38] sm:$0xff]
    %v1624 = vld [vmem:[%s11 + $0x40] sm:$0xff]
    %v1625 = vld [vmem:[%s11 + $0x48] sm:$0xff]
    %v1626 = vld [vmem:[%s11 + $0x50] sm:$0xff]
    %v1627 = vld [vmem:[%s11 + $0x58] sm:$0xff]
    %v1629 = vsel %vm525, %v1596, 0
    %v1632 = vsel %vm525, %v1597, 0
    %v1635 = vsel %vm525, %v1598, 0
    %v1638 = vsel %vm525, %v1599, 0
    %1640 = vmatprep.subr.mxu0 0.0
    %1641 = vmatpush1.msra.mxu0 0.0
    %1642 = vmatprep.subr.mxu0 0.0
    %1643 = vmatpush1.msra.mxu0 0.0
    %1644 = vmatprep.subr.mxu0 0.0
    %1645 = vmatpush1.msra.mxu0 0.0
    %1646 = vmatprep.subr.mxu0 0.0
    %1647 = vmatpush1.msra.mxu0 0.0
    %1648 = vmatprep.subr.mxu0 0.0
    %1649 = vmatpush1.msra.mxu0 0.0
    %1650 = vmatprep.subr.mxu0 0.0
    %1651 = vmatpush1.msra.mxu0 0.0
    %1652 = vmatprep.subr.mxu0 0.0
    %1653 = vmatpush1.msra.mxu0 0.0
    %1654 = vmatprep.subr.mxu0 0.0
    %1655 = vmatpush1.msra.mxu0 0.0
    %1656 = vmatprep.subr.mxu0 %v1615
    %1657 = vmatpush1.msra.mxu0 %v1614
    %1658 = vmatprep.subr.mxu0 %v1613
    %1659 = vmatpush1.msra.mxu0 %v1612
    %1660 = vmatprep.subr.mxu0 %v1611
    %1661 = vmatpush1.msra.mxu0 %v1610
    %1662 = vmatprep.subr.mxu0 %v1609
    %1663 = vmatpush1.msra.mxu0 %v1608
    %1664 = vmatprep.subr.mxu0 %v1607
    %1665 = vmatpush1.msra.mxu0 %v1606
    %1666 = vmatprep.subr.mxu0 %v1605
    %1667 = vmatpush1.msra.mxu0 %v1604
    %1668 = vmatprep.subr.mxu0 %v1603
    %1669 = vmatpush1.msra.mxu0 %v1602
    %1670 = vmatprep.subr.mxu0 %v1601
    %1671 = vmatpush1.msra.mxu0 %v1600
    %1672 = vmatprep.subr.mxu0 0.0
    %1673 = vmatpush2.msra.mxu0 0.0
    %1674 = vmatprep.subr.mxu0 0.0
    %1675 = vmatpush2.msra.mxu0 0.0
    %1676 = vmatprep.subr.mxu0 0.0
    %1677 = vmatpush2.msra.mxu0 0.0
    %1678 = vmatprep.subr.mxu0 0.0
    %1679 = vmatpush2.msra.mxu0 0.0
    %1680 = vmatprep.subr.mxu0 0.0
    %1681 = vmatpush2.msra.mxu0 0.0
    %1682 = vmatprep.subr.mxu0 0.0
    %1683 = vmatpush2.msra.mxu0 0.0
    %1684 = vmatprep.subr.mxu0 0.0
    %1685 = vmatpush2.msra.mxu0 0.0
    %1686 = vmatprep.subr.mxu0 0.0
    %1687 = vmatpush2.msra.mxu0 0.0
    %1688 = vmatprep.subr.mxu0 0.0
    %1689 = vmatpush2.msra.mxu0 0.0
    %1690 = vmatprep.subr.mxu0 0.0
    %1691 = vmatpush2.msra.mxu0 0.0
    %1692 = vmatprep.subr.mxu0 0.0
    %1693 = vmatpush2.msra.mxu0 0.0
    %1694 = vmatprep.subr.mxu0 0.0
    %1695 = vmatpush2.msra.mxu0 0.0
    %1696 = vmatprep.subr.mxu0 0.0
    %1697 = vmatpush2.msra.mxu0 0.0
    %1698 = vmatprep.subr.mxu0 0.0
    %1699 = vmatpush2.msra.mxu0 0.0
    %1700 = vmatprep.subr.mxu0 0.0
    %1701 = vmatpush2.msra.mxu0 0.0
    %1702 = vmatprep.subr.mxu0 0.0
    %1703 = vmatpush2.msra.mxu0 0.0
    %1704 = vmatprep.mubr.f32.mxu0 0.0
    %1705 = vmatmul.mubr.f32.gmra.mxu0 %v1629
    %v1706 = vpop.f32.mrf.mxu0
    %v1707 = vadd.f32 0.0, %v1706
    %v1708 = vpop.f32.mrf.mxu0
    %v1709 = vadd.f32 0.0, %v1708
    %1710 = vmatprep.mubr.f32.mxu0 0.0
    %1711 = vmatmul.mubr.f32.gmra.mxu0 %v1632
    %v1712 = vpop.f32.mrf.mxu0
    %v1713 = vadd.f32 0.0, %v1712
    %v1714 = vpop.f32.mrf.mxu0
    %v1715 = vadd.f32 0.0, %v1714
    %1716 = vmatprep.mubr.f32.mxu0 0.0
    %1717 = vmatmul.mubr.f32.gmra.mxu0 %v1635
    %v1718 = vpop.f32.mrf.mxu0
    %v1719 = vadd.f32 0.0, %v1718
    %v1720 = vpop.f32.mrf.mxu0
    %v1721 = vadd.f32 0.0, %v1720
    %1722 = vmatprep.mubr.f32.mxu0 0.0
    %1723 = vmatmul.mubr.f32.gmra.mxu0 %v1638
    %v1724 = vpop.f32.mrf.mxu0
    %v1725 = vadd.f32 0.0, %v1724
    %v1726 = vpop.f32.mrf.mxu0
    %v1727 = vadd.f32 0.0, %v1726
    %1728 = vdwg.mxu0
    %v1729 = vxor.u32 %v1707, 2147483648
    %v1730 = vxor.u32 %v1713, 2147483648
    %v1731 = vxor.u32 %v1719, 2147483648
    %v1732 = vxor.u32 %v1725, 2147483648
    %v1733 = vmul.f32 %v1729, 1.442695
    %v1734 = vpow.pop %v1733
    %v1735 = vmul.f32 %v1730, 1.442695
    %v1736 = vpow.pop %v1735
    %v1737 = vmul.f32 %v1731, 1.442695
    %v1738 = vpow.pop %v1737
    %v1739 = vmul.f32 %v1732, 1.442695
    %v1740 = vpow.pop %v1739
    %v1741 = vadd.f32 %v1734, 1.0
    %v1742 = vadd.f32 %v1736, 1.0
    %v1743 = vadd.f32 %v1738, 1.0
    %v1744 = vadd.f32 %v1740, 1.0
    %v1745 = vrcp.pop %v1741
    %v1746 = vmul.f32 1.0, %v1745
    %v1747 = vrcp.pop %v1742
    %v1748 = vmul.f32 1.0, %v1747
    %v1749 = vrcp.pop %v1743
    %v1750 = vmul.f32 1.0, %v1749
    %v1751 = vrcp.pop %v1744
    %v1752 = vmul.f32 1.0, %v1751
    %v1753 = vmul.f32 %v1707, %v1746
    %v1754 = vmul.f32 %v1713, %v1748
    %v1755 = vmul.f32 %v1719, %v1750
    %v1756 = vmul.f32 %v1725, %v1752
    %v1757 = vmul.f32 %v1753, %v1709
    %v1758 = vmul.f32 %v1754, %v1715
    %v1759 = vmul.f32 %v1755, %v1721
    %v1760 = vmul.f32 %v1756, %v1727
    %v1762 = vsel %vm294, %v1757, 0
    %v1765 = vsel %vm294, %v1758, 0
    %v1768 = vsel %vm294, %v1759, 0
    %v1771 = vsel %vm294, %v1760, 0
    %1773 = vmatprep.subr.mxu0 0.0
    %1774 = vmatpush1.msra.mxu0 0.0
    %1775 = vmatprep.subr.mxu0 0.0
    %1776 = vmatpush1.msra.mxu0 0.0
    %1777 = vmatprep.subr.mxu0 0.0
    %1778 = vmatpush1.msra.mxu0 0.0
    %1779 = vmatprep.subr.mxu0 0.0
    %1780 = vmatpush1.msra.mxu0 0.0
    %1781 = vmatprep.subr.mxu0 0.0
    %1782 = vmatpush1.msra.mxu0 %v1627
    %1783 = vmatprep.subr.mxu0 0.0
    %1784 = vmatpush1.msra.mxu0 %v1626
    %1785 = vmatprep.subr.mxu0 0.0
    %1786 = vmatpush1.msra.mxu0 %v1625
    %1787 = vmatprep.subr.mxu0 0.0
    %1788 = vmatpush1.msra.mxu0 %v1624
    %1789 = vmatprep.subr.mxu0 0.0
    %1790 = vmatpush1.msra.mxu0 %v1623
    %1791 = vmatprep.subr.mxu0 0.0
    %1792 = vmatpush1.msra.mxu0 %v1622
    %1793 = vmatprep.subr.mxu0 0.0
    %1794 = vmatpush1.msra.mxu0 %v1621
    %1795 = vmatprep.subr.mxu0 0.0
    %1796 = vmatpush1.msra.mxu0 %v1620
    %1797 = vmatprep.subr.mxu0 0.0
    %1798 = vmatpush1.msra.mxu0 %v1619
    %1799 = vmatprep.subr.mxu0 0.0
    %1800 = vmatpush1.msra.mxu0 %v1618
    %1801 = vmatprep.subr.mxu0 0.0
    %1802 = vmatpush1.msra.mxu0 %v1617
    %1803 = vmatprep.subr.mxu0 0.0
    %1804 = vmatpush1.msra.mxu0 %v1616
    %1805 = vmatprep.subr.mxu0 0.0
    %1806 = vmatpush2.msra.mxu0 0.0
    %1807 = vmatprep.subr.mxu0 0.0
    %1808 = vmatpush2.msra.mxu0 0.0
    %1809 = vmatprep.subr.mxu0 0.0
    %1810 = vmatpush2.msra.mxu0 0.0
    %1811 = vmatprep.subr.mxu0 0.0
    %1812 = vmatpush2.msra.mxu0 0.0
    %1813 = vmatprep.subr.mxu0 0.0
    %1814 = vmatpush2.msra.mxu0 0.0
    %1815 = vmatprep.subr.mxu0 0.0
    %1816 = vmatpush2.msra.mxu0 0.0
    %1817 = vmatprep.subr.mxu0 0.0
    %1818 = vmatpush2.msra.mxu0 0.0
    %1819 = vmatprep.subr.mxu0 0.0
    %1820 = vmatpush2.msra.mxu0 0.0
    %1821 = vmatprep.subr.mxu0 0.0
    %1822 = vmatpush2.msra.mxu0 0.0
    %1823 = vmatprep.subr.mxu0 0.0
    %1824 = vmatpush2.msra.mxu0 0.0
    %1825 = vmatprep.subr.mxu0 0.0
    %1826 = vmatpush2.msra.mxu0 0.0
    %1827 = vmatprep.subr.mxu0 0.0
    %1828 = vmatpush2.msra.mxu0 0.0
    %1829 = vmatprep.subr.mxu0 0.0
    %1830 = vmatpush2.msra.mxu0 0.0
    %1831 = vmatprep.subr.mxu0 0.0
    %1832 = vmatpush2.msra.mxu0 0.0
    %1833 = vmatprep.subr.mxu0 0.0
    %1834 = vmatpush2.msra.mxu0 0.0
    %1835 = vmatprep.subr.mxu0 0.0
    %1836 = vmatpush2.msra.mxu0 0.0
    %1837 = vmatprep.mubr.f32.mxu0 0.0
    %1838 = vmatmul.mubr.f32.gmra.mxu0 %v1762
    %v1839 = vpop.f32.mrf.mxu0
    %v1840 = vadd.f32 0.0, %v1839
    %v1841 = vpop.f32.mrf.mxu0
    %1842 = vmatprep.mubr.f32.mxu0 0.0
    %1843 = vmatmul.mubr.f32.gmra.mxu0 %v1765
    %v1844 = vpop.f32.mrf.mxu0
    %v1845 = vadd.f32 0.0, %v1844
    %v1846 = vpop.f32.mrf.mxu0
    %1847 = vmatprep.mubr.f32.mxu0 0.0
    %1848 = vmatmul.mubr.f32.gmra.mxu0 %v1768
    %v1849 = vpop.f32.mrf.mxu0
    %v1850 = vadd.f32 0.0, %v1849
    %v1851 = vpop.f32.mrf.mxu0
    %1852 = vmatprep.mubr.f32.mxu0 0.0
    %1853 = vmatmul.mubr.f32.gmra.mxu0 %v1771
    %v1854 = vpop.f32.mrf.mxu0
    %v1855 = vadd.f32 0.0, %v1854
    %v1856 = vpop.f32.mrf.mxu0
    %1857 = vdwg.mxu0
    %v1858 = vadd.f32 %v1553, %v1840
    %v1859 = vadd.f32 %v1554, %v1845
    %v1860 = vadd.f32 %v1555, %v1850
    %v1861 = vadd.f32 %v1556, %v1855
    %s1862 = scalar_lea.vmem %s6, 1
    %v1863 = vld [vmem:[%s1862] sm:$0x1]
    %v1864 = vmul.f32 %v1858, %v1858
    %v1865 = vmul.f32 %v1859, %v1859
    %v1866 = vmul.f32 %v1860, %v1860
    %v1867 = vmul.f32 %v1861, %v1861
    %v1868 = vsel %vm525, %v1864, 0.0
    %1869 = vadd.xlane.f32.xlu0 %v1868
    %v1870 = vpop.xlane.xlu0 %1869
    %v1871 = vsel %vm525, %v1865, 0.0
    %1872 = vadd.xlane.f32.xlu0 %v1871
    %v1873 = vpop.xlane.xlu0 %1872
    %v1874 = vsel %vm525, %v1866, 0.0
    %1875 = vadd.xlane.f32.xlu0 %v1874
    %v1876 = vpop.xlane.xlu0 %1875
    %v1877 = vsel %vm525, %v1867, 0.0
    %1878 = vadd.xlane.f32.xlu0 %v1877
    %v1879 = vpop.xlane.xlu0 %1878
    %v1880 = vmul.f32 %v1870, %v538
    %v1881 = vmul.f32 %v1873, %v538
    %v1882 = vmul.f32 %v1876, %v538
    %v1883 = vmul.f32 %v1879, %v538
    %v1884 = vadd.f32 %v1880, 1e-06
    %v1885 = vadd.f32 %v1881, 1e-06
    %v1886 = vadd.f32 %v1882, 1e-06
    %v1887 = vadd.f32 %v1883, 1e-06
    %v1888 = vrsqrt.pop %v1884
    %v1889 = vrsqrt.pop %v1885
    %v1890 = vrsqrt.pop %v1886
    %v1891 = vrsqrt.pop %v1887
    %v1892 = vmul.f32 %v1858, %v1888
    %v1893 = vmul.f32 %v1859, %v1889
    %v1894 = vmul.f32 %v1860, %v1890
    %v1895 = vmul.f32 %v1861, %v1891
    %v1897 = vlaneseq
    %v1898 = vshrl.u32 %v1897, 7
    %v1899 = vsub.s32 0, %v1898
    %v1900 = vrot.slane %v1863, %v1899
    %v1902 = vmul.f32 %v1892, %v1900
    %v1903 = vmul.f32 %v1893, %v1900
    %v1904 = vmul.f32 %v1894, %v1900
    %v1905 = vmul.f32 %v1895, %v1900
    %s1906 = scalar_lea.vmem %s8, 320
    %v1907 = vld [vmem:[%s1906] sm:$0xff]
    %v1908 = vld [vmem:[%s1906 + $0x8] sm:$0xff]
    %v1909 = vld [vmem:[%s1906 + $0x10] sm:$0xff]
    %v1910 = vld [vmem:[%s1906 + $0x18] sm:$0xff]
    %v1911 = vld [vmem:[%s1906 + $0x20] sm:$0xff]
    %v1912 = vld [vmem:[%s1906 + $0x28] sm:$0xff]
    %v1913 = vld [vmem:[%s1906 + $0x30] sm:$0xff]
    %v1914 = vld [vmem:[%s1906 + $0x38] sm:$0xff]
    %v1915 = vld [vmem:[%s1906 + $0x40] sm:$0xff]
    %v1916 = vld [vmem:[%s1906 + $0x48] sm:$0xff]
    %v1917 = vld [vmem:[%s1906 + $0x50] sm:$0xff]
    %v1918 = vld [vmem:[%s1906 + $0x58] sm:$0xff]
    %v1919 = vld [vmem:[%s1906 + $0x60] sm:$0xff]
    %v1920 = vld [vmem:[%s1906 + $0x68] sm:$0xff]
    %v1921 = vld [vmem:[%s1906 + $0x70] sm:$0xff]
    %v1922 = vld [vmem:[%s1906 + $0x78] sm:$0xff]
    %v1923 = vld [vmem:[%s1906 + $0x80] sm:$0xff]
    %v1924 = vld [vmem:[%s1906 + $0x88] sm:$0xff]
    %v1925 = vld [vmem:[%s1906 + $0x90] sm:$0xff]
    %v1926 = vld [vmem:[%s1906 + $0x98] sm:$0xff]
    %v1927 = vld [vmem:[%s1906 + $0xa0] sm:$0xff]
    %v1928 = vld [vmem:[%s1906 + $0xa8] sm:$0xff]
    %v1929 = vld [vmem:[%s1906 + $0xb0] sm:$0xff]
    %v1930 = vld [vmem:[%s1906 + $0xb8] sm:$0xff]
    %v1931 = vld [vmem:[%s1906 + $0xc0] sm:$0xff]
    %v1932 = vld [vmem:[%s1906 + $0xc8] sm:$0xff]
    %v1933 = vld [vmem:[%s1906 + $0xd0] sm:$0xff]
    %v1934 = vld [vmem:[%s1906 + $0xd8] sm:$0xff]
    %v1935 = vld [vmem:[%s1906 + $0xe0] sm:$0xff]
    %v1936 = vld [vmem:[%s1906 + $0xe8] sm:$0xff]
    %v1937 = vld [vmem:[%s1906 + $0xf0] sm:$0xff]
    %v1938 = vld [vmem:[%s1906 + $0xf8] sm:$0xff]
    %v1939 = vld [vmem:[%s1906 + $0x100] sm:$0xff]
    %v1940 = vld [vmem:[%s1906 + $0x108] sm:$0xff]
    %v1941 = vld [vmem:[%s1906 + $0x110] sm:$0xff]
    %v1942 = vld [vmem:[%s1906 + $0x118] sm:$0xff]
    %v1943 = vld [vmem:[%s1906 + $0x120] sm:$0xff]
    %v1944 = vld [vmem:[%s1906 + $0x128] sm:$0xff]
    %v1945 = vld [vmem:[%s1906 + $0x130] sm:$0xff]
    %v1946 = vld [vmem:[%s1906 + $0x138] sm:$0xff]
    %v1948 = vsel %vm525, %v1902, 0
    %v1951 = vsel %vm525, %v1903, 0
    %v1954 = vsel %vm525, %v1904, 0
    %v1957 = vsel %vm525, %v1905, 0
    %1959 = vmatprep.subr.mxu0 0.0
    %1960 = vmatpush1.msra.mxu0 0.0
    %1961 = vmatprep.subr.mxu0 0.0
    %1962 = vmatpush1.msra.mxu0 0.0
    %1963 = vmatprep.subr.mxu0 0.0
    %1964 = vmatpush1.msra.mxu0 0.0
    %1965 = vmatprep.subr.mxu0 0.0
    %1966 = vmatpush1.msra.mxu0 0.0
    %1967 = vmatprep.subr.mxu0 0.0
    %1968 = vmatpush1.msra.mxu0 0.0
    %1969 = vmatprep.subr.mxu0 0.0
    %1970 = vmatpush1.msra.mxu0 0.0
    %1971 = vmatprep.subr.mxu0 0.0
    %1972 = vmatpush1.msra.mxu0 0.0
    %1973 = vmatprep.subr.mxu0 0.0
    %1974 = vmatpush1.msra.mxu0 0.0
    %1975 = vmatprep.subr.mxu0 %v1943
    %1976 = vmatpush1.msra.mxu0 %v1942
    %1977 = vmatprep.subr.mxu0 %v1938
    %1978 = vmatpush1.msra.mxu0 %v1937
    %1979 = vmatprep.subr.mxu0 %v1933
    %1980 = vmatpush1.msra.mxu0 %v1932
    %1981 = vmatprep.subr.mxu0 %v1928
    %1982 = vmatpush1.msra.mxu0 %v1927
    %1983 = vmatprep.subr.mxu0 %v1923
    %1984 = vmatpush1.msra.mxu0 %v1922
    %1985 = vmatprep.subr.mxu0 %v1918
    %1986 = vmatpush1.msra.mxu0 %v1917
    %1987 = vmatprep.subr.mxu0 %v1913
    %1988 = vmatpush1.msra.mxu0 %v1912
    %1989 = vmatprep.subr.mxu0 %v1908
    %1990 = vmatpush1.msra.mxu0 %v1907
    %1991 = vmatprep.subr.mxu0 0.0
    %1992 = vmatpush2.msra.mxu0 0.0
    %1993 = vmatprep.subr.mxu0 0.0
    %1994 = vmatpush2.msra.mxu0 0.0
    %1995 = vmatprep.subr.mxu0 0.0
    %1996 = vmatpush2.msra.mxu0 0.0
    %1997 = vmatprep.subr.mxu0 0.0
    %1998 = vmatpush2.msra.mxu0 0.0
    %1999 = vmatprep.subr.mxu0 0.0
    %2000 = vmatpush2.msra.mxu0 0.0
    %2001 = vmatprep.subr.mxu0 0.0
    %2002 = vmatpush2.msra.mxu0 0.0
    %2003 = vmatprep.subr.mxu0 0.0
    %2004 = vmatpush2.msra.mxu0 0.0
    %2005 = vmatprep.subr.mxu0 0.0
    %2006 = vmatpush2.msra.mxu0 0.0
    %2007 = vmatprep.subr.mxu0 0.0
    %2008 = vmatpush2.msra.mxu0 0.0
    %2009 = vmatprep.subr.mxu0 0.0
    %2010 = vmatpush2.msra.mxu0 0.0
    %2011 = vmatprep.subr.mxu0 0.0
    %2012 = vmatpush2.msra.mxu0 0.0
    %2013 = vmatprep.subr.mxu0 0.0
    %2014 = vmatpush2.msra.mxu0 0.0
    %2015 = vmatprep.subr.mxu0 0.0
    %2016 = vmatpush2.msra.mxu0 0.0
    %2017 = vmatprep.subr.mxu0 0.0
    %2018 = vmatpush2.msra.mxu0 0.0
    %2019 = vmatprep.subr.mxu0 0.0
    %2020 = vmatpush2.msra.mxu0 0.0
    %2021 = vmatprep.subr.mxu0 0.0
    %2022 = vmatpush2.msra.mxu0 0.0
    %2023 = vmatprep.mubr.f32.mxu0 0.0
    %2024 = vmatmul.mubr.f32.gmra.mxu0 %v1948
    %v2025 = vpop.f32.mrf.mxu0
    %v2026 = vadd.f32 0.0, %v2025
    %v2027 = vpop.f32.mrf.mxu0
    %v2028 = vadd.f32 0.0, %v2027
    %2029 = vmatprep.mubr.f32.mxu0 0.0
    %2030 = vmatmul.mubr.f32.gmra.mxu0 %v1951
    %v2031 = vpop.f32.mrf.mxu0
    %v2032 = vadd.f32 0.0, %v2031
    %v2033 = vpop.f32.mrf.mxu0
    %v2034 = vadd.f32 0.0, %v2033
    %2035 = vmatprep.mubr.f32.mxu0 0.0
    %2036 = vmatmul.mubr.f32.gmra.mxu0 %v1954
    %v2037 = vpop.f32.mrf.mxu0
    %v2038 = vadd.f32 0.0, %v2037
    %v2039 = vpop.f32.mrf.mxu0
    %v2040 = vadd.f32 0.0, %v2039
    %2041 = vmatprep.mubr.f32.mxu0 0.0
    %2042 = vmatmul.mubr.f32.gmra.mxu0 %v1957
    %v2043 = vpop.f32.mrf.mxu0
    %v2044 = vadd.f32 0.0, %v2043
    %v2045 = vpop.f32.mrf.mxu0
    %v2046 = vadd.f32 0.0, %v2045
    %2047 = vdwg.mxu0
    %2048 = vmatprep.subr.mxu0 0.0
    %2049 = vmatpush1.msra.mxu0 0.0
    %2050 = vmatprep.subr.mxu0 0.0
    %2051 = vmatpush1.msra.mxu0 0.0
    %2052 = vmatprep.subr.mxu0 0.0
    %2053 = vmatpush1.msra.mxu0 0.0
    %2054 = vmatprep.subr.mxu0 0.0
    %2055 = vmatpush1.msra.mxu0 0.0
    %2056 = vmatprep.subr.mxu0 0.0
    %2057 = vmatpush1.msra.mxu0 0.0
    %2058 = vmatprep.subr.mxu0 0.0
    %2059 = vmatpush1.msra.mxu0 0.0
    %2060 = vmatprep.subr.mxu0 0.0
    %2061 = vmatpush1.msra.mxu0 0.0
    %2062 = vmatprep.subr.mxu0 0.0
    %2063 = vmatpush1.msra.mxu0 0.0
    %2064 = vmatprep.subr.mxu0 %v1945
    %2065 = vmatpush1.msra.mxu0 %v1944
    %2066 = vmatprep.subr.mxu0 %v1940
    %2067 = vmatpush1.msra.mxu0 %v1939
    %2068 = vmatprep.subr.mxu0 %v1935
    %2069 = vmatpush1.msra.mxu0 %v1934
    %2070 = vmatprep.subr.mxu0 %v1930
    %2071 = vmatpush1.msra.mxu0 %v1929
    %2072 = vmatprep.subr.mxu0 %v1925
    %2073 = vmatpush1.msra.mxu0 %v1924
    %2074 = vmatprep.subr.mxu0 %v1920
    %2075 = vmatpush1.msra.mxu0 %v1919
    %2076 = vmatprep.subr.mxu0 %v1915
    %2077 = vmatpush1.msra.mxu0 %v1914
    %2078 = vmatprep.subr.mxu0 %v1910
    %2079 = vmatpush1.msra.mxu0 %v1909
    %2080 = vmatprep.subr.mxu0 0.0
    %2081 = vmatpush2.msra.mxu0 0.0
    %2082 = vmatprep.subr.mxu0 0.0
    %2083 = vmatpush2.msra.mxu0 0.0
    %2084 = vmatprep.subr.mxu0 0.0
    %2085 = vmatpush2.msra.mxu0 0.0
    %2086 = vmatprep.subr.mxu0 0.0
    %2087 = vmatpush2.msra.mxu0 0.0
    %2088 = vmatprep.subr.mxu0 0.0
    %2089 = vmatpush2.msra.mxu0 0.0
    %2090 = vmatprep.subr.mxu0 0.0
    %2091 = vmatpush2.msra.mxu0 0.0
    %2092 = vmatprep.subr.mxu0 0.0
    %2093 = vmatpush2.msra.mxu0 0.0
    %2094 = vmatprep.subr.mxu0 0.0
    %2095 = vmatpush2.msra.mxu0 0.0
    %2096 = vmatprep.subr.mxu0 0.0
    %2097 = vmatpush2.msra.mxu0 0.0
    %2098 = vmatprep.subr.mxu0 0.0
    %2099 = vmatpush2.msra.mxu0 0.0
    %2100 = vmatprep.subr.mxu0 0.0
    %2101 = vmatpush2.msra.mxu0 0.0
    %2102 = vmatprep.subr.mxu0 0.0
    %2103 = vmatpush2.msra.mxu0 0.0
    %2104 = vmatprep.subr.mxu0 0.0
    %2105 = vmatpush2.msra.mxu0 0.0
    %2106 = vmatprep.subr.mxu0 0.0
    %2107 = vmatpush2.msra.mxu0 0.0
    %2108 = vmatprep.subr.mxu0 0.0
    %2109 = vmatpush2.msra.mxu0 0.0
    %2110 = vmatprep.subr.mxu0 0.0
    %2111 = vmatpush2.msra.mxu0 0.0
    %2112 = vmatprep.mubr.f32.mxu0 0.0
    %2113 = vmatmul.mubr.f32.gmra.mxu0 %v1948
    %v2114 = vpop.f32.mrf.mxu0
    %v2115 = vadd.f32 0.0, %v2114
    %v2116 = vpop.f32.mrf.mxu0
    %v2117 = vadd.f32 0.0, %v2116
    %2118 = vmatprep.mubr.f32.mxu0 0.0
    %2119 = vmatmul.mubr.f32.gmra.mxu0 %v1951
    %v2120 = vpop.f32.mrf.mxu0
    %v2121 = vadd.f32 0.0, %v2120
    %v2122 = vpop.f32.mrf.mxu0
    %v2123 = vadd.f32 0.0, %v2122
    %2124 = vmatprep.mubr.f32.mxu0 0.0
    %2125 = vmatmul.mubr.f32.gmra.mxu0 %v1954
    %v2126 = vpop.f32.mrf.mxu0
    %v2127 = vadd.f32 0.0, %v2126
    %v2128 = vpop.f32.mrf.mxu0
    %v2129 = vadd.f32 0.0, %v2128
    %2130 = vmatprep.mubr.f32.mxu0 0.0
    %2131 = vmatmul.mubr.f32.gmra.mxu0 %v1957
    %v2132 = vpop.f32.mrf.mxu0
    %v2133 = vadd.f32 0.0, %v2132
    %v2134 = vpop.f32.mrf.mxu0
    %v2135 = vadd.f32 0.0, %v2134
    %2136 = vdwg.mxu0
    %2137 = vmatprep.subr.mxu0 0.0
    %2138 = vmatpush1.msra.mxu0 0.0
    %2139 = vmatprep.subr.mxu0 0.0
    %2140 = vmatpush1.msra.mxu0 0.0
    %2141 = vmatprep.subr.mxu0 0.0
    %2142 = vmatpush1.msra.mxu0 0.0
    %2143 = vmatprep.subr.mxu0 0.0
    %2144 = vmatpush1.msra.mxu0 0.0
    %2145 = vmatprep.subr.mxu0 0.0
    %2146 = vmatpush1.msra.mxu0 0.0
    %2147 = vmatprep.subr.mxu0 0.0
    %2148 = vmatpush1.msra.mxu0 0.0
    %2149 = vmatprep.subr.mxu0 0.0
    %2150 = vmatpush1.msra.mxu0 0.0
    %2151 = vmatprep.subr.mxu0 0.0
    %2152 = vmatpush1.msra.mxu0 0.0
    %2153 = vmatprep.subr.mxu0 0.0
    %2154 = vmatpush1.msra.mxu0 %v1946
    %2155 = vmatprep.subr.mxu0 0.0
    %2156 = vmatpush1.msra.mxu0 %v1941
    %2157 = vmatprep.subr.mxu0 0.0
    %2158 = vmatpush1.msra.mxu0 %v1936
    %2159 = vmatprep.subr.mxu0 0.0
    %2160 = vmatpush1.msra.mxu0 %v1931
    %2161 = vmatprep.subr.mxu0 0.0
    %2162 = vmatpush1.msra.mxu0 %v1926
    %2163 = vmatprep.subr.mxu0 0.0
    %2164 = vmatpush1.msra.mxu0 %v1921
    %2165 = vmatprep.subr.mxu0 0.0
    %2166 = vmatpush1.msra.mxu0 %v1916
    %2167 = vmatprep.subr.mxu0 0.0
    %2168 = vmatpush1.msra.mxu0 %v1911
    %2169 = vmatprep.subr.mxu0 0.0
    %2170 = vmatpush2.msra.mxu0 0.0
    %2171 = vmatprep.subr.mxu0 0.0
    %2172 = vmatpush2.msra.mxu0 0.0
    %2173 = vmatprep.subr.mxu0 0.0
    %2174 = vmatpush2.msra.mxu0 0.0
    %2175 = vmatprep.subr.mxu0 0.0
    %2176 = vmatpush2.msra.mxu0 0.0
    %2177 = vmatprep.subr.mxu0 0.0
    %2178 = vmatpush2.msra.mxu0 0.0
    %2179 = vmatprep.subr.mxu0 0.0
    %2180 = vmatpush2.msra.mxu0 0.0
    %2181 = vmatprep.subr.mxu0 0.0
    %2182 = vmatpush2.msra.mxu0 0.0
    %2183 = vmatprep.subr.mxu0 0.0
    %2184 = vmatpush2.msra.mxu0 0.0
    %2185 = vmatprep.subr.mxu0 0.0
    %2186 = vmatpush2.msra.mxu0 0.0
    %2187 = vmatprep.subr.mxu0 0.0
    %2188 = vmatpush2.msra.mxu0 0.0
    %2189 = vmatprep.subr.mxu0 0.0
    %2190 = vmatpush2.msra.mxu0 0.0
    %2191 = vmatprep.subr.mxu0 0.0
    %2192 = vmatpush2.msra.mxu0 0.0
    %2193 = vmatprep.subr.mxu0 0.0
    %2194 = vmatpush2.msra.mxu0 0.0
    %2195 = vmatprep.subr.mxu0 0.0
    %2196 = vmatpush2.msra.mxu0 0.0
    %2197 = vmatprep.subr.mxu0 0.0
    %2198 = vmatpush2.msra.mxu0 0.0
    %2199 = vmatprep.subr.mxu0 0.0
    %2200 = vmatpush2.msra.mxu0 0.0
    %2201 = vmatprep.mubr.f32.mxu0 0.0
    %2202 = vmatmul.mubr.f32.gmra.mxu0 %v1948
    %v2203 = vpop.f32.mrf.mxu0
    %v2204 = vadd.f32 0.0, %v2203
    %v2205 = vpop.f32.mrf.mxu0
    %2206 = vmatprep.mubr.f32.mxu0 0.0
    %2207 = vmatmul.mubr.f32.gmra.mxu0 %v1951
    %v2208 = vpop.f32.mrf.mxu0
    %v2209 = vadd.f32 0.0, %v2208
    %v2210 = vpop.f32.mrf.mxu0
    %2211 = vmatprep.mubr.f32.mxu0 0.0
    %2212 = vmatmul.mubr.f32.gmra.mxu0 %v1954
    %v2213 = vpop.f32.mrf.mxu0
    %v2214 = vadd.f32 0.0, %v2213
    %v2215 = vpop.f32.mrf.mxu0
    %2216 = vmatprep.mubr.f32.mxu0 0.0
    %2217 = vmatmul.mubr.f32.gmra.mxu0 %v1957
    %v2218 = vpop.f32.mrf.mxu0
    %v2219 = vadd.f32 0.0, %v2218
    %v2220 = vpop.f32.mrf.mxu0
    %2221 = vdwg.mxu0
    %v2222 = vmul.f32 %v2026, %v508
    %v2223 = vmul.f32 %v2032, %v509
    %v2224 = vmul.f32 %v2038, %v510
    %v2225 = vmul.f32 %v2044, %v511
    %v2226 = vmul.f32 %v2028, %v512
    %v2227 = vmul.f32 %v2034, %v513
    %v2228 = vmul.f32 %v2040, %v514
    %v2229 = vmul.f32 %v2046, %v515
    %v2230 = vadd.f32 %v2222, %v2226
    %v2231 = vadd.f32 %v2223, %v2227
    %v2232 = vadd.f32 %v2224, %v2228
    %v2233 = vadd.f32 %v2225, %v2229
    %v2234 = vmul.f32 %v2115, %v508
    %v2235 = vmul.f32 %v2121, %v509
    %v2236 = vmul.f32 %v2127, %v510
    %v2237 = vmul.f32 %v2133, %v511
    %v2238 = vmul.f32 %v2117, %v512
    %v2239 = vmul.f32 %v2123, %v513
    %v2240 = vmul.f32 %v2129, %v514
    %v2241 = vmul.f32 %v2135, %v515
    %v2242 = vadd.f32 %v2234, %v2238
    %v2243 = vadd.f32 %v2235, %v2239
    %v2244 = vadd.f32 %v2236, %v2240
    %v2245 = vadd.f32 %v2237, %v2241
    %v2247 = vsel %vm160, %v2230, 0
    %v2250 = vsel %vm160, %v2231, 0
    %v2253 = vsel %vm160, %v2232, 0
    %v2256 = vsel %vm160, %v2233, 0
    %v2259 = vsel %vm160, %v2242, 0
    %v2262 = vsel %vm160, %v2243, 0
    %v2265 = vsel %vm160, %v2244, 0
    %v2268 = vsel %vm160, %v2245, 0
    %2270 = vmatprep.subr.mxu0 0.0
    %2271 = vmatpush1.xpose.msra.mxu0 0.0
    %2272 = vmatprep.subr.mxu0 0.0
    %2273 = vmatpush1.xpose.msra.mxu0 0.0
    %2274 = vmatprep.subr.mxu0 0.0
    %2275 = vmatpush1.xpose.msra.mxu0 0.0
    %2276 = vmatprep.subr.mxu0 0.0
    %2277 = vmatpush1.xpose.msra.mxu0 0.0
    %2278 = vmatprep.subr.mxu0 0.0
    %2279 = vmatpush1.xpose.msra.mxu0 0.0
    %2280 = vmatprep.subr.mxu0 0.0
    %2281 = vmatpush1.xpose.msra.mxu0 0.0
    %2282 = vmatprep.subr.mxu0 0.0
    %2283 = vmatpush1.xpose.msra.mxu0 0.0
    %2284 = vmatprep.subr.mxu0 0.0
    %2285 = vmatpush1.xpose.msra.mxu0 0.0
    %2286 = vmatprep.subr.mxu0 0.0
    %2287 = vmatpush1.xpose.msra.mxu0 0.0
    %2288 = vmatprep.subr.mxu0 0.0
    %2289 = vmatpush1.xpose.msra.mxu0 0.0
    %2290 = vmatprep.subr.mxu0 0.0
    %2291 = vmatpush1.xpose.msra.mxu0 0.0
    %2292 = vmatprep.subr.mxu0 0.0
    %2293 = vmatpush1.xpose.msra.mxu0 0.0
    %2294 = vmatprep.subr.mxu0 0.0
    %2295 = vmatpush1.xpose.msra.mxu0 %v2268
    %2296 = vmatprep.subr.mxu0 0.0
    %2297 = vmatpush1.xpose.msra.mxu0 %v2265
    %2298 = vmatprep.subr.mxu0 0.0
    %2299 = vmatpush1.xpose.msra.mxu0 %v2262
    %2300 = vmatprep.subr.mxu0 0.0
    %2301 = vmatpush1.xpose.msra.mxu0 %v2259
    %2302 = vmatprep.subr.mxu0 0.0
    %2303 = vmatpush2.xpose.msra.mxu0 0.0
    %2304 = vmatprep.subr.mxu0 0.0
    %2305 = vmatpush2.xpose.msra.mxu0 0.0
    %2306 = vmatprep.subr.mxu0 0.0
    %2307 = vmatpush2.xpose.msra.mxu0 0.0
    %2308 = vmatprep.subr.mxu0 0.0
    %2309 = vmatpush2.xpose.msra.mxu0 0.0
    %2310 = vmatprep.subr.mxu0 0.0
    %2311 = vmatpush2.xpose.msra.mxu0 0.0
    %2312 = vmatprep.subr.mxu0 0.0
    %2313 = vmatpush2.xpose.msra.mxu0 0.0
    %2314 = vmatprep.subr.mxu0 0.0
    %2315 = vmatpush2.xpose.msra.mxu0 0.0
    %2316 = vmatprep.subr.mxu0 0.0
    %2317 = vmatpush2.xpose.msra.mxu0 0.0
    %2318 = vmatprep.subr.mxu0 0.0
    %2319 = vmatpush2.xpose.msra.mxu0 0.0
    %2320 = vmatprep.subr.mxu0 0.0
    %2321 = vmatpush2.xpose.msra.mxu0 0.0
    %2322 = vmatprep.subr.mxu0 0.0
    %2323 = vmatpush2.xpose.msra.mxu0 0.0
    %2324 = vmatprep.subr.mxu0 0.0
    %2325 = vmatpush2.xpose.msra.mxu0 0.0
    %2326 = vmatprep.subr.mxu0 0.0
    %2327 = vmatpush2.xpose.msra.mxu0 0.0
    %2328 = vmatprep.subr.mxu0 0.0
    %2329 = vmatpush2.xpose.msra.mxu0 0.0
    %2330 = vmatprep.subr.mxu0 0.0
    %2331 = vmatpush2.xpose.msra.mxu0 0.0
    %2332 = vmatprep.subr.mxu0 0.0
    %2333 = vmatpush2.xpose.msra.mxu0 0.0
    %2334 = vmatprep.mubr.f32.mxu0 0.0
    %2335 = vmatmul.mubr.f32.gmra.mxu0 %v2247
    %v2336 = vpop.f32.mrf.mxu0
    %v2337 = vadd.f32 %v516, %v2336
    %v2338 = vpop.f32.mrf.mxu0
    %2339 = vmatprep.mubr.f32.mxu0 0.0
    %2340 = vmatmul.mubr.f32.gmra.mxu0 %v2250
    %v2341 = vpop.f32.mrf.mxu0
    %v2342 = vadd.f32 %v517, %v2341
    %v2343 = vpop.f32.mrf.mxu0
    %2344 = vmatprep.mubr.f32.mxu0 0.0
    %2345 = vmatmul.mubr.f32.gmra.mxu0 %v2253
    %v2346 = vpop.f32.mrf.mxu0
    %v2347 = vadd.f32 %v518, %v2346
    %v2348 = vpop.f32.mrf.mxu0
    %2349 = vmatprep.mubr.f32.mxu0 0.0
    %2350 = vmatmul.mubr.f32.gmra.mxu0 %v2256
    %v2351 = vpop.f32.mrf.mxu0
    %v2352 = vadd.f32 %v519, %v2351
    %v2353 = vpop.f32.mrf.mxu0
    %2354 = vdwg.mxu0
    %v2355 = vsel %vm160, %v2337, -inf
    %2356 = vmax.xlane.f32.xlu0 %v2355
    %v2357 = vpop.xlane.xlu0 %2356
    %v2358 = vsel %vm160, %v2342, -inf
    %2359 = vmax.xlane.f32.xlu0 %v2358
    %v2360 = vpop.xlane.xlu0 %2359
    %v2361 = vsel %vm160, %v2347, -inf
    %2362 = vmax.xlane.f32.xlu0 %v2361
    %v2363 = vpop.xlane.xlu0 %2362
    %v2364 = vsel %vm160, %v2352, -inf
    %2365 = vmax.xlane.f32.xlu0 %v2364
    %v2366 = vpop.xlane.xlu0 %2365
    %v2367 = vsub.f32 %v2337, %v2357
    %v2368 = vsub.f32 %v2342, %v2360
    %v2369 = vsub.f32 %v2347, %v2363
    %v2370 = vsub.f32 %v2352, %v2366
    %v2371 = vmul.f32 %v2367, 1.442695
    %v2372 = vpow.pop %v2371
    %v2373 = vmul.f32 %v2368, 1.442695
    %v2374 = vpow.pop %v2373
    %v2375 = vmul.f32 %v2369, 1.442695
    %v2376 = vpow.pop %v2375
    %v2377 = vmul.f32 %v2370, 1.442695
    %v2378 = vpow.pop %v2377
    %v2379 = vsel %vm160, %v2372, 0.0
    %2380 = vadd.xlane.f32.xlu0 %v2379
    %v2381 = vpop.xlane.xlu0 %2380
    %v2382 = vsel %vm160, %v2374, 0.0
    %2383 = vadd.xlane.f32.xlu0 %v2382
    %v2384 = vpop.xlane.xlu0 %2383
    %v2385 = vsel %vm160, %v2376, 0.0
    %2386 = vadd.xlane.f32.xlu0 %v2385
    %v2387 = vpop.xlane.xlu0 %2386
    %v2388 = vsel %vm160, %v2378, 0.0
    %2389 = vadd.xlane.f32.xlu0 %v2388
    %v2390 = vpop.xlane.xlu0 %2389
    %v2392 = vsel %vm160, %v2372, 0
    %v2395 = vsel %vm160, %v2374, 0
    %v2398 = vsel %vm160, %v2376, 0
    %v2401 = vsel %vm160, %v2378, 0
    %2403 = vmatprep.subr.mxu0 0.0
    %2404 = vmatpush1.msra.mxu0 0.0
    %2405 = vmatprep.subr.mxu0 0.0
    %2406 = vmatpush1.msra.mxu0 0.0
    %2407 = vmatprep.subr.mxu0 0.0
    %2408 = vmatpush1.msra.mxu0 0.0
    %2409 = vmatprep.subr.mxu0 0.0
    %2410 = vmatpush1.msra.mxu0 0.0
    %2411 = vmatprep.subr.mxu0 0.0
    %2412 = vmatpush1.msra.mxu0 0.0
    %2413 = vmatprep.subr.mxu0 0.0
    %2414 = vmatpush1.msra.mxu0 0.0
    %2415 = vmatprep.subr.mxu0 0.0
    %2416 = vmatpush1.msra.mxu0 0.0
    %2417 = vmatprep.subr.mxu0 0.0
    %2418 = vmatpush1.msra.mxu0 0.0
    %2419 = vmatprep.subr.mxu0 0.0
    %2420 = vmatpush1.msra.mxu0 0.0
    %2421 = vmatprep.subr.mxu0 0.0
    %2422 = vmatpush1.msra.mxu0 0.0
    %2423 = vmatprep.subr.mxu0 0.0
    %2424 = vmatpush1.msra.mxu0 0.0
    %2425 = vmatprep.subr.mxu0 0.0
    %2426 = vmatpush1.msra.mxu0 0.0
    %2427 = vmatprep.subr.mxu0 0.0
    %2428 = vmatpush1.msra.mxu0 %v2219
    %2429 = vmatprep.subr.mxu0 0.0
    %2430 = vmatpush1.msra.mxu0 %v2214
    %2431 = vmatprep.subr.mxu0 0.0
    %2432 = vmatpush1.msra.mxu0 %v2209
    %2433 = vmatprep.subr.mxu0 0.0
    %2434 = vmatpush1.msra.mxu0 %v2204
    %2435 = vmatprep.subr.mxu0 0.0
    %2436 = vmatpush2.msra.mxu0 0.0
    %2437 = vmatprep.subr.mxu0 0.0
    %2438 = vmatpush2.msra.mxu0 0.0
    %2439 = vmatprep.subr.mxu0 0.0
    %2440 = vmatpush2.msra.mxu0 0.0
    %2441 = vmatprep.subr.mxu0 0.0
    %2442 = vmatpush2.msra.mxu0 0.0
    %2443 = vmatprep.subr.mxu0 0.0
    %2444 = vmatpush2.msra.mxu0 0.0
    %2445 = vmatprep.subr.mxu0 0.0
    %2446 = vmatpush2.msra.mxu0 0.0
    %2447 = vmatprep.subr.mxu0 0.0
    %2448 = vmatpush2.msra.mxu0 0.0
    %2449 = vmatprep.subr.mxu0 0.0
    %2450 = vmatpush2.msra.mxu0 0.0
    %2451 = vmatprep.subr.mxu0 0.0
    %2452 = vmatpush2.msra.mxu0 0.0
    %2453 = vmatprep.subr.mxu0 0.0
    %2454 = vmatpush2.msra.mxu0 0.0
    %2455 = vmatprep.subr.mxu0 0.0
    %2456 = vmatpush2.msra.mxu0 0.0
    %2457 = vmatprep.subr.mxu0 0.0
    %2458 = vmatpush2.msra.mxu0 0.0
    %2459 = vmatprep.subr.mxu0 0.0
    %2460 = vmatpush2.msra.mxu0 0.0
    %2461 = vmatprep.subr.mxu0 0.0
    %2462 = vmatpush2.msra.mxu0 0.0
    %2463 = vmatprep.subr.mxu0 0.0
    %2464 = vmatpush2.msra.mxu0 0.0
    %2465 = vmatprep.subr.mxu0 0.0
    %2466 = vmatpush2.msra.mxu0 0.0
    %2467 = vmatprep.mubr.f32.mxu0 0.0
    %2468 = vmatmul.mubr.f32.gmra.mxu0 %v2392
    %v2469 = vpop.f32.mrf.mxu0
    %v2470 = vadd.f32 0.0, %v2469
    %v2471 = vpop.f32.mrf.mxu0
    %2472 = vmatprep.mubr.f32.mxu0 0.0
    %2473 = vmatmul.mubr.f32.gmra.mxu0 %v2395
    %v2474 = vpop.f32.mrf.mxu0
    %v2475 = vadd.f32 0.0, %v2474
    %v2476 = vpop.f32.mrf.mxu0
    %2477 = vmatprep.mubr.f32.mxu0 0.0
    %2478 = vmatmul.mubr.f32.gmra.mxu0 %v2398
    %v2479 = vpop.f32.mrf.mxu0
    %v2480 = vadd.f32 0.0, %v2479
    %v2481 = vpop.f32.mrf.mxu0
    %2482 = vmatprep.mubr.f32.mxu0 0.0
    %2483 = vmatmul.mubr.f32.gmra.mxu0 %v2401
    %v2484 = vpop.f32.mrf.mxu0
    %v2485 = vadd.f32 0.0, %v2484
    %v2486 = vpop.f32.mrf.mxu0
    %2487 = vdwg.mxu0
    %v2488 = vrcp.pop %v2381
    %v2489 = vmul.f32 %v2470, %v2488
    %v2490 = vrcp.pop %v2384
    %v2491 = vmul.f32 %v2475, %v2490
    %v2492 = vrcp.pop %v2387
    %v2493 = vmul.f32 %v2480, %v2492
    %v2494 = vrcp.pop %v2390
    %v2495 = vmul.f32 %v2485, %v2494
    %2496 = vrot.lane.b32.xlu0 %v2230, 96
    %v2497 = vpop.permute.xlu0 %2496
    %2498 = vrot.lane.b32.xlu0 %v2231, 96
    %v2499 = vpop.permute.xlu0 %2498
    %2500 = vrot.lane.b32.xlu0 %v2232, 96
    %v2501 = vpop.permute.xlu0 %2500
    %2502 = vrot.lane.b32.xlu0 %v2233, 96
    %v2503 = vpop.permute.xlu0 %2502
    %2504 = vrot.lane.b32.xlu0 %v2242, 96
    %v2505 = vpop.permute.xlu0 %2504
    %2506 = vrot.lane.b32.xlu0 %v2243, 96
    %v2507 = vpop.permute.xlu0 %2506
    %2508 = vrot.lane.b32.xlu0 %v2244, 96
    %v2509 = vpop.permute.xlu0 %2508
    %2510 = vrot.lane.b32.xlu0 %v2245, 96
    %v2511 = vpop.permute.xlu0 %2510
    %v2512 = vsel %vm160, %v2497, 0
    %v2514 = vsel %vm160, %v2499, 0
    %v2516 = vsel %vm160, %v2501, 0
    %v2518 = vsel %vm160, %v2503, 0
    %v2520 = vsel %vm160, %v2505, 0
    %v2522 = vsel %vm160, %v2507, 0
    %v2524 = vsel %vm160, %v2509, 0
    %v2526 = vsel %vm160, %v2511, 0
    %2528 = vmatprep.subr.mxu0 0.0
    %2529 = vmatpush1.xpose.msra.mxu0 0.0
    %2530 = vmatprep.subr.mxu0 0.0
    %2531 = vmatpush1.xpose.msra.mxu0 0.0
    %2532 = vmatprep.subr.mxu0 0.0
    %2533 = vmatpush1.xpose.msra.mxu0 0.0
    %2534 = vmatprep.subr.mxu0 0.0
    %2535 = vmatpush1.xpose.msra.mxu0 0.0
    %2536 = vmatprep.subr.mxu0 0.0
    %2537 = vmatpush1.xpose.msra.mxu0 0.0
    %2538 = vmatprep.subr.mxu0 0.0
    %2539 = vmatpush1.xpose.msra.mxu0 0.0
    %2540 = vmatprep.subr.mxu0 0.0
    %2541 = vmatpush1.xpose.msra.mxu0 0.0
    %2542 = vmatprep.subr.mxu0 0.0
    %2543 = vmatpush1.xpose.msra.mxu0 0.0
    %2544 = vmatprep.subr.mxu0 0.0
    %2545 = vmatpush1.xpose.msra.mxu0 0.0
    %2546 = vmatprep.subr.mxu0 0.0
    %2547 = vmatpush1.xpose.msra.mxu0 0.0
    %2548 = vmatprep.subr.mxu0 0.0
    %2549 = vmatpush1.xpose.msra.mxu0 0.0
    %2550 = vmatprep.subr.mxu0 0.0
    %2551 = vmatpush1.xpose.msra.mxu0 0.0
    %2552 = vmatprep.subr.mxu0 0.0
    %2553 = vmatpush1.xpose.msra.mxu0 %v2526
    %2554 = vmatprep.subr.mxu0 0.0
    %2555 = vmatpush1.xpose.msra.mxu0 %v2524
    %2556 = vmatprep.subr.mxu0 0.0
    %2557 = vmatpush1.xpose.msra.mxu0 %v2522
    %2558 = vmatprep.subr.mxu0 0.0
    %2559 = vmatpush1.xpose.msra.mxu0 %v2520
    %2560 = vmatprep.subr.mxu0 0.0
    %2561 = vmatpush2.xpose.msra.mxu0 0.0
    %2562 = vmatprep.subr.mxu0 0.0
    %2563 = vmatpush2.xpose.msra.mxu0 0.0
    %2564 = vmatprep.subr.mxu0 0.0
    %2565 = vmatpush2.xpose.msra.mxu0 0.0
    %2566 = vmatprep.subr.mxu0 0.0
    %2567 = vmatpush2.xpose.msra.mxu0 0.0
    %2568 = vmatprep.subr.mxu0 0.0
    %2569 = vmatpush2.xpose.msra.mxu0 0.0
    %2570 = vmatprep.subr.mxu0 0.0
    %2571 = vmatpush2.xpose.msra.mxu0 0.0
    %2572 = vmatprep.subr.mxu0 0.0
    %2573 = vmatpush2.xpose.msra.mxu0 0.0
    %2574 = vmatprep.subr.mxu0 0.0
    %2575 = vmatpush2.xpose.msra.mxu0 0.0
    %2576 = vmatprep.subr.mxu0 0.0
    %2577 = vmatpush2.xpose.msra.mxu0 0.0
    %2578 = vmatprep.subr.mxu0 0.0
    %2579 = vmatpush2.xpose.msra.mxu0 0.0
    %2580 = vmatprep.subr.mxu0 0.0
    %2581 = vmatpush2.xpose.msra.mxu0 0.0
    %2582 = vmatprep.subr.mxu0 0.0
    %2583 = vmatpush2.xpose.msra.mxu0 0.0
    %2584 = vmatprep.subr.mxu0 0.0
    %2585 = vmatpush2.xpose.msra.mxu0 0.0
    %2586 = vmatprep.subr.mxu0 0.0
    %2587 = vmatpush2.xpose.msra.mxu0 0.0
    %2588 = vmatprep.subr.mxu0 0.0
    %2589 = vmatpush2.xpose.msra.mxu0 0.0
    %2590 = vmatprep.subr.mxu0 0.0
    %2591 = vmatpush2.xpose.msra.mxu0 0.0
    %2592 = vmatprep.mubr.f32.mxu0 0.0
    %2593 = vmatmul.mubr.f32.gmra.mxu0 %v2512
    %v2594 = vpop.f32.mrf.mxu0
    %v2595 = vadd.f32 %v516, %v2594
    %v2596 = vpop.f32.mrf.mxu0
    %2597 = vmatprep.mubr.f32.mxu0 0.0
    %2598 = vmatmul.mubr.f32.gmra.mxu0 %v2514
    %v2599 = vpop.f32.mrf.mxu0
    %v2600 = vadd.f32 %v517, %v2599
    %v2601 = vpop.f32.mrf.mxu0
    %2602 = vmatprep.mubr.f32.mxu0 0.0
    %2603 = vmatmul.mubr.f32.gmra.mxu0 %v2516
    %v2604 = vpop.f32.mrf.mxu0
    %v2605 = vadd.f32 %v518, %v2604
    %v2606 = vpop.f32.mrf.mxu0
    %2607 = vmatprep.mubr.f32.mxu0 0.0
    %2608 = vmatmul.mubr.f32.gmra.mxu0 %v2518
    %v2609 = vpop.f32.mrf.mxu0
    %v2610 = vadd.f32 %v519, %v2609
    %v2611 = vpop.f32.mrf.mxu0
    %2612 = vdwg.mxu0
    %v2613 = vsel %vm160, %v2595, -inf
    %2614 = vmax.xlane.f32.xlu0 %v2613
    %v2615 = vpop.xlane.xlu0 %2614
    %v2616 = vsel %vm160, %v2600, -inf
    %2617 = vmax.xlane.f32.xlu0 %v2616
    %v2618 = vpop.xlane.xlu0 %2617
    %v2619 = vsel %vm160, %v2605, -inf
    %2620 = vmax.xlane.f32.xlu0 %v2619
    %v2621 = vpop.xlane.xlu0 %2620
    %v2622 = vsel %vm160, %v2610, -inf
    %2623 = vmax.xlane.f32.xlu0 %v2622
    %v2624 = vpop.xlane.xlu0 %2623
    %v2625 = vsub.f32 %v2595, %v2615
    %v2626 = vsub.f32 %v2600, %v2618
    %v2627 = vsub.f32 %v2605, %v2621
    %v2628 = vsub.f32 %v2610, %v2624
    %v2629 = vmul.f32 %v2625, 1.442695
    %v2630 = vpow.pop %v2629
    %v2631 = vmul.f32 %v2626, 1.442695
    %v2632 = vpow.pop %v2631
    %v2633 = vmul.f32 %v2627, 1.442695
    %v2634 = vpow.pop %v2633
    %v2635 = vmul.f32 %v2628, 1.442695
    %v2636 = vpow.pop %v2635
    %v2637 = vsel %vm160, %v2630, 0.0
    %2638 = vadd.xlane.f32.xlu0 %v2637
    %v2639 = vpop.xlane.xlu0 %2638
    %v2640 = vsel %vm160, %v2632, 0.0
    %2641 = vadd.xlane.f32.xlu0 %v2640
    %v2642 = vpop.xlane.xlu0 %2641
    %v2643 = vsel %vm160, %v2634, 0.0
    %2644 = vadd.xlane.f32.xlu0 %v2643
    %v2645 = vpop.xlane.xlu0 %2644
    %v2646 = vsel %vm160, %v2636, 0.0
    %2647 = vadd.xlane.f32.xlu0 %v2646
    %v2648 = vpop.xlane.xlu0 %2647
    %2653 = vrot.lane.b32.xlu0 %v2204, 96
    %v2654 = vpop.permute.xlu0 %2653
    %2655 = vrot.lane.b32.xlu0 %v2209, 96
    %v2656 = vpop.permute.xlu0 %2655
    %2657 = vrot.lane.b32.xlu0 %v2214, 96
    %v2658 = vpop.permute.xlu0 %2657
    %2659 = vrot.lane.b32.xlu0 %v2219, 96
    %v2660 = vpop.permute.xlu0 %2659
    %v2666 = vsel %vm160, %v2630, 0
    %v2669 = vsel %vm160, %v2632, 0
    %v2672 = vsel %vm160, %v2634, 0
    %v2675 = vsel %vm160, %v2636, 0
    %2677 = vmatprep.subr.mxu0 0.0
    %2678 = vmatpush1.msra.mxu0 0.0
    %2679 = vmatprep.subr.mxu0 0.0
    %2680 = vmatpush1.msra.mxu0 0.0
    %2681 = vmatprep.subr.mxu0 0.0
    %2682 = vmatpush1.msra.mxu0 0.0
    %2683 = vmatprep.subr.mxu0 0.0
    %2684 = vmatpush1.msra.mxu0 0.0
    %2685 = vmatprep.subr.mxu0 0.0
    %2686 = vmatpush1.msra.mxu0 0.0
    %2687 = vmatprep.subr.mxu0 0.0
    %2688 = vmatpush1.msra.mxu0 0.0
    %2689 = vmatprep.subr.mxu0 0.0
    %2690 = vmatpush1.msra.mxu0 0.0
    %2691 = vmatprep.subr.mxu0 0.0
    %2692 = vmatpush1.msra.mxu0 0.0
    %2693 = vmatprep.subr.mxu0 0.0
    %2694 = vmatpush1.msra.mxu0 0.0
    %2695 = vmatprep.subr.mxu0 0.0
    %2696 = vmatpush1.msra.mxu0 0.0
    %2697 = vmatprep.subr.mxu0 0.0
    %2698 = vmatpush1.msra.mxu0 0.0
    %2699 = vmatprep.subr.mxu0 0.0
    %2700 = vmatpush1.msra.mxu0 0.0
    %2701 = vmatprep.subr.mxu0 0.0
    %2702 = vmatpush1.msra.mxu0 %v2660
    %2703 = vmatprep.subr.mxu0 0.0
    %2704 = vmatpush1.msra.mxu0 %v2658
    %2705 = vmatprep.subr.mxu0 0.0
    %2706 = vmatpush1.msra.mxu0 %v2656
    %2707 = vmatprep.subr.mxu0 0.0
    %2708 = vmatpush1.msra.mxu0 %v2654
    %2709 = vmatprep.subr.mxu0 0.0
    %2710 = vmatpush2.msra.mxu0 0.0
    %2711 = vmatprep.subr.mxu0 0.0
    %2712 = vmatpush2.msra.mxu0 0.0
    %2713 = vmatprep.subr.mxu0 0.0
    %2714 = vmatpush2.msra.mxu0 0.0
    %2715 = vmatprep.subr.mxu0 0.0
    %2716 = vmatpush2.msra.mxu0 0.0
    %2717 = vmatprep.subr.mxu0 0.0
    %2718 = vmatpush2.msra.mxu0 0.0
    %2719 = vmatprep.subr.mxu0 0.0
    %2720 = vmatpush2.msra.mxu0 0.0
    %2721 = vmatprep.subr.mxu0 0.0
    %2722 = vmatpush2.msra.mxu0 0.0
    %2723 = vmatprep.subr.mxu0 0.0
    %2724 = vmatpush2.msra.mxu0 0.0
    %2725 = vmatprep.subr.mxu0 0.0
    %2726 = vmatpush2.msra.mxu0 0.0
    %2727 = vmatprep.subr.mxu0 0.0
    %2728 = vmatpush2.msra.mxu0 0.0
    %2729 = vmatprep.subr.mxu0 0.0
    %2730 = vmatpush2.msra.mxu0 0.0
    %2731 = vmatprep.subr.mxu0 0.0
    %2732 = vmatpush2.msra.mxu0 0.0
    %2733 = vmatprep.subr.mxu0 0.0
    %2734 = vmatpush2.msra.mxu0 0.0
    %2735 = vmatprep.subr.mxu0 0.0
    %2736 = vmatpush2.msra.mxu0 0.0
    %2737 = vmatprep.subr.mxu0 0.0
    %2738 = vmatpush2.msra.mxu0 0.0
    %2739 = vmatprep.subr.mxu0 0.0
    %2740 = vmatpush2.msra.mxu0 0.0
    %2741 = vmatprep.mubr.f32.mxu0 0.0
    %2742 = vmatmul.mubr.f32.gmra.mxu0 %v2666
    %v2743 = vpop.f32.mrf.mxu0
    %v2744 = vadd.f32 0.0, %v2743
    %v2745 = vpop.f32.mrf.mxu0
    %2746 = vmatprep.mubr.f32.mxu0 0.0
    %2747 = vmatmul.mubr.f32.gmra.mxu0 %v2669
    %v2748 = vpop.f32.mrf.mxu0
    %v2749 = vadd.f32 0.0, %v2748
    %v2750 = vpop.f32.mrf.mxu0
    %2751 = vmatprep.mubr.f32.mxu0 0.0
    %2752 = vmatmul.mubr.f32.gmra.mxu0 %v2672
    %v2753 = vpop.f32.mrf.mxu0
    %v2754 = vadd.f32 0.0, %v2753
    %v2755 = vpop.f32.mrf.mxu0
    %2756 = vmatprep.mubr.f32.mxu0 0.0
    %2757 = vmatmul.mubr.f32.gmra.mxu0 %v2675
    %v2758 = vpop.f32.mrf.mxu0
    %v2759 = vadd.f32 0.0, %v2758
    %v2760 = vpop.f32.mrf.mxu0
    %2761 = vdwg.mxu0
    %v2762 = vrcp.pop %v2639
    %v2763 = vmul.f32 %v2744, %v2762
    %v2764 = vrcp.pop %v2642
    %v2765 = vmul.f32 %v2749, %v2764
    %v2766 = vrcp.pop %v2645
    %v2767 = vmul.f32 %v2754, %v2766
    %v2768 = vrcp.pop %v2648
    %v2769 = vmul.f32 %v2759, %v2768
    %2774 = vrot.lane.b32.xlu0 %v2763, 32
    %v2775 = vpop.permute.xlu0 %2774
    %2776 = vrot.lane.b32.xlu0 %v2765, 32
    %v2777 = vpop.permute.xlu0 %2776
    %2778 = vrot.lane.b32.xlu0 %v2767, 32
    %v2779 = vpop.permute.xlu0 %2778
    %2780 = vrot.lane.b32.xlu0 %v2769, 32
    %v2781 = vpop.permute.xlu0 %2780
    %v2786 = vsel %vm160, %v2489, %v2775
    %v2787 = vsel %vm160, %v2491, %v2777
    %v2788 = vsel %vm160, %v2493, %v2779
    %v2789 = vsel %vm160, %v2495, %v2781
    %s2790 = scalar_lea.vmem %s9, 64
    %v2791 = vld [vmem:[%s2790] sm:$0xff]
    %v2792 = vld [vmem:[%s2790 + $0x8] sm:$0xff]
    %v2793 = vld [vmem:[%s2790 + $0x10] sm:$0xff]
    %v2794 = vld [vmem:[%s2790 + $0x18] sm:$0xff]
    %v2795 = vld [vmem:[%s2790 + $0x20] sm:$0xff]
    %v2796 = vld [vmem:[%s2790 + $0x28] sm:$0xff]
    %v2797 = vld [vmem:[%s2790 + $0x30] sm:$0xff]
    %v2798 = vld [vmem:[%s2790 + $0x38] sm:$0xff]
    %v2800 = vsel %vm525, %v2786, 0
    %v2803 = vsel %vm525, %v2787, 0
    %v2806 = vsel %vm525, %v2788, 0
    %v2809 = vsel %vm525, %v2789, 0
    %2811 = vmatprep.subr.mxu0 0.0
    %2812 = vmatpush1.msra.mxu0 0.0
    %2813 = vmatprep.subr.mxu0 0.0
    %2814 = vmatpush1.msra.mxu0 0.0
    %2815 = vmatprep.subr.mxu0 0.0
    %2816 = vmatpush1.msra.mxu0 0.0
    %2817 = vmatprep.subr.mxu0 0.0
    %2818 = vmatpush1.msra.mxu0 0.0
    %2819 = vmatprep.subr.mxu0 0.0
    %2820 = vmatpush1.msra.mxu0 0.0
    %2821 = vmatprep.subr.mxu0 0.0
    %2822 = vmatpush1.msra.mxu0 0.0
    %2823 = vmatprep.subr.mxu0 0.0
    %2824 = vmatpush1.msra.mxu0 0.0
    %2825 = vmatprep.subr.mxu0 0.0
    %2826 = vmatpush1.msra.mxu0 0.0
    %2827 = vmatprep.subr.mxu0 0.0
    %2828 = vmatpush1.msra.mxu0 %v2798
    %2829 = vmatprep.subr.mxu0 0.0
    %2830 = vmatpush1.msra.mxu0 %v2797
    %2831 = vmatprep.subr.mxu0 0.0
    %2832 = vmatpush1.msra.mxu0 %v2796
    %2833 = vmatprep.subr.mxu0 0.0
    %2834 = vmatpush1.msra.mxu0 %v2795
    %2835 = vmatprep.subr.mxu0 0.0
    %2836 = vmatpush1.msra.mxu0 %v2794
    %2837 = vmatprep.subr.mxu0 0.0
    %2838 = vmatpush1.msra.mxu0 %v2793
    %2839 = vmatprep.subr.mxu0 0.0
    %2840 = vmatpush1.msra.mxu0 %v2792
    %2841 = vmatprep.subr.mxu0 0.0
    %2842 = vmatpush1.msra.mxu0 %v2791
    %2843 = vmatprep.subr.mxu0 0.0
    %2844 = vmatpush2.msra.mxu0 0.0
    %2845 = vmatprep.subr.mxu0 0.0
    %2846 = vmatpush2.msra.mxu0 0.0
    %2847 = vmatprep.subr.mxu0 0.0
    %2848 = vmatpush2.msra.mxu0 0.0
    %2849 = vmatprep.subr.mxu0 0.0
    %2850 = vmatpush2.msra.mxu0 0.0
    %2851 = vmatprep.subr.mxu0 0.0
    %2852 = vmatpush2.msra.mxu0 0.0
    %2853 = vmatprep.subr.mxu0 0.0
    %2854 = vmatpush2.msra.mxu0 0.0
    %2855 = vmatprep.subr.mxu0 0.0
    %2856 = vmatpush2.msra.mxu0 0.0
    %2857 = vmatprep.subr.mxu0 0.0
    %2858 = vmatpush2.msra.mxu0 0.0
    %2859 = vmatprep.subr.mxu0 0.0
    %2860 = vmatpush2.msra.mxu0 0.0
    %2861 = vmatprep.subr.mxu0 0.0
    %2862 = vmatpush2.msra.mxu0 0.0
    %2863 = vmatprep.subr.mxu0 0.0
    %2864 = vmatpush2.msra.mxu0 0.0
    %2865 = vmatprep.subr.mxu0 0.0
    %2866 = vmatpush2.msra.mxu0 0.0
    %2867 = vmatprep.subr.mxu0 0.0
    %2868 = vmatpush2.msra.mxu0 0.0
    %2869 = vmatprep.subr.mxu0 0.0
    %2870 = vmatpush2.msra.mxu0 0.0
    %2871 = vmatprep.subr.mxu0 0.0
    %2872 = vmatpush2.msra.mxu0 0.0
    %2873 = vmatprep.subr.mxu0 0.0
    %2874 = vmatpush2.msra.mxu0 0.0
    %2875 = vmatprep.mubr.f32.mxu0 0.0
    %2876 = vmatmul.mubr.f32.gmra.mxu0 %v2800
    %v2877 = vpop.f32.mrf.mxu0
    %v2878 = vadd.f32 0.0, %v2877
    %v2879 = vpop.f32.mrf.mxu0
    %2880 = vmatprep.mubr.f32.mxu0 0.0
    %2881 = vmatmul.mubr.f32.gmra.mxu0 %v2803
    %v2882 = vpop.f32.mrf.mxu0
    %v2883 = vadd.f32 0.0, %v2882
    %v2884 = vpop.f32.mrf.mxu0
    %2885 = vmatprep.mubr.f32.mxu0 0.0
    %2886 = vmatmul.mubr.f32.gmra.mxu0 %v2806
    %v2887 = vpop.f32.mrf.mxu0
    %v2888 = vadd.f32 0.0, %v2887
    %v2889 = vpop.f32.mrf.mxu0
    %2890 = vmatprep.mubr.f32.mxu0 0.0
    %2891 = vmatmul.mubr.f32.gmra.mxu0 %v2809
    %v2892 = vpop.f32.mrf.mxu0
    %v2893 = vadd.f32 0.0, %v2892
    %v2894 = vpop.f32.mrf.mxu0
    %2895 = vdwg.mxu0
    %v2896 = vadd.f32 %v1858, %v2878
    %v2897 = vadd.f32 %v1859, %v2883
    %v2898 = vadd.f32 %v1860, %v2888
    %v2899 = vadd.f32 %v1861, %v2893
    %s2900 = scalar_lea.vmem %s7, 1
    %v2901 = vld [vmem:[%s2900] sm:$0x1]
    %v2902 = vmul.f32 %v2896, %v2896
    %v2903 = vmul.f32 %v2897, %v2897
    %v2904 = vmul.f32 %v2898, %v2898
    %v2905 = vmul.f32 %v2899, %v2899
    %v2906 = vsel %vm525, %v2902, 0.0
    %2907 = vadd.xlane.f32.xlu0 %v2906
    %v2908 = vpop.xlane.xlu0 %2907
    %v2909 = vsel %vm525, %v2903, 0.0
    %2910 = vadd.xlane.f32.xlu0 %v2909
    %v2911 = vpop.xlane.xlu0 %2910
    %v2912 = vsel %vm525, %v2904, 0.0
    %2913 = vadd.xlane.f32.xlu0 %v2912
    %v2914 = vpop.xlane.xlu0 %2913
    %v2915 = vsel %vm525, %v2905, 0.0
    %2916 = vadd.xlane.f32.xlu0 %v2915
    %v2917 = vpop.xlane.xlu0 %2916
    %v2918 = vmul.f32 %v2908, %v538
    %v2919 = vmul.f32 %v2911, %v538
    %v2920 = vmul.f32 %v2914, %v538
    %v2921 = vmul.f32 %v2917, %v538
    %v2922 = vadd.f32 %v2918, 1e-06
    %v2923 = vadd.f32 %v2919, 1e-06
    %v2924 = vadd.f32 %v2920, 1e-06
    %v2925 = vadd.f32 %v2921, 1e-06
    %v2926 = vrsqrt.pop %v2922
    %v2927 = vrsqrt.pop %v2923
    %v2928 = vrsqrt.pop %v2924
    %v2929 = vrsqrt.pop %v2925
    %v2930 = vmul.f32 %v2896, %v2926
    %v2931 = vmul.f32 %v2897, %v2927
    %v2932 = vmul.f32 %v2898, %v2928
    %v2933 = vmul.f32 %v2899, %v2929
    %v2935 = vlaneseq
    %v2936 = vshrl.u32 %v2935, 7
    %v2937 = vsub.s32 0, %v2936
    %v2938 = vrot.slane %v2901, %v2937
    %v2940 = vmul.f32 %v2930, %v2938
    %v2941 = vmul.f32 %v2931, %v2938
    %v2942 = vmul.f32 %v2932, %v2938
    %v2943 = vmul.f32 %v2933, %v2938
    %s2944 = scalar_lea.vmem %s10, 128
    %v2945 = vld [vmem:[%s2944] sm:$0xff]
    %v2946 = vld [vmem:[%s2944 + $0x8] sm:$0xff]
    %v2947 = vld [vmem:[%s2944 + $0x10] sm:$0xff]
    %v2948 = vld [vmem:[%s2944 + $0x18] sm:$0xff]
    %v2949 = vld [vmem:[%s2944 + $0x20] sm:$0xff]
    %v2950 = vld [vmem:[%s2944 + $0x28] sm:$0xff]
    %v2951 = vld [vmem:[%s2944 + $0x30] sm:$0xff]
    %v2952 = vld [vmem:[%s2944 + $0x38] sm:$0xff]
    %v2953 = vld [vmem:[%s2944 + $0x40] sm:$0xff]
    %v2954 = vld [vmem:[%s2944 + $0x48] sm:$0xff]
    %v2955 = vld [vmem:[%s2944 + $0x50] sm:$0xff]
    %v2956 = vld [vmem:[%s2944 + $0x58] sm:$0xff]
    %v2957 = vld [vmem:[%s2944 + $0x60] sm:$0xff]
    %v2958 = vld [vmem:[%s2944 + $0x68] sm:$0xff]
    %v2959 = vld [vmem:[%s2944 + $0x70] sm:$0xff]
    %v2960 = vld [vmem:[%s2944 + $0x78] sm:$0xff]
    %s2961 = scalar_lea.vmem %s11, 96
    %v2962 = vld [vmem:[%s2961] sm:$0xff]
    %v2963 = vld [vmem:[%s2961 + $0x8] sm:$0xff]
    %v2964 = vld [vmem:[%s2961 + $0x10] sm:$0xff]
    %v2965 = vld [vmem:[%s2961 + $0x18] sm:$0xff]
    %v2966 = vld [vmem:[%s2961 + $0x20] sm:$0xff]
    %v2967 = vld [vmem:[%s2961 + $0x28] sm:$0xff]
    %v2968 = vld [vmem:[%s2961 + $0x30] sm:$0xff]
    %v2969 = vld [vmem:[%s2961 + $0x38] sm:$0xff]
    %v2970 = vld [vmem:[%s2961 + $0x40] sm:$0xff]
    %v2971 = vld [vmem:[%s2961 + $0x48] sm:$0xff]
    %v2972 = vld [vmem:[%s2961 + $0x50] sm:$0xff]
    %v2973 = vld [vmem:[%s2961 + $0x58] sm:$0xff]
    %v2975 = vsel %vm525, %v2940, 0
    %v2978 = vsel %vm525, %v2941, 0
    %v2981 = vsel %vm525, %v2942, 0
    %v2984 = vsel %vm525, %v2943, 0
    %2986 = vmatprep.subr.mxu0 0.0
    %2987 = vmatpush1.msra.mxu0 0.0
    %2988 = vmatprep.subr.mxu0 0.0
    %2989 = vmatpush1.msra.mxu0 0.0
    %2990 = vmatprep.subr.mxu0 0.0
    %2991 = vmatpush1.msra.mxu0 0.0
    %2992 = vmatprep.subr.mxu0 0.0
    %2993 = vmatpush1.msra.mxu0 0.0
    %2994 = vmatprep.subr.mxu0 0.0
    %2995 = vmatpush1.msra.mxu0 0.0
    %2996 = vmatprep.subr.mxu0 0.0
    %2997 = vmatpush1.msra.mxu0 0.0
    %2998 = vmatprep.subr.mxu0 0.0
    %2999 = vmatpush1.msra.mxu0 0.0
    %3000 = vmatprep.subr.mxu0 0.0
    %3001 = vmatpush1.msra.mxu0 0.0
    %3002 = vmatprep.subr.mxu0 %v2960
    %3003 = vmatpush1.msra.mxu0 %v2959
    %3004 = vmatprep.subr.mxu0 %v2958
    %3005 = vmatpush1.msra.mxu0 %v2957
    %3006 = vmatprep.subr.mxu0 %v2956
    %3007 = vmatpush1.msra.mxu0 %v2955
    %3008 = vmatprep.subr.mxu0 %v2954
    %3009 = vmatpush1.msra.mxu0 %v2953
    %3010 = vmatprep.subr.mxu0 %v2952
    %3011 = vmatpush1.msra.mxu0 %v2951
    %3012 = vmatprep.subr.mxu0 %v2950
    %3013 = vmatpush1.msra.mxu0 %v2949
    %3014 = vmatprep.subr.mxu0 %v2948
    %3015 = vmatpush1.msra.mxu0 %v2947
    %3016 = vmatprep.subr.mxu0 %v2946
    %3017 = vmatpush1.msra.mxu0 %v2945
    %3018 = vmatprep.subr.mxu0 0.0
    %3019 = vmatpush2.msra.mxu0 0.0
    %3020 = vmatprep.subr.mxu0 0.0
    %3021 = vmatpush2.msra.mxu0 0.0
    %3022 = vmatprep.subr.mxu0 0.0
    %3023 = vmatpush2.msra.mxu0 0.0
    %3024 = vmatprep.subr.mxu0 0.0
    %3025 = vmatpush2.msra.mxu0 0.0
    %3026 = vmatprep.subr.mxu0 0.0
    %3027 = vmatpush2.msra.mxu0 0.0
    %3028 = vmatprep.subr.mxu0 0.0
    %3029 = vmatpush2.msra.mxu0 0.0
    %3030 = vmatprep.subr.mxu0 0.0
    %3031 = vmatpush2.msra.mxu0 0.0
    %3032 = vmatprep.subr.mxu0 0.0
    %3033 = vmatpush2.msra.mxu0 0.0
    %3034 = vmatprep.subr.mxu0 0.0
    %3035 = vmatpush2.msra.mxu0 0.0
    %3036 = vmatprep.subr.mxu0 0.0
    %3037 = vmatpush2.msra.mxu0 0.0
    %3038 = vmatprep.subr.mxu0 0.0
    %3039 = vmatpush2.msra.mxu0 0.0
    %3040 = vmatprep.subr.mxu0 0.0
    %3041 = vmatpush2.msra.mxu0 0.0
    %3042 = vmatprep.subr.mxu0 0.0
    %3043 = vmatpush2.msra.mxu0 0.0
    %3044 = vmatprep.subr.mxu0 0.0
    %3045 = vmatpush2.msra.mxu0 0.0
    %3046 = vmatprep.subr.mxu0 0.0
    %3047 = vmatpush2.msra.mxu0 0.0
    %3048 = vmatprep.subr.mxu0 0.0
    %3049 = vmatpush2.msra.mxu0 0.0
    %3050 = vmatprep.mubr.f32.mxu0 0.0
    %3051 = vmatmul.mubr.f32.gmra.mxu0 %v2975
    %v3052 = vpop.f32.mrf.mxu0
    %v3053 = vadd.f32 0.0, %v3052
    %v3054 = vpop.f32.mrf.mxu0
    %v3055 = vadd.f32 0.0, %v3054
    %3056 = vmatprep.mubr.f32.mxu0 0.0
    %3057 = vmatmul.mubr.f32.gmra.mxu0 %v2978
    %v3058 = vpop.f32.mrf.mxu0
    %v3059 = vadd.f32 0.0, %v3058
    %v3060 = vpop.f32.mrf.mxu0
    %v3061 = vadd.f32 0.0, %v3060
    %3062 = vmatprep.mubr.f32.mxu0 0.0
    %3063 = vmatmul.mubr.f32.gmra.mxu0 %v2981
    %v3064 = vpop.f32.mrf.mxu0
    %v3065 = vadd.f32 0.0, %v3064
    %v3066 = vpop.f32.mrf.mxu0
    %v3067 = vadd.f32 0.0, %v3066
    %3068 = vmatprep.mubr.f32.mxu0 0.0
    %3069 = vmatmul.mubr.f32.gmra.mxu0 %v2984
    %v3070 = vpop.f32.mrf.mxu0
    %v3071 = vadd.f32 0.0, %v3070
    %v3072 = vpop.f32.mrf.mxu0
    %v3073 = vadd.f32 0.0, %v3072
    %3074 = vdwg.mxu0
    %v3075 = vxor.u32 %v3053, 2147483648
    %v3076 = vxor.u32 %v3059, 2147483648
    %v3077 = vxor.u32 %v3065, 2147483648
    %v3078 = vxor.u32 %v3071, 2147483648
    %v3079 = vmul.f32 %v3075, 1.442695
    %v3080 = vpow.pop %v3079
    %v3081 = vmul.f32 %v3076, 1.442695
    %v3082 = vpow.pop %v3081
    %v3083 = vmul.f32 %v3077, 1.442695
    %v3084 = vpow.pop %v3083
    %v3085 = vmul.f32 %v3078, 1.442695
    %v3086 = vpow.pop %v3085
    %v3087 = vadd.f32 %v3080, 1.0
    %v3088 = vadd.f32 %v3082, 1.0
    %v3089 = vadd.f32 %v3084, 1.0
    %v3090 = vadd.f32 %v3086, 1.0
    %v3091 = vrcp.pop %v3087
    %v3092 = vmul.f32 1.0, %v3091
    %v3093 = vrcp.pop %v3088
    %v3094 = vmul.f32 1.0, %v3093
    %v3095 = vrcp.pop %v3089
    %v3096 = vmul.f32 1.0, %v3095
    %v3097 = vrcp.pop %v3090
    %v3098 = vmul.f32 1.0, %v3097
    %v3099 = vmul.f32 %v3053, %v3092
    %v3100 = vmul.f32 %v3059, %v3094
    %v3101 = vmul.f32 %v3065, %v3096
    %v3102 = vmul.f32 %v3071, %v3098
    %v3103 = vmul.f32 %v3099, %v3055
    %v3104 = vmul.f32 %v3100, %v3061
    %v3105 = vmul.f32 %v3101, %v3067
    %v3106 = vmul.f32 %v3102, %v3073
    %v3108 = vsel %vm294, %v3103, 0
    %v3111 = vsel %vm294, %v3104, 0
    %v3114 = vsel %vm294, %v3105, 0
    %v3117 = vsel %vm294, %v3106, 0
    %3119 = vmatprep.subr.mxu0 0.0
    %3120 = vmatpush1.msra.mxu0 0.0
    %3121 = vmatprep.subr.mxu0 0.0
    %3122 = vmatpush1.msra.mxu0 0.0
    %3123 = vmatprep.subr.mxu0 0.0
    %3124 = vmatpush1.msra.mxu0 0.0
    %3125 = vmatprep.subr.mxu0 0.0
    %3126 = vmatpush1.msra.mxu0 0.0
    %3127 = vmatprep.subr.mxu0 0.0
    %3128 = vmatpush1.msra.mxu0 %v2973
    %3129 = vmatprep.subr.mxu0 0.0
    %3130 = vmatpush1.msra.mxu0 %v2972
    %3131 = vmatprep.subr.mxu0 0.0
    %3132 = vmatpush1.msra.mxu0 %v2971
    %3133 = vmatprep.subr.mxu0 0.0
    %3134 = vmatpush1.msra.mxu0 %v2970
    %3135 = vmatprep.subr.mxu0 0.0
    %3136 = vmatpush1.msra.mxu0 %v2969
    %3137 = vmatprep.subr.mxu0 0.0
    %3138 = vmatpush1.msra.mxu0 %v2968
    %3139 = vmatprep.subr.mxu0 0.0
    %3140 = vmatpush1.msra.mxu0 %v2967
    %3141 = vmatprep.subr.mxu0 0.0
    %3142 = vmatpush1.msra.mxu0 %v2966
    %3143 = vmatprep.subr.mxu0 0.0
    %3144 = vmatpush1.msra.mxu0 %v2965
    %3145 = vmatprep.subr.mxu0 0.0
    %3146 = vmatpush1.msra.mxu0 %v2964
    %3147 = vmatprep.subr.mxu0 0.0
    %3148 = vmatpush1.msra.mxu0 %v2963
    %3149 = vmatprep.subr.mxu0 0.0
    %3150 = vmatpush1.msra.mxu0 %v2962
    %3151 = vmatprep.subr.mxu0 0.0
    %3152 = vmatpush2.msra.mxu0 0.0
    %3153 = vmatprep.subr.mxu0 0.0
    %3154 = vmatpush2.msra.mxu0 0.0
    %3155 = vmatprep.subr.mxu0 0.0
    %3156 = vmatpush2.msra.mxu0 0.0
    %3157 = vmatprep.subr.mxu0 0.0
    %3158 = vmatpush2.msra.mxu0 0.0
    %3159 = vmatprep.subr.mxu0 0.0
    %3160 = vmatpush2.msra.mxu0 0.0
    %3161 = vmatprep.subr.mxu0 0.0
    %3162 = vmatpush2.msra.mxu0 0.0
    %3163 = vmatprep.subr.mxu0 0.0
    %3164 = vmatpush2.msra.mxu0 0.0
    %3165 = vmatprep.subr.mxu0 0.0
    %3166 = vmatpush2.msra.mxu0 0.0
    %3167 = vmatprep.subr.mxu0 0.0
    %3168 = vmatpush2.msra.mxu0 0.0
    %3169 = vmatprep.subr.mxu0 0.0
    %3170 = vmatpush2.msra.mxu0 0.0
    %3171 = vmatprep.subr.mxu0 0.0
    %3172 = vmatpush2.msra.mxu0 0.0
    %3173 = vmatprep.subr.mxu0 0.0
    %3174 = vmatpush2.msra.mxu0 0.0
    %3175 = vmatprep.subr.mxu0 0.0
    %3176 = vmatpush2.msra.mxu0 0.0
    %3177 = vmatprep.subr.mxu0 0.0
    %3178 = vmatpush2.msra.mxu0 0.0
    %3179 = vmatprep.subr.mxu0 0.0
    %3180 = vmatpush2.msra.mxu0 0.0
    %3181 = vmatprep.subr.mxu0 0.0
    %3182 = vmatpush2.msra.mxu0 0.0
    %3183 = vmatprep.mubr.f32.mxu0 0.0
    %3184 = vmatmul.mubr.f32.gmra.mxu0 %v3108
    %v3185 = vpop.f32.mrf.mxu0
    %v3186 = vadd.f32 0.0, %v3185
    %v3187 = vpop.f32.mrf.mxu0
    %3188 = vmatprep.mubr.f32.mxu0 0.0
    %3189 = vmatmul.mubr.f32.gmra.mxu0 %v3111
    %v3190 = vpop.f32.mrf.mxu0
    %v3191 = vadd.f32 0.0, %v3190
    %v3192 = vpop.f32.mrf.mxu0
    %3193 = vmatprep.mubr.f32.mxu0 0.0
    %3194 = vmatmul.mubr.f32.gmra.mxu0 %v3114
    %v3195 = vpop.f32.mrf.mxu0
    %v3196 = vadd.f32 0.0, %v3195
    %v3197 = vpop.f32.mrf.mxu0
    %3198 = vmatprep.mubr.f32.mxu0 0.0
    %3199 = vmatmul.mubr.f32.gmra.mxu0 %v3117
    %v3200 = vpop.f32.mrf.mxu0
    %v3201 = vadd.f32 0.0, %v3200
    %v3202 = vpop.f32.mrf.mxu0
    %3203 = vdwg.mxu0
    %v3204 = vadd.f32 %v2896, %v3186
    %v3205 = vadd.f32 %v2897, %v3191
    %v3206 = vadd.f32 %v2898, %v3196
    %v3207 = vadd.f32 %v2899, %v3201
    %v3208 = vld [vmem:[%s15] sm:$0xff]
    %v3209 = vld [vmem:[%s16] sm:$0xff]
    %v3210 = vld [vmem:[%s16 + $0x8] sm:$0xff]
    %v3211 = vld [vmem:[%s16 + $0x10] sm:$0xff]
    %v3212 = vld [vmem:[%s16 + $0x18] sm:$0xff]
    %v3213 = vld [vmem:[%s16 + $0x20] sm:$0xff]
    %v3214 = vld [vmem:[%s16 + $0x28] sm:$0xff]
    %v3215 = vld [vmem:[%s16 + $0x30] sm:$0xff]
    %v3216 = vld [vmem:[%s16 + $0x38] sm:$0xff]
    %v3217 = vld [vmem:[%s17] sm:$0x1]
    %v3219 = vlaneseq
    %v3220 = vshrl.u32 %v3219, 7
    %v3221 = vsub.s32 0, %v3220
    %v3222 = vrot.slane %v3217, %v3221
    %v3225 = vsel %vm525, %v3208, 0
    %3227 = vmatprep.subr.mxu0 0.0
    %3228 = vmatpush1.msra.mxu0 0.0
    %3229 = vmatprep.subr.mxu0 0.0
    %3230 = vmatpush1.msra.mxu0 0.0
    %3231 = vmatprep.subr.mxu0 0.0
    %3232 = vmatpush1.msra.mxu0 0.0
    %3233 = vmatprep.subr.mxu0 0.0
    %3234 = vmatpush1.msra.mxu0 0.0
    %3235 = vmatprep.subr.mxu0 0.0
    %3236 = vmatpush1.msra.mxu0 0.0
    %3237 = vmatprep.subr.mxu0 0.0
    %3238 = vmatpush1.msra.mxu0 0.0
    %3239 = vmatprep.subr.mxu0 0.0
    %3240 = vmatpush1.msra.mxu0 0.0
    %3241 = vmatprep.subr.mxu0 0.0
    %3242 = vmatpush1.msra.mxu0 0.0
    %3243 = vmatprep.subr.mxu0 0.0
    %3244 = vmatpush1.msra.mxu0 %v3216
    %3245 = vmatprep.subr.mxu0 0.0
    %3246 = vmatpush1.msra.mxu0 %v3215
    %3247 = vmatprep.subr.mxu0 0.0
    %3248 = vmatpush1.msra.mxu0 %v3214
    %3249 = vmatprep.subr.mxu0 0.0
    %3250 = vmatpush1.msra.mxu0 %v3213
    %3251 = vmatprep.subr.mxu0 0.0
    %3252 = vmatpush1.msra.mxu0 %v3212
    %3253 = vmatprep.subr.mxu0 0.0
    %3254 = vmatpush1.msra.mxu0 %v3211
    %3255 = vmatprep.subr.mxu0 0.0
    %3256 = vmatpush1.msra.mxu0 %v3210
    %3257 = vmatprep.subr.mxu0 0.0
    %3258 = vmatpush1.msra.mxu0 %v3209
    %3259 = vmatprep.subr.mxu0 0.0
    %3260 = vmatpush2.msra.mxu0 0.0
    %3261 = vmatprep.subr.mxu0 0.0
    %3262 = vmatpush2.msra.mxu0 0.0
    %3263 = vmatprep.subr.mxu0 0.0
    %3264 = vmatpush2.msra.mxu0 0.0
    %3265 = vmatprep.subr.mxu0 0.0
    %3266 = vmatpush2.msra.mxu0 0.0
    %3267 = vmatprep.subr.mxu0 0.0
    %3268 = vmatpush2.msra.mxu0 0.0
    %3269 = vmatprep.subr.mxu0 0.0
    %3270 = vmatpush2.msra.mxu0 0.0
    %3271 = vmatprep.subr.mxu0 0.0
    %3272 = vmatpush2.msra.mxu0 0.0
    %3273 = vmatprep.subr.mxu0 0.0
    %3274 = vmatpush2.msra.mxu0 0.0
    %3275 = vmatprep.subr.mxu0 0.0
    %3276 = vmatpush2.msra.mxu0 0.0
    %3277 = vmatprep.subr.mxu0 0.0
    %3278 = vmatpush2.msra.mxu0 0.0
    %3279 = vmatprep.subr.mxu0 0.0
    %3280 = vmatpush2.msra.mxu0 0.0
    %3281 = vmatprep.subr.mxu0 0.0
    %3282 = vmatpush2.msra.mxu0 0.0
    %3283 = vmatprep.subr.mxu0 0.0
    %3284 = vmatpush2.msra.mxu0 0.0
    %3285 = vmatprep.subr.mxu0 0.0
    %3286 = vmatpush2.msra.mxu0 0.0
    %3287 = vmatprep.subr.mxu0 0.0
    %3288 = vmatpush2.msra.mxu0 0.0
    %3289 = vmatprep.subr.mxu0 0.0
    %3290 = vmatpush2.msra.mxu0 0.0
    %3291 = vmatprep.mubr.f32.mxu0 0.0
    %3292 = vmatmul.mubr.f32.gmra.mxu0 %v3225
    %v3293 = vpop.f32.mrf.mxu0
    %v3294 = vadd.f32 %v3222, %v3293
    %v3295 = vpop.f32.mrf.mxu0
    %3296 = vdwg.mxu0
    %v3297 = vld [vmem:[%s18] sm:$0xff]
    %v3298 = vld [vmem:[%s18 + $0x8] sm:$0xff]
    %v3299 = vld [vmem:[%s18 + $0x10] sm:$0xff]
    %v3300 = vld [vmem:[%s18 + $0x18] sm:$0xff]
    %v3301 = vld [vmem:[%s18 + $0x20] sm:$0xff]
    %v3302 = vld [vmem:[%s18 + $0x28] sm:$0xff]
    %v3303 = vld [vmem:[%s18 + $0x30] sm:$0xff]
    %v3304 = vld [vmem:[%s18 + $0x38] sm:$0xff]
    %v3305 = vld [vmem:[%s18 + $0x40] sm:$0xff]
    %v3306 = vld [vmem:[%s18 + $0x48] sm:$0xff]
    %v3307 = vld [vmem:[%s18 + $0x50] sm:$0xff]
    %v3308 = vld [vmem:[%s18 + $0x58] sm:$0xff]
    %v3309 = vld [vmem:[%s18 + $0x60] sm:$0xff]
    %v3310 = vld [vmem:[%s18 + $0x68] sm:$0xff]
    %v3311 = vld [vmem:[%s18 + $0x70] sm:$0xff]
    %v3312 = vld [vmem:[%s18 + $0x78] sm:$0xff]
    %v3313 = vld [vmem:[%s19] sm:$0x3]
    %v3315 = vlaneseq
    %v3316 = vshrl.u32 %v3315, 7
    %v3317 = vsub.s32 0, %v3316
    %v3318 = vrot.slane %v3313, %v3317
    %v3319 = vlaneseq
    %v3320 = vshrl.u32 %v3319, 7
    %v3321 = vsub.s32 1, %v3320
    %v3322 = vrot.slane %v3313, %v3321
    %v3326 = vsel %vm525, %v3204, 0
    %v3329 = vsel %vm525, %v3205, 0
    %v3332 = vsel %vm525, %v3206, 0
    %v3335 = vsel %vm525, %v3207, 0
    %3337 = vmatprep.subr.mxu0 0.0
    %3338 = vmatpush1.msra.mxu0 0.0
    %3339 = vmatprep.subr.mxu0 0.0
    %3340 = vmatpush1.msra.mxu0 0.0
    %3341 = vmatprep.subr.mxu0 0.0
    %3342 = vmatpush1.msra.mxu0 0.0
    %3343 = vmatprep.subr.mxu0 0.0
    %3344 = vmatpush1.msra.mxu0 0.0
    %3345 = vmatprep.subr.mxu0 0.0
    %3346 = vmatpush1.msra.mxu0 0.0
    %3347 = vmatprep.subr.mxu0 0.0
    %3348 = vmatpush1.msra.mxu0 0.0
    %3349 = vmatprep.subr.mxu0 0.0
    %3350 = vmatpush1.msra.mxu0 0.0
    %3351 = vmatprep.subr.mxu0 0.0
    %3352 = vmatpush1.msra.mxu0 0.0
    %3353 = vmatprep.subr.mxu0 %v3312
    %3354 = vmatpush1.msra.mxu0 %v3311
    %3355 = vmatprep.subr.mxu0 %v3310
    %3356 = vmatpush1.msra.mxu0 %v3309
    %3357 = vmatprep.subr.mxu0 %v3308
    %3358 = vmatpush1.msra.mxu0 %v3307
    %3359 = vmatprep.subr.mxu0 %v3306
    %3360 = vmatpush1.msra.mxu0 %v3305
    %3361 = vmatprep.subr.mxu0 %v3304
    %3362 = vmatpush1.msra.mxu0 %v3303
    %3363 = vmatprep.subr.mxu0 %v3302
    %3364 = vmatpush1.msra.mxu0 %v3301
    %3365 = vmatprep.subr.mxu0 %v3300
    %3366 = vmatpush1.msra.mxu0 %v3299
    %3367 = vmatprep.subr.mxu0 %v3298
    %3368 = vmatpush1.msra.mxu0 %v3297
    %3369 = vmatprep.subr.mxu0 0.0
    %3370 = vmatpush2.msra.mxu0 0.0
    %3371 = vmatprep.subr.mxu0 0.0
    %3372 = vmatpush2.msra.mxu0 0.0
    %3373 = vmatprep.subr.mxu0 0.0
    %3374 = vmatpush2.msra.mxu0 0.0
    %3375 = vmatprep.subr.mxu0 0.0
    %3376 = vmatpush2.msra.mxu0 0.0
    %3377 = vmatprep.subr.mxu0 0.0
    %3378 = vmatpush2.msra.mxu0 0.0
    %3379 = vmatprep.subr.mxu0 0.0
    %3380 = vmatpush2.msra.mxu0 0.0
    %3381 = vmatprep.subr.mxu0 0.0
    %3382 = vmatpush2.msra.mxu0 0.0
    %3383 = vmatprep.subr.mxu0 0.0
    %3384 = vmatpush2.msra.mxu0 0.0
    %3385 = vmatprep.subr.mxu0 0.0
    %3386 = vmatpush2.msra.mxu0 0.0
    %3387 = vmatprep.subr.mxu0 0.0
    %3388 = vmatpush2.msra.mxu0 0.0
    %3389 = vmatprep.subr.mxu0 0.0
    %3390 = vmatpush2.msra.mxu0 0.0
    %3391 = vmatprep.subr.mxu0 0.0
    %3392 = vmatpush2.msra.mxu0 0.0
    %3393 = vmatprep.subr.mxu0 0.0
    %3394 = vmatpush2.msra.mxu0 0.0
    %3395 = vmatprep.subr.mxu0 0.0
    %3396 = vmatpush2.msra.mxu0 0.0
    %3397 = vmatprep.subr.mxu0 0.0
    %3398 = vmatpush2.msra.mxu0 0.0
    %3399 = vmatprep.subr.mxu0 0.0
    %3400 = vmatpush2.msra.mxu0 0.0
    %3401 = vmatprep.mubr.f32.mxu0 0.0
    %3402 = vmatmul.mubr.f32.gmra.mxu0 %v3326
    %v3403 = vpop.f32.mrf.mxu0
    %v3404 = vadd.f32 %v3318, %v3403
    %v3405 = vpop.f32.mrf.mxu0
    %v3406 = vadd.f32 %v3322, %v3405
    %3407 = vmatprep.mubr.f32.mxu0 0.0
    %3408 = vmatmul.mubr.f32.gmra.mxu0 %v3329
    %v3409 = vpop.f32.mrf.mxu0
    %v3410 = vadd.f32 %v3318, %v3409
    %v3411 = vpop.f32.mrf.mxu0
    %v3412 = vadd.f32 %v3322, %v3411
    %3413 = vmatprep.mubr.f32.mxu0 0.0
    %3414 = vmatmul.mubr.f32.gmra.mxu0 %v3332
    %v3415 = vpop.f32.mrf.mxu0
    %v3416 = vadd.f32 %v3318, %v3415
    %v3417 = vpop.f32.mrf.mxu0
    %v3418 = vadd.f32 %v3322, %v3417
    %3419 = vmatprep.mubr.f32.mxu0 0.0
    %3420 = vmatmul.mubr.f32.gmra.mxu0 %v3335
    %v3421 = vpop.f32.mrf.mxu0
    %v3422 = vadd.f32 %v3318, %v3421
    %v3423 = vpop.f32.mrf.mxu0
    %v3424 = vadd.f32 %v3322, %v3423
    %3425 = vdwg.mxu0
    %v3426 = vld [vmem:[%s26] sm:$0xff]
    %v3428 = vsel %vm160, %v3294, 0
    %v3431 = vsel %vm160, %v3404, 0
    %v3434 = vsel %vm160, %v3410, 0
    %v3437 = vsel %vm160, %v3416, 0
    %v3440 = vsel %vm160, %v3422, 0
    %3442 = vmatprep.subr.mxu0 0.0
    %3443 = vmatpush1.xpose.msra.mxu0 0.0
    %3444 = vmatprep.subr.mxu0 0.0
    %3445 = vmatpush1.xpose.msra.mxu0 0.0
    %3446 = vmatprep.subr.mxu0 0.0
    %3447 = vmatpush1.xpose.msra.mxu0 0.0
    %3448 = vmatprep.subr.mxu0 0.0
    %3449 = vmatpush1.xpose.msra.mxu0 0.0
    %3450 = vmatprep.subr.mxu0 0.0
    %3451 = vmatpush1.xpose.msra.mxu0 0.0
    %3452 = vmatprep.subr.mxu0 0.0
    %3453 = vmatpush1.xpose.msra.mxu0 0.0
    %3454 = vmatprep.subr.mxu0 0.0
    %3455 = vmatpush1.xpose.msra.mxu0 0.0
    %3456 = vmatprep.subr.mxu0 0.0
    %3457 = vmatpush1.xpose.msra.mxu0 0.0
    %3458 = vmatprep.subr.mxu0 0.0
    %3459 = vmatpush1.xpose.msra.mxu0 0.0
    %3460 = vmatprep.subr.mxu0 0.0
    %3461 = vmatpush1.xpose.msra.mxu0 0.0
    %3462 = vmatprep.subr.mxu0 0.0
    %3463 = vmatpush1.xpose.msra.mxu0 0.0
    %3464 = vmatprep.subr.mxu0 0.0
    %3465 = vmatpush1.xpose.msra.mxu0 0.0
    %3466 = vmatprep.subr.mxu0 0.0
    %3467 = vmatpush1.xpose.msra.mxu0 %v3440
    %3468 = vmatprep.subr.mxu0 0.0
    %3469 = vmatpush1.xpose.msra.mxu0 %v3437
    %3470 = vmatprep.subr.mxu0 0.0
    %3471 = vmatpush1.xpose.msra.mxu0 %v3434
    %3472 = vmatprep.subr.mxu0 0.0
    %3473 = vmatpush1.xpose.msra.mxu0 %v3431
    %3474 = vmatprep.subr.mxu0 0.0
    %3475 = vmatpush2.xpose.msra.mxu0 0.0
    %3476 = vmatprep.subr.mxu0 0.0
    %3477 = vmatpush2.xpose.msra.mxu0 0.0
    %3478 = vmatprep.subr.mxu0 0.0
    %3479 = vmatpush2.xpose.msra.mxu0 0.0
    %3480 = vmatprep.subr.mxu0 0.0
    %3481 = vmatpush2.xpose.msra.mxu0 0.0
    %3482 = vmatprep.subr.mxu0 0.0
    %3483 = vmatpush2.xpose.msra.mxu0 0.0
    %3484 = vmatprep.subr.mxu0 0.0
    %3485 = vmatpush2.xpose.msra.mxu0 0.0
    %3486 = vmatprep.subr.mxu0 0.0
    %3487 = vmatpush2.xpose.msra.mxu0 0.0
    %3488 = vmatprep.subr.mxu0 0.0
    %3489 = vmatpush2.xpose.msra.mxu0 0.0
    %3490 = vmatprep.subr.mxu0 0.0
    %3491 = vmatpush2.xpose.msra.mxu0 0.0
    %3492 = vmatprep.subr.mxu0 0.0
    %3493 = vmatpush2.xpose.msra.mxu0 0.0
    %3494 = vmatprep.subr.mxu0 0.0
    %3495 = vmatpush2.xpose.msra.mxu0 0.0
    %3496 = vmatprep.subr.mxu0 0.0
    %3497 = vmatpush2.xpose.msra.mxu0 0.0
    %3498 = vmatprep.subr.mxu0 0.0
    %3499 = vmatpush2.xpose.msra.mxu0 0.0
    %3500 = vmatprep.subr.mxu0 0.0
    %3501 = vmatpush2.xpose.msra.mxu0 0.0
    %3502 = vmatprep.subr.mxu0 0.0
    %3503 = vmatpush2.xpose.msra.mxu0 0.0
    %3504 = vmatprep.subr.mxu0 0.0
    %3505 = vmatpush2.xpose.msra.mxu0 0.0
    %3506 = vmatprep.mubr.f32.mxu0 0.0
    %3507 = vmatmul.mubr.f32.gmra.mxu0 %v3428
    %v3508 = vpop.f32.mrf.mxu0
    %v3509 = vadd.f32 %v3426, %v3508
    %v3510 = vpop.f32.mrf.mxu0
    %3511 = vdwg.mxu0
    %v3512 = vsel %vm160, %v3509, -inf
    %3513 = vmax.xlane.f32.xlu0 %v3512
    %v3514 = vpop.xlane.xlu0 %3513
    %v3515 = vsub.f32 %v3509, %v3514
    %v3516 = vmul.f32 %v3515, 1.442695
    %v3517 = vpow.pop %v3516
    %v3518 = vsel %vm160, %v3517, 0.0
    %3519 = vadd.xlane.f32.xlu0 %v3518
    %v3520 = vpop.xlane.xlu0 %3519
    %v3522 = vsel %vm160, %v3517, 0
    %3524 = vmatprep.subr.mxu0 0.0
    %3525 = vmatpush1.msra.mxu0 0.0
    %3526 = vmatprep.subr.mxu0 0.0
    %3527 = vmatpush1.msra.mxu0 0.0
    %3528 = vmatprep.subr.mxu0 0.0
    %3529 = vmatpush1.msra.mxu0 0.0
    %3530 = vmatprep.subr.mxu0 0.0
    %3531 = vmatpush1.msra.mxu0 0.0
    %3532 = vmatprep.subr.mxu0 0.0
    %3533 = vmatpush1.msra.mxu0 0.0
    %3534 = vmatprep.subr.mxu0 0.0
    %3535 = vmatpush1.msra.mxu0 0.0
    %3536 = vmatprep.subr.mxu0 0.0
    %3537 = vmatpush1.msra.mxu0 0.0
    %3538 = vmatprep.subr.mxu0 0.0
    %3539 = vmatpush1.msra.mxu0 0.0
    %3540 = vmatprep.subr.mxu0 0.0
    %3541 = vmatpush1.msra.mxu0 0.0
    %3542 = vmatprep.subr.mxu0 0.0
    %3543 = vmatpush1.msra.mxu0 0.0
    %3544 = vmatprep.subr.mxu0 0.0
    %3545 = vmatpush1.msra.mxu0 0.0
    %3546 = vmatprep.subr.mxu0 0.0
    %3547 = vmatpush1.msra.mxu0 0.0
    %3548 = vmatprep.subr.mxu0 0.0
    %3549 = vmatpush1.msra.mxu0 %v3424
    %3550 = vmatprep.subr.mxu0 0.0
    %3551 = vmatpush1.msra.mxu0 %v3418
    %3552 = vmatprep.subr.mxu0 0.0
    %3553 = vmatpush1.msra.mxu0 %v3412
    %3554 = vmatprep.subr.mxu0 0.0
    %3555 = vmatpush1.msra.mxu0 %v3406
    %3556 = vmatprep.subr.mxu0 0.0
    %3557 = vmatpush2.msra.mxu0 0.0
    %3558 = vmatprep.subr.mxu0 0.0
    %3559 = vmatpush2.msra.mxu0 0.0
    %3560 = vmatprep.subr.mxu0 0.0
    %3561 = vmatpush2.msra.mxu0 0.0
    %3562 = vmatprep.subr.mxu0 0.0
    %3563 = vmatpush2.msra.mxu0 0.0
    %3564 = vmatprep.subr.mxu0 0.0
    %3565 = vmatpush2.msra.mxu0 0.0
    %3566 = vmatprep.subr.mxu0 0.0
    %3567 = vmatpush2.msra.mxu0 0.0
    %3568 = vmatprep.subr.mxu0 0.0
    %3569 = vmatpush2.msra.mxu0 0.0
    %3570 = vmatprep.subr.mxu0 0.0
    %3571 = vmatpush2.msra.mxu0 0.0
    %3572 = vmatprep.subr.mxu0 0.0
    %3573 = vmatpush2.msra.mxu0 0.0
    %3574 = vmatprep.subr.mxu0 0.0
    %3575 = vmatpush2.msra.mxu0 0.0
    %3576 = vmatprep.subr.mxu0 0.0
    %3577 = vmatpush2.msra.mxu0 0.0
    %3578 = vmatprep.subr.mxu0 0.0
    %3579 = vmatpush2.msra.mxu0 0.0
    %3580 = vmatprep.subr.mxu0 0.0
    %3581 = vmatpush2.msra.mxu0 0.0
    %3582 = vmatprep.subr.mxu0 0.0
    %3583 = vmatpush2.msra.mxu0 0.0
    %3584 = vmatprep.subr.mxu0 0.0
    %3585 = vmatpush2.msra.mxu0 0.0
    %3586 = vmatprep.subr.mxu0 0.0
    %3587 = vmatpush2.msra.mxu0 0.0
    %3588 = vmatprep.mubr.f32.mxu0 0.0
    %3589 = vmatmul.mubr.f32.gmra.mxu0 %v3522
    %v3590 = vpop.f32.mrf.mxu0
    %v3591 = vadd.f32 0.0, %v3590
    %v3592 = vpop.f32.mrf.mxu0
    %3593 = vdwg.mxu0
    %v3594 = vrcp.pop %v3520
    %v3595 = vmul.f32 %v3591, %v3594
    %3596 = vrot.lane.b32.xlu0 %v3294, 96
    %v3597 = vpop.permute.xlu0 %3596
    %3598 = vrot.lane.b32.xlu0 %v3404, 96
    %v3599 = vpop.permute.xlu0 %3598
    %3600 = vrot.lane.b32.xlu0 %v3410, 96
    %v3601 = vpop.permute.xlu0 %3600
    %3602 = vrot.lane.b32.xlu0 %v3416, 96
    %v3603 = vpop.permute.xlu0 %3602
    %3604 = vrot.lane.b32.xlu0 %v3422, 96
    %v3605 = vpop.permute.xlu0 %3604
    %v3606 = vsel %vm160, %v3597, 0
    %v3608 = vsel %vm160, %v3599, 0
    %v3610 = vsel %vm160, %v3601, 0
    %v3612 = vsel %vm160, %v3603, 0
    %v3614 = vsel %vm160, %v3605, 0
    %3616 = vmatprep.subr.mxu0 0.0
    %3617 = vmatpush1.xpose.msra.mxu0 0.0
    %3618 = vmatprep.subr.mxu0 0.0
    %3619 = vmatpush1.xpose.msra.mxu0 0.0
    %3620 = vmatprep.subr.mxu0 0.0
    %3621 = vmatpush1.xpose.msra.mxu0 0.0
    %3622 = vmatprep.subr.mxu0 0.0
    %3623 = vmatpush1.xpose.msra.mxu0 0.0
    %3624 = vmatprep.subr.mxu0 0.0
    %3625 = vmatpush1.xpose.msra.mxu0 0.0
    %3626 = vmatprep.subr.mxu0 0.0
    %3627 = vmatpush1.xpose.msra.mxu0 0.0
    %3628 = vmatprep.subr.mxu0 0.0
    %3629 = vmatpush1.xpose.msra.mxu0 0.0
    %3630 = vmatprep.subr.mxu0 0.0
    %3631 = vmatpush1.xpose.msra.mxu0 0.0
    %3632 = vmatprep.subr.mxu0 0.0
    %3633 = vmatpush1.xpose.msra.mxu0 0.0
    %3634 = vmatprep.subr.mxu0 0.0
    %3635 = vmatpush1.xpose.msra.mxu0 0.0
    %3636 = vmatprep.subr.mxu0 0.0
    %3637 = vmatpush1.xpose.msra.mxu0 0.0
    %3638 = vmatprep.subr.mxu0 0.0
    %3639 = vmatpush1.xpose.msra.mxu0 0.0
    %3640 = vmatprep.subr.mxu0 0.0
    %3641 = vmatpush1.xpose.msra.mxu0 %v3614
    %3642 = vmatprep.subr.mxu0 0.0
    %3643 = vmatpush1.xpose.msra.mxu0 %v3612
    %3644 = vmatprep.subr.mxu0 0.0
    %3645 = vmatpush1.xpose.msra.mxu0 %v3610
    %3646 = vmatprep.subr.mxu0 0.0
    %3647 = vmatpush1.xpose.msra.mxu0 %v3608
    %3648 = vmatprep.subr.mxu0 0.0
    %3649 = vmatpush2.xpose.msra.mxu0 0.0
    %3650 = vmatprep.subr.mxu0 0.0
    %3651 = vmatpush2.xpose.msra.mxu0 0.0
    %3652 = vmatprep.subr.mxu0 0.0
    %3653 = vmatpush2.xpose.msra.mxu0 0.0
    %3654 = vmatprep.subr.mxu0 0.0
    %3655 = vmatpush2.xpose.msra.mxu0 0.0
    %3656 = vmatprep.subr.mxu0 0.0
    %3657 = vmatpush2.xpose.msra.mxu0 0.0
    %3658 = vmatprep.subr.mxu0 0.0
    %3659 = vmatpush2.xpose.msra.mxu0 0.0
    %3660 = vmatprep.subr.mxu0 0.0
    %3661 = vmatpush2.xpose.msra.mxu0 0.0
    %3662 = vmatprep.subr.mxu0 0.0
    %3663 = vmatpush2.xpose.msra.mxu0 0.0
    %3664 = vmatprep.subr.mxu0 0.0
    %3665 = vmatpush2.xpose.msra.mxu0 0.0
    %3666 = vmatprep.subr.mxu0 0.0
    %3667 = vmatpush2.xpose.msra.mxu0 0.0
    %3668 = vmatprep.subr.mxu0 0.0
    %3669 = vmatpush2.xpose.msra.mxu0 0.0
    %3670 = vmatprep.subr.mxu0 0.0
    %3671 = vmatpush2.xpose.msra.mxu0 0.0
    %3672 = vmatprep.subr.mxu0 0.0
    %3673 = vmatpush2.xpose.msra.mxu0 0.0
    %3674 = vmatprep.subr.mxu0 0.0
    %3675 = vmatpush2.xpose.msra.mxu0 0.0
    %3676 = vmatprep.subr.mxu0 0.0
    %3677 = vmatpush2.xpose.msra.mxu0 0.0
    %3678 = vmatprep.subr.mxu0 0.0
    %3679 = vmatpush2.xpose.msra.mxu0 0.0
    %3680 = vmatprep.mubr.f32.mxu0 0.0
    %3681 = vmatmul.mubr.f32.gmra.mxu0 %v3606
    %v3682 = vpop.f32.mrf.mxu0
    %v3683 = vadd.f32 %v3426, %v3682
    %v3684 = vpop.f32.mrf.mxu0
    %3685 = vdwg.mxu0
    %v3686 = vsel %vm160, %v3683, -inf
    %3687 = vmax.xlane.f32.xlu0 %v3686
    %v3688 = vpop.xlane.xlu0 %3687
    %v3689 = vsub.f32 %v3683, %v3688
    %v3690 = vmul.f32 %v3689, 1.442695
    %v3691 = vpow.pop %v3690
    %v3692 = vsel %vm160, %v3691, 0.0
    %3693 = vadd.xlane.f32.xlu0 %v3692
    %v3694 = vpop.xlane.xlu0 %3693
    %3699 = vrot.lane.b32.xlu0 %v3406, 96
    %v3700 = vpop.permute.xlu0 %3699
    %3701 = vrot.lane.b32.xlu0 %v3412, 96
    %v3702 = vpop.permute.xlu0 %3701
    %3703 = vrot.lane.b32.xlu0 %v3418, 96
    %v3704 = vpop.permute.xlu0 %3703
    %3705 = vrot.lane.b32.xlu0 %v3424, 96
    %v3706 = vpop.permute.xlu0 %3705
    %v3712 = vsel %vm160, %v3691, 0
    %3714 = vmatprep.subr.mxu0 0.0
    %3715 = vmatpush1.msra.mxu0 0.0
    %3716 = vmatprep.subr.mxu0 0.0
    %3717 = vmatpush1.msra.mxu0 0.0
    %3718 = vmatprep.subr.mxu0 0.0
    %3719 = vmatpush1.msra.mxu0 0.0
    %3720 = vmatprep.subr.mxu0 0.0
    %3721 = vmatpush1.msra.mxu0 0.0
    %3722 = vmatprep.subr.mxu0 0.0
    %3723 = vmatpush1.msra.mxu0 0.0
    %3724 = vmatprep.subr.mxu0 0.0
    %3725 = vmatpush1.msra.mxu0 0.0
    %3726 = vmatprep.subr.mxu0 0.0
    %3727 = vmatpush1.msra.mxu0 0.0
    %3728 = vmatprep.subr.mxu0 0.0
    %3729 = vmatpush1.msra.mxu0 0.0
    %3730 = vmatprep.subr.mxu0 0.0
    %3731 = vmatpush1.msra.mxu0 0.0
    %3732 = vmatprep.subr.mxu0 0.0
    %3733 = vmatpush1.msra.mxu0 0.0
    %3734 = vmatprep.subr.mxu0 0.0
    %3735 = vmatpush1.msra.mxu0 0.0
    %3736 = vmatprep.subr.mxu0 0.0
    %3737 = vmatpush1.msra.mxu0 0.0
    %3738 = vmatprep.subr.mxu0 0.0
    %3739 = vmatpush1.msra.mxu0 %v3706
    %3740 = vmatprep.subr.mxu0 0.0
    %3741 = vmatpush1.msra.mxu0 %v3704
    %3742 = vmatprep.subr.mxu0 0.0
    %3743 = vmatpush1.msra.mxu0 %v3702
    %3744 = vmatprep.subr.mxu0 0.0
    %3745 = vmatpush1.msra.mxu0 %v3700
    %3746 = vmatprep.subr.mxu0 0.0
    %3747 = vmatpush2.msra.mxu0 0.0
    %3748 = vmatprep.subr.mxu0 0.0
    %3749 = vmatpush2.msra.mxu0 0.0
    %3750 = vmatprep.subr.mxu0 0.0
    %3751 = vmatpush2.msra.mxu0 0.0
    %3752 = vmatprep.subr.mxu0 0.0
    %3753 = vmatpush2.msra.mxu0 0.0
    %3754 = vmatprep.subr.mxu0 0.0
    %3755 = vmatpush2.msra.mxu0 0.0
    %3756 = vmatprep.subr.mxu0 0.0
    %3757 = vmatpush2.msra.mxu0 0.0
    %3758 = vmatprep.subr.mxu0 0.0
    %3759 = vmatpush2.msra.mxu0 0.0
    %3760 = vmatprep.subr.mxu0 0.0
    %3761 = vmatpush2.msra.mxu0 0.0
    %3762 = vmatprep.subr.mxu0 0.0
    %3763 = vmatpush2.msra.mxu0 0.0
    %3764 = vmatprep.subr.mxu0 0.0
    %3765 = vmatpush2.msra.mxu0 0.0
    %3766 = vmatprep.subr.mxu0 0.0
    %3767 = vmatpush2.msra.mxu0 0.0
    %3768 = vmatprep.subr.mxu0 0.0
    %3769 = vmatpush2.msra.mxu0 0.0
    %3770 = vmatprep.subr.mxu0 0.0
    %3771 = vmatpush2.msra.mxu0 0.0
    %3772 = vmatprep.subr.mxu0 0.0
    %3773 = vmatpush2.msra.mxu0 0.0
    %3774 = vmatprep.subr.mxu0 0.0
    %3775 = vmatpush2.msra.mxu0 0.0
    %3776 = vmatprep.subr.mxu0 0.0
    %3777 = vmatpush2.msra.mxu0 0.0
    %3778 = vmatprep.mubr.f32.mxu0 0.0
    %3779 = vmatmul.mubr.f32.gmra.mxu0 %v3712
    %v3780 = vpop.f32.mrf.mxu0
    %v3781 = vadd.f32 0.0, %v3780
    %v3782 = vpop.f32.mrf.mxu0
    %3783 = vdwg.mxu0
    %v3784 = vrcp.pop %v3694
    %v3785 = vmul.f32 %v3781, %v3784
    %3787 = vrot.lane.b32.xlu0 %v3785, 32
    %v3788 = vpop.permute.xlu0 %3787
    %v3790 = vsel %vm160, %v3595, %v3788
    %v3791 = vld [vmem:[%s20] sm:$0xff]
    %v3792 = vld [vmem:[%s20 + $0x8] sm:$0xff]
    %v3793 = vld [vmem:[%s20 + $0x10] sm:$0xff]
    %v3794 = vld [vmem:[%s20 + $0x18] sm:$0xff]
    %v3795 = vld [vmem:[%s20 + $0x20] sm:$0xff]
    %v3796 = vld [vmem:[%s20 + $0x28] sm:$0xff]
    %v3797 = vld [vmem:[%s20 + $0x30] sm:$0xff]
    %v3798 = vld [vmem:[%s20 + $0x38] sm:$0xff]
    %v3799 = vld [vmem:[#allocation5] sm:$0x1]
    %v3801 = vlaneseq
    %v3802 = vshrl.u32 %v3801, 7
    %v3803 = vsub.s32 0, %v3802
    %v3804 = vrot.slane %v3799, %v3803
    %v3807 = vsel %vm525, %v3790, 0
    %3809 = vmatprep.subr.mxu0 0.0
    %3810 = vmatpush1.msra.mxu0 0.0
    %3811 = vmatprep.subr.mxu0 0.0
    %3812 = vmatpush1.msra.mxu0 0.0
    %3813 = vmatprep.subr.mxu0 0.0
    %3814 = vmatpush1.msra.mxu0 0.0
    %3815 = vmatprep.subr.mxu0 0.0
    %3816 = vmatpush1.msra.mxu0 0.0
    %3817 = vmatprep.subr.mxu0 0.0
    %3818 = vmatpush1.msra.mxu0 0.0
    %3819 = vmatprep.subr.mxu0 0.0
    %3820 = vmatpush1.msra.mxu0 0.0
    %3821 = vmatprep.subr.mxu0 0.0
    %3822 = vmatpush1.msra.mxu0 0.0
    %3823 = vmatprep.subr.mxu0 0.0
    %3824 = vmatpush1.msra.mxu0 0.0
    %3825 = vmatprep.subr.mxu0 0.0
    %3826 = vmatpush1.msra.mxu0 %v3798
    %3827 = vmatprep.subr.mxu0 0.0
    %3828 = vmatpush1.msra.mxu0 %v3797
    %3829 = vmatprep.subr.mxu0 0.0
    %3830 = vmatpush1.msra.mxu0 %v3796
    %3831 = vmatprep.subr.mxu0 0.0
    %3832 = vmatpush1.msra.mxu0 %v3795
    %3833 = vmatprep.subr.mxu0 0.0
    %3834 = vmatpush1.msra.mxu0 %v3794
    %3835 = vmatprep.subr.mxu0 0.0
    %3836 = vmatpush1.msra.mxu0 %v3793
    %3837 = vmatprep.subr.mxu0 0.0
    %3838 = vmatpush1.msra.mxu0 %v3792
    %3839 = vmatprep.subr.mxu0 0.0
    %3840 = vmatpush1.msra.mxu0 %v3791
    %3841 = vmatprep.subr.mxu0 0.0
    %3842 = vmatpush2.msra.mxu0 0.0
    %3843 = vmatprep.subr.mxu0 0.0
    %3844 = vmatpush2.msra.mxu0 0.0
    %3845 = vmatprep.subr.mxu0 0.0
    %3846 = vmatpush2.msra.mxu0 0.0
    %3847 = vmatprep.subr.mxu0 0.0
    %3848 = vmatpush2.msra.mxu0 0.0
    %3849 = vmatprep.subr.mxu0 0.0
    %3850 = vmatpush2.msra.mxu0 0.0
    %3851 = vmatprep.subr.mxu0 0.0
    %3852 = vmatpush2.msra.mxu0 0.0
    %3853 = vmatprep.subr.mxu0 0.0
    %3854 = vmatpush2.msra.mxu0 0.0
    %3855 = vmatprep.subr.mxu0 0.0
    %3856 = vmatpush2.msra.mxu0 0.0
    %3857 = vmatprep.subr.mxu0 0.0
    %3858 = vmatpush2.msra.mxu0 0.0
    %3859 = vmatprep.subr.mxu0 0.0
    %3860 = vmatpush2.msra.mxu0 0.0
    %3861 = vmatprep.subr.mxu0 0.0
    %3862 = vmatpush2.msra.mxu0 0.0
    %3863 = vmatprep.subr.mxu0 0.0
    %3864 = vmatpush2.msra.mxu0 0.0
    %3865 = vmatprep.subr.mxu0 0.0
    %3866 = vmatpush2.msra.mxu0 0.0
    %3867 = vmatprep.subr.mxu0 0.0
    %3868 = vmatpush2.msra.mxu0 0.0
    %3869 = vmatprep.subr.mxu0 0.0
    %3870 = vmatpush2.msra.mxu0 0.0
    %3871 = vmatprep.subr.mxu0 0.0
    %3872 = vmatpush2.msra.mxu0 0.0
    %3873 = vmatprep.mubr.f32.mxu0 0.0
    %3874 = vmatmul.mubr.f32.gmra.mxu0 %v3807
    %v3875 = vpop.f32.mrf.mxu0
    %v3876 = vadd.f32 %v3804, %v3875
    %v3877 = vpop.f32.mrf.mxu0
    %3878 = vdwg.mxu0
    %v3879 = vadd.f32 %v3208, %v3876
    %v3880 = vld [vmem:[#allocation7] sm:$0x1]
    %v3881 = vmul.f32 %v3879, %v3879
    %v3882 = vsel %vm525, %v3881, 0.0
    %3883 = vadd.xlane.f32.xlu0 %v3882
    %v3884 = vpop.xlane.xlu0 %3883
    %v3885 = vmul.f32 %v3884, %v538
    %v3886 = vadd.f32 %v3885, 1e-06
    %v3887 = vrsqrt.pop %v3886
    %v3888 = vmul.f32 %v3879, %v3887
    %v3890 = vlaneseq
    %v3891 = vshrl.u32 %v3890, 7
    %v3892 = vsub.s32 0, %v3891
    %v3893 = vrot.slane %v3880, %v3892
    %v3895 = vmul.f32 %v3888, %v3893
    %v3896 = vld [vmem:[%s23] sm:$0xff]
    %v3897 = vld [vmem:[%s23 + $0x8] sm:$0xff]
    %v3898 = vld [vmem:[%s23 + $0x10] sm:$0xff]
    %v3899 = vld [vmem:[%s23 + $0x18] sm:$0xff]
    %v3900 = vld [vmem:[%s23 + $0x20] sm:$0xff]
    %v3901 = vld [vmem:[%s23 + $0x28] sm:$0xff]
    %v3902 = vld [vmem:[%s23 + $0x30] sm:$0xff]
    %v3903 = vld [vmem:[%s23 + $0x38] sm:$0xff]
    %v3904 = vld [vmem:[%s23 + $0x40] sm:$0xff]
    %v3905 = vld [vmem:[%s23 + $0x48] sm:$0xff]
    %v3906 = vld [vmem:[%s23 + $0x50] sm:$0xff]
    %v3907 = vld [vmem:[%s23 + $0x58] sm:$0xff]
    %v3908 = vld [vmem:[%s23 + $0x60] sm:$0xff]
    %v3909 = vld [vmem:[%s23 + $0x68] sm:$0xff]
    %v3910 = vld [vmem:[%s23 + $0x70] sm:$0xff]
    %v3911 = vld [vmem:[%s23 + $0x78] sm:$0xff]
    %v3912 = vld [vmem:[%s23 + $0x80] sm:$0xff]
    %v3913 = vld [vmem:[%s23 + $0x88] sm:$0xff]
    %v3914 = vld [vmem:[%s23 + $0x90] sm:$0xff]
    %v3915 = vld [vmem:[%s23 + $0x98] sm:$0xff]
    %v3916 = vld [vmem:[%s23 + $0xa0] sm:$0xff]
    %v3917 = vld [vmem:[%s23 + $0xa8] sm:$0xff]
    %v3918 = vld [vmem:[%s23 + $0xb0] sm:$0xff]
    %v3919 = vld [vmem:[%s23 + $0xb8] sm:$0xff]
    %v3920 = vld [vmem:[%s23 + $0xc0] sm:$0xff]
    %v3921 = vld [vmem:[%s23 + $0xc8] sm:$0xff]
    %v3922 = vld [vmem:[%s23 + $0xd0] sm:$0xff]
    %v3923 = vld [vmem:[%s23 + $0xd8] sm:$0xff]
    %v3924 = vld [vmem:[%s23 + $0xe0] sm:$0xff]
    %v3925 = vld [vmem:[%s23 + $0xe8] sm:$0xff]
    %v3926 = vld [vmem:[%s23 + $0xf0] sm:$0xff]
    %v3927 = vld [vmem:[%s23 + $0xf8] sm:$0xff]
    %v3928 = vld [vmem:[%s24] sm:$0xff]
    %v3929 = vld [vmem:[%s24 + $0x8] sm:$0xff]
    %v3930 = vld [vmem:[%s24 + $0x10] sm:$0xff]
    %v3931 = vld [vmem:[%s24 + $0x18] sm:$0xff]
    %v3932 = vld [vmem:[%s24 + $0x20] sm:$0xff]
    %v3933 = vld [vmem:[%s24 + $0x28] sm:$0xff]
    %v3934 = vld [vmem:[%s24 + $0x30] sm:$0xff]
    %v3935 = vld [vmem:[%s24 + $0x38] sm:$0xff]
    %v3936 = vld [vmem:[%s24 + $0x40] sm:$0xff]
    %v3937 = vld [vmem:[%s24 + $0x48] sm:$0xff]
    %v3938 = vld [vmem:[%s24 + $0x50] sm:$0xff]
    %v3939 = vld [vmem:[%s24 + $0x58] sm:$0xff]
    %v3940 = vld [vmem:[%s24 + $0x60] sm:$0xff]
    %v3941 = vld [vmem:[%s24 + $0x68] sm:$0xff]
    %v3942 = vld [vmem:[%s24 + $0x70] sm:$0xff]
    %v3943 = vld [vmem:[%s24 + $0x78] sm:$0xff]
    %v3944 = vld [vmem:[%s24 + $0x80] sm:$0xff]
    %v3945 = vld [vmem:[%s24 + $0x88] sm:$0xff]
    %v3946 = vld [vmem:[%s24 + $0x90] sm:$0xff]
    %v3947 = vld [vmem:[%s24 + $0x98] sm:$0xff]
    %v3948 = vld [vmem:[%s24 + $0xa0] sm:$0xff]
    %v3949 = vld [vmem:[%s24 + $0xa8] sm:$0xff]
    %v3950 = vld [vmem:[%s24 + $0xb0] sm:$0xff]
    %v3951 = vld [vmem:[%s24 + $0xb8] sm:$0xff]
    %v3953 = vsel %vm525, %v3895, 0
    %3955 = vmatprep.subr.mxu0 0.0
    %3956 = vmatpush1.msra.mxu0 0.0
    %3957 = vmatprep.subr.mxu0 0.0
    %3958 = vmatpush1.msra.mxu0 0.0
    %3959 = vmatprep.subr.mxu0 0.0
    %3960 = vmatpush1.msra.mxu0 0.0
    %3961 = vmatprep.subr.mxu0 0.0
    %3962 = vmatpush1.msra.mxu0 0.0
    %3963 = vmatprep.subr.mxu0 0.0
    %3964 = vmatpush1.msra.mxu0 0.0
    %3965 = vmatprep.subr.mxu0 0.0
    %3966 = vmatpush1.msra.mxu0 0.0
    %3967 = vmatprep.subr.mxu0 0.0
    %3968 = vmatpush1.msra.mxu0 0.0
    %3969 = vmatprep.subr.mxu0 0.0
    %3970 = vmatpush1.msra.mxu0 0.0
    %3971 = vmatprep.subr.mxu0 %v3925
    %3972 = vmatpush1.msra.mxu0 %v3924
    %3973 = vmatprep.subr.mxu0 %v3921
    %3974 = vmatpush1.msra.mxu0 %v3920
    %3975 = vmatprep.subr.mxu0 %v3917
    %3976 = vmatpush1.msra.mxu0 %v3916
    %3977 = vmatprep.subr.mxu0 %v3913
    %3978 = vmatpush1.msra.mxu0 %v3912
    %3979 = vmatprep.subr.mxu0 %v3909
    %3980 = vmatpush1.msra.mxu0 %v3908
    %3981 = vmatprep.subr.mxu0 %v3905
    %3982 = vmatpush1.msra.mxu0 %v3904
    %3983 = vmatprep.subr.mxu0 %v3901
    %3984 = vmatpush1.msra.mxu0 %v3900
    %3985 = vmatprep.subr.mxu0 %v3897
    %3986 = vmatpush1.msra.mxu0 %v3896
    %3987 = vmatprep.subr.mxu0 0.0
    %3988 = vmatpush2.msra.mxu0 0.0
    %3989 = vmatprep.subr.mxu0 0.0
    %3990 = vmatpush2.msra.mxu0 0.0
    %3991 = vmatprep.subr.mxu0 0.0
    %3992 = vmatpush2.msra.mxu0 0.0
    %3993 = vmatprep.subr.mxu0 0.0
    %3994 = vmatpush2.msra.mxu0 0.0
    %3995 = vmatprep.subr.mxu0 0.0
    %3996 = vmatpush2.msra.mxu0 0.0
    %3997 = vmatprep.subr.mxu0 0.0
    %3998 = vmatpush2.msra.mxu0 0.0
    %3999 = vmatprep.subr.mxu0 0.0
    %4000 = vmatpush2.msra.mxu0 0.0
    %4001 = vmatprep.subr.mxu0 0.0
    %4002 = vmatpush2.msra.mxu0 0.0
    %4003 = vmatprep.subr.mxu0 0.0
    %4004 = vmatpush2.msra.mxu0 0.0
    %4005 = vmatprep.subr.mxu0 0.0
    %4006 = vmatpush2.msra.mxu0 0.0
    %4007 = vmatprep.subr.mxu0 0.0
    %4008 = vmatpush2.msra.mxu0 0.0
    %4009 = vmatprep.subr.mxu0 0.0
    %4010 = vmatpush2.msra.mxu0 0.0
    %4011 = vmatprep.subr.mxu0 0.0
    %4012 = vmatpush2.msra.mxu0 0.0
    %4013 = vmatprep.subr.mxu0 0.0
    %4014 = vmatpush2.msra.mxu0 0.0
    %4015 = vmatprep.subr.mxu0 0.0
    %4016 = vmatpush2.msra.mxu0 0.0
    %4017 = vmatprep.subr.mxu0 0.0
    %4018 = vmatpush2.msra.mxu0 0.0
    %4019 = vmatprep.mubr.f32.mxu0 0.0
    %4020 = vmatmul.mubr.f32.gmra.mxu0 %v3953
    %v4021 = vpop.f32.mrf.mxu0
    %v4022 = vadd.f32 0.0, %v4021
    %v4023 = vpop.f32.mrf.mxu0
    %v4024 = vadd.f32 0.0, %v4023
    %4025 = vdwg.mxu0
    %4026 = vmatprep.subr.mxu0 0.0
    %4027 = vmatpush1.msra.mxu0 0.0
    %4028 = vmatprep.subr.mxu0 0.0
    %4029 = vmatpush1.msra.mxu0 0.0
    %4030 = vmatprep.subr.mxu0 0.0
    %4031 = vmatpush1.msra.mxu0 0.0
    %4032 = vmatprep.subr.mxu0 0.0
    %4033 = vmatpush1.msra.mxu0 0.0
    %4034 = vmatprep.subr.mxu0 0.0
    %4035 = vmatpush1.msra.mxu0 0.0
    %4036 = vmatprep.subr.mxu0 0.0
    %4037 = vmatpush1.msra.mxu0 0.0
    %4038 = vmatprep.subr.mxu0 0.0
    %4039 = vmatpush1.msra.mxu0 0.0
    %4040 = vmatprep.subr.mxu0 0.0
    %4041 = vmatpush1.msra.mxu0 0.0
    %4042 = vmatprep.subr.mxu0 %v3927
    %4043 = vmatpush1.msra.mxu0 %v3926
    %4044 = vmatprep.subr.mxu0 %v3923
    %4045 = vmatpush1.msra.mxu0 %v3922
    %4046 = vmatprep.subr.mxu0 %v3919
    %4047 = vmatpush1.msra.mxu0 %v3918
    %4048 = vmatprep.subr.mxu0 %v3915
    %4049 = vmatpush1.msra.mxu0 %v3914
    %4050 = vmatprep.subr.mxu0 %v3911
    %4051 = vmatpush1.msra.mxu0 %v3910
    %4052 = vmatprep.subr.mxu0 %v3907
    %4053 = vmatpush1.msra.mxu0 %v3906
    %4054 = vmatprep.subr.mxu0 %v3903
    %4055 = vmatpush1.msra.mxu0 %v3902
    %4056 = vmatprep.subr.mxu0 %v3899
    %4057 = vmatpush1.msra.mxu0 %v3898
    %4058 = vmatprep.subr.mxu0 0.0
    %4059 = vmatpush2.msra.mxu0 0.0
    %4060 = vmatprep.subr.mxu0 0.0
    %4061 = vmatpush2.msra.mxu0 0.0
    %4062 = vmatprep.subr.mxu0 0.0
    %4063 = vmatpush2.msra.mxu0 0.0
    %4064 = vmatprep.subr.mxu0 0.0
    %4065 = vmatpush2.msra.mxu0 0.0
    %4066 = vmatprep.subr.mxu0 0.0
    %4067 = vmatpush2.msra.mxu0 0.0
    %4068 = vmatprep.subr.mxu0 0.0
    %4069 = vmatpush2.msra.mxu0 0.0
    %4070 = vmatprep.subr.mxu0 0.0
    %4071 = vmatpush2.msra.mxu0 0.0
    %4072 = vmatprep.subr.mxu0 0.0
    %4073 = vmatpush2.msra.mxu0 0.0
    %4074 = vmatprep.subr.mxu0 0.0
    %4075 = vmatpush2.msra.mxu0 0.0
    %4076 = vmatprep.subr.mxu0 0.0
    %4077 = vmatpush2.msra.mxu0 0.0
    %4078 = vmatprep.subr.mxu0 0.0
    %4079 = vmatpush2.msra.mxu0 0.0
    %4080 = vmatprep.subr.mxu0 0.0
    %4081 = vmatpush2.msra.mxu0 0.0
    %4082 = vmatprep.subr.mxu0 0.0
    %4083 = vmatpush2.msra.mxu0 0.0
    %4084 = vmatprep.subr.mxu0 0.0
    %4085 = vmatpush2.msra.mxu0 0.0
    %4086 = vmatprep.subr.mxu0 0.0
    %4087 = vmatpush2.msra.mxu0 0.0
    %4088 = vmatprep.subr.mxu0 0.0
    %4089 = vmatpush2.msra.mxu0 0.0
    %4090 = vmatprep.mubr.f32.mxu0 0.0
    %4091 = vmatmul.mubr.f32.gmra.mxu0 %v3953
    %v4092 = vpop.f32.mrf.mxu0
    %v4093 = vadd.f32 0.0, %v4092
    %v4094 = vpop.f32.mrf.mxu0
    %v4095 = vadd.f32 0.0, %v4094
    %4096 = vdwg.mxu0
    %v4097 = vxor.u32 %v4022, 2147483648
    %v4098 = vxor.u32 %v4024, 2147483648
    %v4099 = vmul.f32 %v4097, 1.442695
    %v4100 = vpow.pop %v4099
    %v4101 = vmul.f32 %v4098, 1.442695
    %v4102 = vpow.pop %v4101
    %v4103 = vadd.f32 %v4100, 1.0
    %v4104 = vadd.f32 %v4102, 1.0
    %v4105 = vrcp.pop %v4103
    %v4106 = vmul.f32 1.0, %v4105
    %v4107 = vrcp.pop %v4104
    %v4108 = vmul.f32 1.0, %v4107
    %v4109 = vmul.f32 %v4022, %v4106
    %v4110 = vmul.f32 %v4024, %v4108
    %v4111 = vmul.f32 %v4109, %v4093
    %v4112 = vmul.f32 %v4110, %v4095
    %v4114 = vsel %vm525, %v4112, 0
    %4116 = vmatprep.subr.mxu0 0.0
    %4117 = vmatpush1.msra.mxu0 %v3943
    %4118 = vmatprep.subr.mxu0 0.0
    %4119 = vmatpush1.msra.mxu0 %v3942
    %4120 = vmatprep.subr.mxu0 0.0
    %4121 = vmatpush1.msra.mxu0 %v3941
    %4122 = vmatprep.subr.mxu0 0.0
    %4123 = vmatpush1.msra.mxu0 %v3940
    %4124 = vmatprep.subr.mxu0 0.0
    %4125 = vmatpush1.msra.mxu0 %v3939
    %4126 = vmatprep.subr.mxu0 0.0
    %4127 = vmatpush1.msra.mxu0 %v3938
    %4128 = vmatprep.subr.mxu0 0.0
    %4129 = vmatpush1.msra.mxu0 %v3937
    %4130 = vmatprep.subr.mxu0 0.0
    %4131 = vmatpush1.msra.mxu0 %v3936
    %4132 = vmatprep.subr.mxu0 0.0
    %4133 = vmatpush1.msra.mxu0 %v3935
    %4134 = vmatprep.subr.mxu0 0.0
    %4135 = vmatpush1.msra.mxu0 %v3934
    %4136 = vmatprep.subr.mxu0 0.0
    %4137 = vmatpush1.msra.mxu0 %v3933
    %4138 = vmatprep.subr.mxu0 0.0
    %4139 = vmatpush1.msra.mxu0 %v3932
    %4140 = vmatprep.subr.mxu0 0.0
    %4141 = vmatpush1.msra.mxu0 %v3931
    %4142 = vmatprep.subr.mxu0 0.0
    %4143 = vmatpush1.msra.mxu0 %v3930
    %4144 = vmatprep.subr.mxu0 0.0
    %4145 = vmatpush1.msra.mxu0 %v3929
    %4146 = vmatprep.subr.mxu0 0.0
    %4147 = vmatpush1.msra.mxu0 %v3928
    %4148 = vmatprep.subr.mxu0 0.0
    %4149 = vmatpush2.msra.mxu0 0.0
    %4150 = vmatprep.subr.mxu0 0.0
    %4151 = vmatpush2.msra.mxu0 0.0
    %4152 = vmatprep.subr.mxu0 0.0
    %4153 = vmatpush2.msra.mxu0 0.0
    %4154 = vmatprep.subr.mxu0 0.0
    %4155 = vmatpush2.msra.mxu0 0.0
    %4156 = vmatprep.subr.mxu0 0.0
    %4157 = vmatpush2.msra.mxu0 0.0
    %4158 = vmatprep.subr.mxu0 0.0
    %4159 = vmatpush2.msra.mxu0 0.0
    %4160 = vmatprep.subr.mxu0 0.0
    %4161 = vmatpush2.msra.mxu0 0.0
    %4162 = vmatprep.subr.mxu0 0.0
    %4163 = vmatpush2.msra.mxu0 0.0
    %4164 = vmatprep.subr.mxu0 0.0
    %4165 = vmatpush2.msra.mxu0 %v3951
    %4166 = vmatprep.subr.mxu0 0.0
    %4167 = vmatpush2.msra.mxu0 %v3950
    %4168 = vmatprep.subr.mxu0 0.0
    %4169 = vmatpush2.msra.mxu0 %v3949
    %4170 = vmatprep.subr.mxu0 0.0
    %4171 = vmatpush2.msra.mxu0 %v3948
    %4172 = vmatprep.subr.mxu0 0.0
    %4173 = vmatpush2.msra.mxu0 %v3947
    %4174 = vmatprep.subr.mxu0 0.0
    %4175 = vmatpush2.msra.mxu0 %v3946
    %4176 = vmatprep.subr.mxu0 0.0
    %4177 = vmatpush2.msra.mxu0 %v3945
    %4178 = vmatprep.subr.mxu0 0.0
    %4179 = vmatpush2.msra.mxu0 %v3944
    %4180 = vmatprep.mubr.f32.mxu0 %v4114
    %4181 = vmatmul.mubr.f32.gmra.mxu0 %v4111
    %v4182 = vpop.f32.mrf.mxu0
    %v4183 = vadd.f32 0.0, %v4182
    %v4184 = vpop.f32.mrf.mxu0
    %4185 = vdwg.mxu0
    %v4186 = vadd.f32 %v3895, %v4183
    %v4187 = vld [vmem:[#allocation8] sm:$0x1]
    %v4188 = vmul.f32 %v4186, %v4186
    %v4189 = vsel %vm525, %v4188, 0.0
    %4190 = vadd.xlane.f32.xlu0 %v4189
    %v4191 = vpop.xlane.xlu0 %4190
    %v4192 = vmul.f32 %v4191, %v538
    %v4193 = vadd.f32 %v4192, 1e-06
    %v4194 = vrsqrt.pop %v4193
    %v4195 = vmul.f32 %v4186, %v4194
    %v4197 = vlaneseq
    %v4198 = vshrl.u32 %v4197, 7
    %v4199 = vsub.s32 0, %v4198
    %v4200 = vrot.slane %v4187, %v4199
    %v4202 = vmul.f32 %v4195, %v4200
    %4203 = vst.msk [vmem:[#allocation10] sm:$0xff] %vm525, %v4202
    // Predicated region
    $region126: #{_lambda_.1} parent=1 // pred_check
      _
    $region127: #{_lambda_.1} parent=1 // pred_check_branch
      %4205 = sbr.rel (0) target = $region129
    $region128: #{_lambda_.1} parent=1 // pred_region
      %s4207 = ssub.s32 128, 128
      %4208 = vsyncadd [#allocation4], %s4207
      %s4210 = sshll.u32 [#allocation10], 4
      %s4211 = int_to_ptr.vmem [resolvable:$true] %s4210
      %4213 = dma.vmem_to_hbm [thread:$0]  %s4211, 128, %s27, [#allocation4]
    $region129: #{_lambda_.1} parent=1 // pred_fallthru
      _
    // Predicated region
    $region130: #{_lambda_.1} parent=1 // pred_check
      _
    $region131: #{_lambda_.1} parent=1 // pred_check_branch
      %4215 = sbr.rel (0) target = $region133
    $region132: #{_lambda_.1} parent=1 // pred_region
      %4216 = dma.done [#allocation4], 128
    $region133: #{_lambda_.1} parent=1 // pred_fallthru
      _
    %4217 = vsyncpa [#allocation3], 1
    %4218 = vsyncpa [#allocation6], 1
    %4219 = vsyncpa [#allocation9], 1
    %4220 = vsyncpa [#allocation4], 1

</llo_original>
